<compile_context>
chip_gen: v7x
topology: tpu7x:2x2x1
jax: 0.10.0
libtpu: 0.0.40
codegen_flags: <defaults>
</compile_context>

<pallas_src>
import functools
import numpy as np
import jax
import jax.numpy as jnp
from jax.experimental import pallas as pl
from jax.experimental.pallas import tpu as pltpu

LN_EPS = 1e-5  # torch.nn.LayerNorm default (timm Block default norm layer)

_BLOCK_KEYS = ('ln1_g', 'ln1_b', 'w_qkv', 'w_proj', 'b_proj',
               'ln2_g', 'ln2_b', 'w_fc1', 'b_fc1', 'w_fc2', 'b_fc2')


# --------------------------- in-kernel helpers ---------------------------

def _ln(x, g, b):
    mu = jnp.mean(x, axis=-1, keepdims=True)
    var = jnp.mean(jnp.square(x - mu), axis=-1, keepdims=True)
    return (x - mu) * jax.lax.rsqrt(var + LN_EPS) * g + b


def _vit_block(x, l1g, l1b, w_qkv, w_proj, b_proj, l2g, l2b,
               w_fc1, b_fc1, w_fc2, b_fc2, *, num_heads):
    """timm-style Block:  x + MHA(LN1(x)) ; x + MLP(LN2(x)).

    x      : (Bb, S, C) f32 residual stream
    w_qkv  : (C, 3C) bf16 (q columns pre-scaled by 1/sqrt(Dh))
    w_proj : (C, C)  bf16 (heads folded into the contraction dim)
    """
    Bb, S, C = x.shape
    H = num_heads
    Dh = C // H

    # ---------------- multi-head self attention ----------------
    xn = _ln(x, l1g, l1b).astype(jnp.bfloat16)                          # (Bb,S,C)
    # Single lane-dense QKV matmul (N = 3C).
    qkv = jnp.einsum('bsc,cd->bsd', xn, w_qkv,
                     preferred_element_type=jnp.float32)                # (Bb,S,3C)

    def heads(base):
        # Head split only for the SxS attention: static lane slices stacked on
        # the leading (batch) axis -> (H*Bb, S, Dh), head-major.
        return jnp.concatenate(
            [qkv[..., base + h * Dh: base + (h + 1) * Dh] for h in range(H)],
            axis=0).astype(jnp.bfloat16)

    qh, kh, vh = heads(0), heads(C), heads(2 * C)                       # (H*Bb,S,Dh)

    logits = jnp.einsum('gsd,gtd->gst', qh, kh,
                        preferred_element_type=jnp.float32)             # (H*Bb,S,S)
    m = jnp.max(logits, axis=-1, keepdims=True)
    e = jnp.exp(logits - m)
    p = e * pl.reciprocal(jnp.sum(e, axis=-1, keepdims=True), approx=True)
    o = jnp.einsum('gst,gtd->gsd', p.astype(jnp.bfloat16), vh,
                   preferred_element_type=jnp.float32)                  # (H*Bb,S,Dh)

    # Merge heads back onto the lane dim, then one (Bb*S, C) @ (C, C) proj.
    o = o.reshape(H, Bb, S, Dh)
    o = jnp.concatenate([o[h] for h in range(H)], axis=-1)              # (Bb,S,C)
    attn = jnp.einsum('bsc,cd->bsd', o.astype(jnp.bfloat16), w_proj,
                      preferred_element_type=jnp.float32) + b_proj
    x = x + attn

    # ---------------- MLP ----------------
    xn = _ln(x, l2g, l2b).astype(jnp.bfloat16)
    h = jnp.einsum('bsc,cd->bsd', xn, w_fc1,
                   preferred_element_type=jnp.float32) + b_fc1
    # TODO(synk): timm Block default is exact erf-GELU; tanh approx kept for Mosaic lowering safety.
    h = jax.nn.gelu(h, approximate=True)
    h = jnp.einsum('bsd,dc->bsc', h.astype(jnp.bfloat16), w_fc2,
                   preferred_element_type=jnp.float32) + b_fc2
    return x + h


# --------------------------- fused encoder kernel ---------------------------

def _encoder_kernel(sig_ref, pw_ref, pb_ref, pos_ref, cls_ref, fg_ref, fb_ref,
                    l1g, l1b, wqkv, wproj, bproj, l2g, l2b, wf1, bf1, wf2, bf2,
                    o_ref, *, num_heads):
    layer = pl.program_id(1)
    n_layers = pl.num_programs(1)
    Bb, S, C = o_ref.shape

    # Layer-0 prologue: patch embedding (== Conv2d(1,C,(1,P),(1,P))) + pos + cls.
    @pl.when(layer == 0)
    def _():
        patches = jnp.einsum('brp,pc->brc', sig_ref[...].astype(jnp.bfloat16),
                             pw_ref[...], preferred_element_type=jnp.float32)
        patches = patches + pb_ref[...] + pos_ref[...]                  # (Bb,R,C)
        # TODO(synk): sublane-offset stores for the cls prepend; for production
        # dims pad S to a multiple of 8 / reorder the cls token to keep stores unmasked.
        o_ref[:, 1:, :] = patches.astype(o_ref.dtype)
        o_ref[:, 0:1, :] = jnp.broadcast_to(cls_ref[...], (Bb, 1, C)).astype(o_ref.dtype)

    x = o_ref[...].astype(jnp.float32)                                  # resident activation
    x = _vit_block(x, l1g[0], l1b[0], wqkv[0], wproj[0], bproj[0],
                   l2g[0], l2b[0], wf1[0], bf1[0], wf2[0], bf2[0],
                   num_heads=num_heads)
    o_ref[...] = x.astype(o_ref.dtype)

    # Encoder-final LayerNorm epilogue.
    @pl.when(layer == n_layers - 1)
    def _():
        o_ref[...] = _ln(x, fg_ref[...], fb_ref[...]).astype(o_ref.dtype)


# --------------------------- fused decoder kernel ---------------------------

def _decoder_kernel(tok_ref, pos_ref, hw_ref, hb_ref,
                    l1g, l1b, wqkv, wproj, bproj, l2g, l2b, wf1, bf1, wf2, bf2,
                    o_ref, acc_ref, *, num_heads):
    layer = pl.program_id(1)
    n_layers = pl.num_programs(1)

    # Layer-0 prologue: decoder positional embedding.
    @pl.when(layer == 0)
    def _():
        acc_ref[...] = tok_ref[...].astype(jnp.float32) + pos_ref[...]

    x = acc_ref[...]
    x = _vit_block(x, l1g[0], l1b[0], wqkv[0], wproj[0], bproj[0],
                   l2g[0], l2b[0], wf1[0], bf1[0], wf2[0], bf2[0],
                   num_heads=num_heads)
    acc_ref[...] = x

    # Last-layer epilogue: drop cls token and apply the reconstruction head.
    @pl.when(layer == n_layers - 1)
    def _():
        feats = acc_ref[:, 1:, :].astype(jnp.bfloat16)                  # (Bb,T,C)
        patches = jnp.einsum('btc,cp->btp', feats, hw_ref[...],
                             preferred_element_type=jnp.float32) + hb_ref[...]
        o_ref[...] = patches.astype(o_ref.dtype)


# --------------------------- pallas_call wrappers ---------------------------

def _stacked_block_specs(C, hidden):
    l3 = lambda b, l: (l, 0, 0)
    return [
        pl.BlockSpec((1, 1, C), l3),             # ln1_g
        pl.BlockSpec((1, 1, C), l3),             # ln1_b
        pl.BlockSpec((1, C, 3 * C), l3),         # w_qkv  (heads folded into N)
        pl.BlockSpec((1, C, C), l3),             # w_proj (heads folded into K)
        pl.BlockSpec((1, 1, C), l3),             # b_proj
        pl.BlockSpec((1, 1, C), l3),             # ln2_g
        pl.BlockSpec((1, 1, C), l3),             # ln2_b
        pl.BlockSpec((1, C, hidden), l3),        # w_fc1
        pl.BlockSpec((1, 1, hidden), l3),        # b_fc1
        pl.BlockSpec((1, hidden, C), l3),        # w_fc2
        pl.BlockSpec((1, 1, C), l3),             # b_fc2
    ]


def _pick_bb(B, S, max_rows=512):
    """Largest batch block that keeps >=2 parallel grid blocks (2 TCs on v7x)
    and a modest row count per block (VMEM / v7x 64 MiB budget)."""
    best = 1
    for bb in range(1, B + 1):
        if B % bb:
            continue
        if bb > 1 and bb * S > max_rows:
            continue
        if B >= 2 and B // bb < 2:
            continue
        best = bb
    return best


def _vmem_limit_bytes(in_specs, args, out_block_shape, out_dtype, scratch_bytes=0):
    total = 0
    for spec, a in zip(in_specs, args):
        total += int(np.prod(spec.block_shape)) * np.dtype(a.dtype).itemsize
    total += int(np.prod(out_block_shape)) * np.dtype(out_dtype).itemsize
    total = 2 * total + scratch_bytes + (4 << 20)   # double-buffered pipeline + slack
    return int(min(max(total, 32 << 20), 96 << 20))


def encoder_forward(sig_shuf, pos_g, params, cfg):
    B, R, P = sig_shuf.shape
    C = cfg['emb_dim']
    H = cfg['encoder_head']
    n_layers = cfg['encoder_layer']
    hidden = 4 * C
    S = R + 1
    Bb = _pick_bb(B, S)
    blocks = params['enc_blocks']

    const2 = lambda b, l: (0, 0)
    const3 = lambda b, l: (0, 0, 0)
    in_specs = [
        pl.BlockSpec((Bb, R, P), lambda b, l: (b, 0, 0)),  # shuffled raw patches
        pl.BlockSpec((P, C), const2),                      # patch proj weight
        pl.BlockSpec((1, C), const2),                      # patch proj bias
        pl.BlockSpec((Bb, R, C), lambda b, l: (b, 0, 0)),  # gathered pos embedding
        pl.BlockSpec((1, 1, C), const3),                   # cls token
        pl.BlockSpec((1, C), const2),                      # final LN gamma
        pl.BlockSpec((1, C), const2),                      # final LN beta
    ] + _stacked_block_specs(C, hidden)

    args = (sig_shuf, params['patch_w'], params['patch_b'], pos_g,
            params['cls_token'], params['enc_ln_g'], params['enc_ln_b'],
            *(blocks[k] for k in _BLOCK_KEYS))

    vmem = _vmem_limit_bytes(in_specs, args, (Bb, S, C), jnp.float32)
    return pl.pallas_call(
        functools.partial(_encoder_kernel, num_heads=H),
        out_shape=jax.ShapeDtypeStruct((B, S, C), jnp.float32),
        grid=(B // Bb, n_layers),
        in_specs=in_specs,
        out_specs=pl.BlockSpec((Bb, S, C), lambda b, l: (b, 0, 0)),
        compiler_params=pltpu.CompilerParams(
            dimension_semantics=("parallel", "arbitrary"),
            vmem_limit_bytes=vmem),
    )(*args)


def decoder_forward(tokens, params, cfg):
    B, Sd, C = tokens.shape
    P = cfg['patch_size']
    T = Sd - 1
    H = cfg['decoder_head']
    n_layers = cfg['decoder_layer']
    hidden = 4 * C
    Bb = _pick_bb(B, Sd)
    blocks = params['dec_blocks']

    const2 = lambda b, l: (0, 0)
    const3 = lambda b, l: (0, 0, 0)
    in_specs = [
        pl.BlockSpec((Bb, Sd, C), lambda b, l: (b, 0, 0)),  # restored tokens
        pl.BlockSpec((1, Sd, C), const3),                   # decoder pos embedding
        pl.BlockSpec((C, P), const2),                       # head weight
        pl.BlockSpec((1, P), const2),                       # head bias
    ] + _stacked_block_specs(C, hidden)

    args = (tokens, params['dec_pos'], params['head_w'], params['head_b'],
            *(blocks[k] for k in _BLOCK_KEYS))

    scratch_bytes = Bb * Sd * C * 4
    vmem = _vmem_limit_bytes(in_specs, args, (Bb, T, P), jnp.float32,
                             scratch_bytes=scratch_bytes)
    return pl.pallas_call(
        functools.partial(_decoder_kernel, num_heads=H),
        out_shape=jax.ShapeDtypeStruct((B, T, P), jnp.float32),
        grid=(B // Bb, n_layers),
        in_specs=in_specs,
        out_specs=pl.BlockSpec((Bb, T, P), lambda b, l: (b, 0, 0)),
        scratch_shapes=[pltpu.VMEM((Bb, Sd, C), jnp.float32)],
        compiler_params=pltpu.CompilerParams(
            dimension_semantics=("parallel", "arbitrary"),
            vmem_limit_bytes=vmem),
    )(*args)


# --------------------------- forward (index-only glue + 2 kernels) ---------------------------

def mae_vit_forward(x, params, forward_indexes, backward_indexes, cfg):
    B = x.shape[0]
    L = cfg['input_size']
    P = cfg['patch_size']
    T = L // P
    C = cfg['emb_dim']
    R = int(T * (1.0 - cfg['mask_ratio']))          # tokens kept by PatchShuffle

    # -------- encoder glue: patchify + shuffle gather (indices only) --------
    sig = x.reshape(B, T, P)                                            # NCHW [B,1,1,L] -> patches
    sel = forward_indexes.T[:, :R].astype(jnp.int32)                    # (B,R) kept positions
    sig_shuf = jnp.take_along_axis(sig, sel[:, :, None], axis=1)        # (B,R,P)
    pos_g = jnp.take(params['enc_pos'], sel, axis=0)                    # (B,R,C) pos follows its token
    feats = encoder_forward(sig_shuf, pos_g, params, cfg)               # (B,R+1,C), final LN applied

    # -------- decoder glue: append mask tokens + restore-order gather --------
    t = R + 1
    restore = jnp.concatenate(
        [jnp.zeros((1, B), jnp.int32), backward_indexes.astype(jnp.int32) + 1], axis=0)  # (T+1,B)
    mask_tok = jnp.broadcast_to(params['mask_token'], (B, T + 1 - t, C))
    full = jnp.concatenate([feats, mask_tok], axis=1)                   # (B,T+1,C)
    dec_tok = jnp.take_along_axis(full, restore.T[:, :, None], axis=1)  # (B,T+1,C)

    patches = decoder_forward(dec_tok, params, cfg)                     # (B,T,P)
    signal = patches.reshape(B, T * P)                                  # 'h b p -> b (h p)'

    # Mask — replicates the PyTorch reference exactly (t counts the cls token, as in the original).
    mask_tb = jnp.zeros((T, B), jnp.float32).at[t:].set(1.0)
    mask_tb = jnp.take_along_axis(mask_tb, backward_indexes.astype(jnp.int32), axis=0)
    mask_sig = jnp.repeat(mask_tb.T[:, :, None], P, axis=2).reshape(B, T * P)
    return signal, mask_sig


# --------------------------- deterministic parameter init ---------------------------

def init_params(key, cfg):
    C = cfg['emb_dim']
    P = cfg['patch_size']
    T = cfg['input_size'] // P
    hidden = 4 * C
    keys = iter(jax.random.split(key, 64))

    def nrm(shape, dtype=jnp.float32, std=0.02):
        return (jax.random.normal(next(keys), shape, jnp.float32) * std).astype(dtype)

    def stacked_blocks(n_layers, n_heads):
        scale = (C // n_heads) ** -0.5
        w_qkv = jax.random.normal(next(keys), (n_layers, C, 3 * C), jnp.float32) * 0.02
        # Fold the 1/sqrt(Dh) attention scale into the q columns at init time.
        w_qkv = w_qkv.at[:, :, :C].multiply(scale).astype(jnp.bfloat16)
        return dict(
            ln1_g=jnp.ones((n_layers, 1, C), jnp.float32),
            ln1_b=jnp.zeros((n_layers, 1, C), jnp.float32),
            # timm Block default qkv_bias=False -> no qkv bias term.
            w_qkv=w_qkv,
            w_proj=nrm((n_layers, C, C), jnp.bfloat16),
            b_proj=jnp.zeros((n_layers, 1, C), jnp.float32),
            ln2_g=jnp.ones((n_layers, 1, C), jnp.float32),
            ln2_b=jnp.zeros((n_layers, 1, C), jnp.float32),
            w_fc1=nrm((n_layers, C, hidden), jnp.bfloat16),
            b_fc1=jnp.zeros((n_layers, 1, hidden), jnp.float32),
            w_fc2=nrm((n_layers, hidden, C), jnp.bfloat16),
            b_fc2=jnp.zeros((n_layers, 1, C), jnp.float32),
        )

    return dict(
        patch_w=nrm((P, C), jnp.bfloat16),
        patch_b=jnp.zeros((1, C), jnp.float32),
        cls_token=nrm((1, 1, C)),
        enc_pos=nrm((T, C)),
        enc_blocks=stacked_blocks(cfg['encoder_layer'], cfg['encoder_head']),
        enc_ln_g=jnp.ones((1, C), jnp.float32),
        enc_ln_b=jnp.zeros((1, C), jnp.float32),
        mask_token=nrm((1, 1, C)),
        dec_pos=nrm((1, T + 1, C)),
        dec_blocks=stacked_blocks(cfg['decoder_layer'], cfg['decoder_head']),
        head_w=nrm((C, P), jnp.bfloat16),
        head_b=jnp.zeros((1, P), jnp.float32),
    )


# --------------------------- main ---------------------------

if __name__ == "__main__":
    cfg = dict(input_size=160, patch_size=10, emb_dim=32,
               encoder_layer=2, encoder_head=4,
               decoder_layer=2, decoder_head=4, mask_ratio=0.75)
    B = 2
    L = cfg['input_size']
    T = L // cfg['patch_size']

    key = jax.random.PRNGKey(0)
    kx, kp = jax.random.split(key)
    params = init_params(kp, cfg)
    x = jax.random.normal(kx, (B, 1, 1, L), jnp.float32)     # NCHW, 1-D signal along W

    # PatchShuffle index generation (host-side numpy, deterministic — matches random_indexes()).
    np.random.seed(0)
    fwd, bwd = [], []
    for _ in range(B):
        f = np.arange(T)
        np.random.shuffle(f)
        fwd.append(f)
        bwd.append(np.argsort(f))
    forward_indexes = jnp.asarray(np.stack(fwd, axis=-1), dtype=jnp.int32)    # (T, B)
    backward_indexes = jnp.asarray(np.stack(bwd, axis=-1), dtype=jnp.int32)   # (T, B)

    @jax.jit
    def run(x, params, fi, bi):
        return mae_vit_forward(x, params, fi, bi, cfg)

    signal, mask = run(x, params, forward_indexes, backward_indexes)
    signal = jax.block_until_ready(signal)
    mask = jax.block_until_ready(mask)

    assert signal.shape == (B, L) and mask.shape == (B, L)
    assert bool(jnp.all(jnp.isfinite(signal))) and bool(jnp.all(jnp.isfinite(mask)))
    print("KERNEL_OK")
</pallas_src>

<mosaic_0001>
module attributes {stable_mosaic.version = 11 : i64} {
  func.func @_encoder_kernel(%arg0: i32, %arg1: i32, %arg2: memref<1x4x10xf32, #tpu.memory_space<vmem>>, %arg3: memref<10x32xbf16, #tpu.memory_space<vmem>>, %arg4: memref<1x32xf32, #tpu.memory_space<vmem>>, %arg5: memref<1x4x32xf32, #tpu.memory_space<vmem>>, %arg6: memref<1x1x32xf32, #tpu.memory_space<vmem>>, %arg7: memref<1x32xf32, #tpu.memory_space<vmem>>, %arg8: memref<1x32xf32, #tpu.memory_space<vmem>>, %arg9: memref<1x1x32xf32, #tpu.memory_space<vmem>>, %arg10: memref<1x1x32xf32, #tpu.memory_space<vmem>>, %arg11: memref<1x32x96xbf16, #tpu.memory_space<vmem>>, %arg12: memref<1x32x32xbf16, #tpu.memory_space<vmem>>, %arg13: memref<1x1x32xf32, #tpu.memory_space<vmem>>, %arg14: memref<1x1x32xf32, #tpu.memory_space<vmem>>, %arg15: memref<1x1x32xf32, #tpu.memory_space<vmem>>, %arg16: memref<1x32x128xbf16, #tpu.memory_space<vmem>>, %arg17: memref<1x1x128xf32, #tpu.memory_space<vmem>>, %arg18: memref<1x128x32xbf16, #tpu.memory_space<vmem>>, %arg19: memref<1x1x32xf32, #tpu.memory_space<vmem>>, %arg20: memref<1x5x32xf32, #tpu.memory_space<vmem>>) attributes {dimension_semantics = [#tpu.dimension_semantics<parallel>, #tpu.dimension_semantics<arbitrary>], iteration_bounds = array<i64: 2, 2>, scalar_prefetch = 0 : i64, scratch_operands = 0 : i64, tpu.core_type = #tpu.core_type<tc>, window_params = [{transform_indices = @transform_0, window_bounds = array<i64: 1, 4, 10>}, {pipeline_mode = #tpu.pipeline_mode<synchronous>, transform_indices = @transform_1, window_bounds = array<i64: 10, 32>}, {pipeline_mode = #tpu.pipeline_mode<synchronous>, transform_indices = @transform_2, window_bounds = array<i64: 1, 32>}, {transform_indices = @transform_3, window_bounds = array<i64: 1, 4, 32>}, {pipeline_mode = #tpu.pipeline_mode<synchronous>, transform_indices = @transform_4, window_bounds = array<i64: 1, 1, 32>}, {pipeline_mode = #tpu.pipeline_mode<synchronous>, transform_indices = @transform_5, window_bounds = array<i64: 1, 32>}, {pipeline_mode = #tpu.pipeline_mode<synchronous>, transform_indices = @transform_6, window_bounds = array<i64: 1, 32>}, {transform_indices = @transform_7, window_bounds = array<i64: 1, 1, 32>}, {transform_indices = @transform_8, window_bounds = array<i64: 1, 1, 32>}, {transform_indices = @transform_9, window_bounds = array<i64: 1, 32, 96>}, {transform_indices = @transform_10, window_bounds = array<i64: 1, 32, 32>}, {transform_indices = @transform_11, window_bounds = array<i64: 1, 1, 32>}, {transform_indices = @transform_12, window_bounds = array<i64: 1, 1, 32>}, {transform_indices = @transform_13, window_bounds = array<i64: 1, 1, 32>}, {transform_indices = @transform_14, window_bounds = array<i64: 1, 32, 128>}, {transform_indices = @transform_15, window_bounds = array<i64: 1, 1, 128>}, {transform_indices = @transform_16, window_bounds = array<i64: 1, 128, 32>}, {transform_indices = @transform_17, window_bounds = array<i64: 1, 1, 32>}, {transform_indices = @transform_18, window_bounds = array<i64: 1, 5, 32>}]} {
    %c0_i32 = arith.constant 0 : i32
    %0 = arith.cmpi eq, %arg1, %c0_i32 : i32
    %1 = arith.extui %0 : i1 to i32
    %c0_i32_0 = arith.constant 0 : i32
    %2 = arith.cmpi ne, %1, %c0_i32_0 : i32
    scf.if %2 {
      %c0_61 = arith.constant 0 : index
      %c0_62 = arith.constant 0 : index
      %c0_63 = arith.constant 0 : index
      %151 = vector.load %arg2[%c0_61, %c0_62, %c0_63] : memref<1x4x10xf32, #tpu.memory_space<vmem>>, vector<1x4x10xf32>
      %152 = arith.truncf %151 : vector<1x4x10xf32> to vector<1x4x10xbf16>
      %c0_64 = arith.constant 0 : index
      %c0_65 = arith.constant 0 : index
      %153 = vector.load %arg3[%c0_64, %c0_65] : memref<10x32xbf16, #tpu.memory_space<vmem>>, vector<10x32xbf16>
      "tpu.trace_start"() <{level = 10 : i32, message = "brp,pc->brc"}> : () -> ()
      %cst_66 = arith.constant dense<0.000000e+00> : vector<1x4x32xf32>
      %154 = tpu.matmul %152, %153, %cst_66 {dimension_numbers = #tpu.dot_dimension_numbers<[2], [0], [0, 1], [1], [0, 0, 0, 1, 1, 1], [], []>} : vector<1x4x10xbf16>, vector<10x32xbf16>, vector<1x4x32xf32> -> vector<1x4x32xf32>
      "tpu.trace_stop"() : () -> ()
      %c0_67 = arith.constant 0 : index
      %c0_68 = arith.constant 0 : index
      %155 = vector.load %arg4[%c0_67, %c0_68] : memref<1x32xf32, #tpu.memory_space<vmem>>, vector<1x32xf32>
      %156 = vector.shape_cast %155 : vector<1x32xf32> to vector<1x1x32xf32>
      %157 = vector.broadcast %156 : vector<1x1x32xf32> to vector<1x4x32xf32>
      %158 = arith.addf %154, %157 : vector<1x4x32xf32>
      %c0_69 = arith.constant 0 : index
      %c0_70 = arith.constant 0 : index
      %c0_71 = arith.constant 0 : index
      %159 = vector.load %arg5[%c0_69, %c0_70, %c0_71] : memref<1x4x32xf32, #tpu.memory_space<vmem>>, vector<1x4x32xf32>
      %160 = arith.addf %158, %159 : vector<1x4x32xf32>
      %c0_72 = arith.constant 0 : index
      %c1 = arith.constant 1 : index
      %c0_73 = arith.constant 0 : index
      %161 = vector.load %arg20[%c0_72, %c1, %c0_73] : memref<1x5x32xf32, #tpu.memory_space<vmem>>, vector<1x4x32xf32>
      tpu.vector_store %arg20[%c0_72, %c1, %c0_73], %160 {strides = array<i32>} : memref<1x5x32xf32, #tpu.memory_space<vmem>>, vector<1x4x32xf32>,
      %c0_74 = arith.constant 0 : index
      %c0_75 = arith.constant 0 : index
      %c0_76 = arith.constant 0 : index
      %162 = vector.load %arg6[%c0_74, %c0_75, %c0_76] : memref<1x1x32xf32, #tpu.memory_space<vmem>>, vector<1x1x32xf32>
      %c0_77 = arith.constant 0 : index
      %c0_78 = arith.constant 0 : index
      %c0_79 = arith.constant 0 : index
      %163 = vector.load %arg20[%c0_77, %c0_78, %c0_79] : memref<1x5x32xf32, #tpu.memory_space<vmem>>, vector<1x1x32xf32>
      tpu.vector_store %arg20[%c0_77, %c0_78, %c0_79], %162 {strides = array<i32>} : memref<1x5x32xf32, #tpu.memory_space<vmem>>, vector<1x1x32xf32>,
    } else {
    }
    %c0 = arith.constant 0 : index
    %c0_1 = arith.constant 0 : index
    %c0_2 = arith.constant 0 : index
    %3 = vector.load %arg20[%c0, %c0_1, %c0_2] : memref<1x5x32xf32, #tpu.memory_space<vmem>>, vector<1x5x32xf32>
    %c0_3 = arith.constant 0 : index
    %c0_4 = arith.constant 0 : index
    %c0_5 = arith.constant 0 : index
    %4 = vector.load %arg9[%c0_3, %c0_4, %c0_5] : memref<1x1x32xf32, #tpu.memory_space<vmem>>, vector<1x1x32xf32>
    %5 = vector.shape_cast %4 : vector<1x1x32xf32> to vector<1x32xf32>
    %c0_6 = arith.constant 0 : index
    %c0_7 = arith.constant 0 : index
    %c0_8 = arith.constant 0 : index
    %6 = vector.load %arg10[%c0_6, %c0_7, %c0_8] : memref<1x1x32xf32, #tpu.memory_space<vmem>>, vector<1x1x32xf32>
    %7 = vector.shape_cast %6 : vector<1x1x32xf32> to vector<1x32xf32>
    %c0_9 = arith.constant 0 : index
    %c0_10 = arith.constant 0 : index
    %c0_11 = arith.constant 0 : index
    %8 = vector.load %arg11[%c0_9, %c0_10, %c0_11] : memref<1x32x96xbf16, #tpu.memory_space<vmem>>, vector<1x32x96xbf16>
    %9 = vector.shape_cast %8 : vector<1x32x96xbf16> to vector<32x96xbf16>
    %c0_12 = arith.constant 0 : index
    %c0_13 = arith.constant 0 : index
    %c0_14 = arith.constant 0 : index
    %10 = vector.load %arg12[%c0_12, %c0_13, %c0_14] : memref<1x32x32xbf16, #tpu.memory_space<vmem>>, vector<1x32x32xbf16>
    %11 = vector.shape_cast %10 : vector<1x32x32xbf16> to vector<32x32xbf16>
    %c0_15 = arith.constant 0 : index
    %c0_16 = arith.constant 0 : index
    %c0_17 = arith.constant 0 : index
    %12 = vector.load %arg13[%c0_15, %c0_16, %c0_17] : memref<1x1x32xf32, #tpu.memory_space<vmem>>, vector<1x1x32xf32>
    %13 = vector.shape_cast %12 : vector<1x1x32xf32> to vector<1x32xf32>
    %c0_18 = arith.constant 0 : index
    %c0_19 = arith.constant 0 : index
    %c0_20 = arith.constant 0 : index
    %14 = vector.load %arg14[%c0_18, %c0_19, %c0_20] : memref<1x1x32xf32, #tpu.memory_space<vmem>>, vector<1x1x32xf32>
    %15 = vector.shape_cast %14 : vector<1x1x32xf32> to vector<1x32xf32>
    %c0_21 = arith.constant 0 : index
    %c0_22 = arith.constant 0 : index
    %c0_23 = arith.constant 0 : index
    %16 = vector.load %arg15[%c0_21, %c0_22, %c0_23] : memref<1x1x32xf32, #tpu.memory_space<vmem>>, vector<1x1x32xf32>
    %17 = vector.shape_cast %16 : vector<1x1x32xf32> to vector<1x32xf32>
    %c0_24 = arith.constant 0 : index
    %c0_25 = arith.constant 0 : index
    %c0_26 = arith.constant 0 : index
    %18 = vector.load %arg16[%c0_24, %c0_25, %c0_26] : memref<1x32x128xbf16, #tpu.memory_space<vmem>>, vector<1x32x128xbf16>
    %19 = vector.shape_cast %18 : vector<1x32x128xbf16> to vector<32x128xbf16>
    %c0_27 = arith.constant 0 : index
    %c0_28 = arith.constant 0 : index
    %c0_29 = arith.constant 0 : index
    %20 = vector.load %arg17[%c0_27, %c0_28, %c0_29] : memref<1x1x128xf32, #tpu.memory_space<vmem>>, vector<1x1x128xf32>
    %21 = vector.shape_cast %20 : vector<1x1x128xf32> to vector<1x128xf32>
    %c0_30 = arith.constant 0 : index
    %c0_31 = arith.constant 0 : index
    %c0_32 = arith.constant 0 : index
    %22 = vector.load %arg18[%c0_30, %c0_31, %c0_32] : memref<1x128x32xbf16, #tpu.memory_space<vmem>>, vector<1x128x32xbf16>
    %23 = vector.shape_cast %22 : vector<1x128x32xbf16> to vector<128x32xbf16>
    %c0_33 = arith.constant 0 : index
    %c0_34 = arith.constant 0 : index
    %c0_35 = arith.constant 0 : index
    %24 = vector.load %arg19[%c0_33, %c0_34, %c0_35] : memref<1x1x32xf32, #tpu.memory_space<vmem>>, vector<1x1x32xf32>
    %25 = vector.shape_cast %24 : vector<1x1x32xf32> to vector<1x32xf32>
    %cst = arith.constant dense<0.000000e+00> : vector<1x5xf32>
    %26 = vector.multi_reduction <add>, %3, %cst [2] : vector<1x5x32xf32> to vector<1x5xf32>
    %27 = vector.shape_cast %26 : vector<1x5xf32> to vector<1x5x1xf32>
    %cst_36 = arith.constant 3.200000e+01 : f32
    %28 = vector.broadcast %cst_36 : f32 to vector<1x5x1xf32>
    %29 = arith.divf %27, %28 : vector<1x5x1xf32>
    %30 = vector.broadcast %29 : vector<1x5x1xf32> to vector<1x5x32xf32>
    %31 = arith.subf %3, %30 : vector<1x5x32xf32>
    %32 = arith.mulf %31, %31 : vector<1x5x32xf32>
    %cst_37 = arith.constant dense<0.000000e+00> : vector<1x5xf32>
    %33 = vector.multi_reduction <add>, %32, %cst_37 [2] : vector<1x5x32xf32> to vector<1x5xf32>
    %34 = vector.shape_cast %33 : vector<1x5xf32> to vector<1x5x1xf32>
    %cst_38 = arith.constant 3.200000e+01 : f32
    %35 = vector.broadcast %cst_38 : f32 to vector<1x5x1xf32>
    %36 = arith.divf %34, %35 : vector<1x5x1xf32>
    %37 = vector.broadcast %29 : vector<1x5x1xf32> to vector<1x5x32xf32>
    %38 = arith.subf %3, %37 : vector<1x5x32xf32>
    %cst_39 = arith.constant 9.99999974E-6 : f32
    %39 = vector.broadcast %cst_39 : f32 to vector<1x5x1xf32>
    %40 = arith.addf %36, %39 : vector<1x5x1xf32>
    %41 = math.rsqrt %40 : vector<1x5x1xf32>
    %42 = vector.broadcast %41 : vector<1x5x1xf32> to vector<1x5x32xf32>
    %43 = arith.mulf %38, %42 : vector<1x5x32xf32>
    %44 = vector.shape_cast %5 : vector<1x32xf32> to vector<1x1x32xf32>
    %45 = vector.broadcast %44 : vector<1x1x32xf32> to vector<1x5x32xf32>
    %46 = arith.mulf %43, %45 : vector<1x5x32xf32>
    %47 = vector.shape_cast %7 : vector<1x32xf32> to vector<1x1x32xf32>
    %48 = vector.broadcast %47 : vector<1x1x32xf32> to vector<1x5x32xf32>
    %49 = arith.addf %46, %48 : vector<1x5x32xf32>
    %50 = arith.truncf %49 : vector<1x5x32xf32> to vector<1x5x32xbf16>
    "tpu.trace_start"() <{level = 10 : i32, message = "bsc,cd->bsd"}> : () -> ()
    %cst_40 = arith.constant dense<0.000000e+00> : vector<1x5x96xf32>
    %51 = tpu.matmul %50, %9, %cst_40 {dimension_numbers = #tpu.dot_dimension_numbers<[2], [0], [0, 1], [1], [0, 0, 0, 1, 1, 1], [], []>} : vector<1x5x32xbf16>, vector<32x96xbf16>, vector<1x5x96xf32> -> vector<1x5x96xf32>
    "tpu.trace_stop"() : () -> ()
    %52 = vector.extract_strided_slice %51 {offsets = [0, 0, 0], sizes = [1, 5, 8], strides = [1, 1, 1]} : vector<1x5x96xf32> to vector<1x5x8xf32>
    %53 = vector.extract_strided_slice %51 {offsets = [0, 0, 8], sizes = [1, 5, 8], strides = [1, 1, 1]} : vector<1x5x96xf32> to vector<1x5x8xf32>
    %54 = vector.extract_strided_slice %51 {offsets = [0, 0, 16], sizes = [1, 5, 8], strides = [1, 1, 1]} : vector<1x5x96xf32> to vector<1x5x8xf32>
    %55 = vector.extract_strided_slice %51 {offsets = [0, 0, 24], sizes = [1, 5, 8], strides = [1, 1, 1]} : vector<1x5x96xf32> to vector<1x5x8xf32>
    %56 = tpu.concatenate %52, %53, %54, %55 in 0 : vector<1x5x8xf32>, vector<1x5x8xf32>, vector<1x5x8xf32>, vector<1x5x8xf32> -> vector<4x5x8xf32>
    %57 = arith.truncf %56 : vector<4x5x8xf32> to vector<4x5x8xbf16>
    %58 = vector.extract_strided_slice %51 {offsets = [0, 0, 32], sizes = [1, 5, 8], strides = [1, 1, 1]} : vector<1x5x96xf32> to vector<1x5x8xf32>
    %59 = vector.extract_strided_slice %51 {offsets = [0, 0, 40], sizes = [1, 5, 8], strides = [1, 1, 1]} : vector<1x5x96xf32> to vector<1x5x8xf32>
    %60 = vector.extract_strided_slice %51 {offsets = [0, 0, 48], sizes = [1, 5, 8], strides = [1, 1, 1]} : vector<1x5x96xf32> to vector<1x5x8xf32>
    %61 = vector.extract_strided_slice %51 {offsets = [0, 0, 56], sizes = [1, 5, 8], strides = [1, 1, 1]} : vector<1x5x96xf32> to vector<1x5x8xf32>
    %62 = tpu.concatenate %58, %59, %60, %61 in 0 : vector<1x5x8xf32>, vector<1x5x8xf32>, vector<1x5x8xf32>, vector<1x5x8xf32> -> vector<4x5x8xf32>
    %63 = arith.truncf %62 : vector<4x5x8xf32> to vector<4x5x8xbf16>
    %64 = vector.extract_strided_slice %51 {offsets = [0, 0, 64], sizes = [1, 5, 8], strides = [1, 1, 1]} : vector<1x5x96xf32> to vector<1x5x8xf32>
    %65 = vector.extract_strided_slice %51 {offsets = [0, 0, 72], sizes = [1, 5, 8], strides = [1, 1, 1]} : vector<1x5x96xf32> to vector<1x5x8xf32>
    %66 = vector.extract_strided_slice %51 {offsets = [0, 0, 80], sizes = [1, 5, 8], strides = [1, 1, 1]} : vector<1x5x96xf32> to vector<1x5x8xf32>
    %67 = vector.extract_strided_slice %51 {offsets = [0, 0, 88], sizes = [1, 5, 8], strides = [1, 1, 1]} : vector<1x5x96xf32> to vector<1x5x8xf32>
    %68 = tpu.concatenate %64, %65, %66, %67 in 0 : vector<1x5x8xf32>, vector<1x5x8xf32>, vector<1x5x8xf32>, vector<1x5x8xf32> -> vector<4x5x8xf32>
    %69 = arith.truncf %68 : vector<4x5x8xf32> to vector<4x5x8xbf16>
    "tpu.trace_start"() <{level = 10 : i32, message = "gsd,gtd->gst"}> : () -> ()
    %cst_41 = arith.constant dense<0.000000e+00> : vector<4x5x5xf32>
    %70 = tpu.matmul %57, %63, %cst_41 {dimension_numbers = #tpu.dot_dimension_numbers<[2], [2], [1], [1], [0, 0, 0, 1, 1, 1], [0], [0]>} : vector<4x5x8xbf16>, vector<4x5x8xbf16>, vector<4x5x5xf32> -> vector<4x5x5xf32>
    "tpu.trace_stop"() : () -> ()
    %cst_42 = arith.constant dense<0xFF800000> : vector<4x5xf32>
    %71 = vector.multi_reduction <maximumf>, %70, %cst_42 [2] : vector<4x5x5xf32> to vector<4x5xf32>
    %72 = vector.shape_cast %71 : vector<4x5xf32> to vector<4x5x1xf32>
    %73 = vector.broadcast %72 : vector<4x5x1xf32> to vector<4x5x5xf32>
    %74 = arith.subf %70, %73 : vector<4x5x5xf32>
    %75 = math.exp %74 : vector<4x5x5xf32>
    %cst_43 = arith.constant dense<0.000000e+00> : vector<4x5xf32>
    %76 = vector.multi_reduction <add>, %75, %cst_43 [2] : vector<4x5x5xf32> to vector<4x5xf32>
    %77 = vector.shape_cast %76 : vector<4x5xf32> to vector<4x5x1xf32>
    %78 = tpu.reciprocal %77 {approx = true} : vector<4x5x1xf32> -> vector<4x5x1xf32>
    %79 = vector.broadcast %78 : vector<4x5x1xf32> to vector<4x5x5xf32>
    %80 = arith.mulf %75, %79 : vector<4x5x5xf32>
    %81 = arith.truncf %80 : vector<4x5x5xf32> to vector<4x5x5xbf16>
    "tpu.trace_start"() <{level = 10 : i32, message = "gst,gtd->gsd"}> : () -> ()
    %cst_44 = arith.constant dense<0.000000e+00> : vector<4x5x8xf32>
    %82 = tpu.matmul %81, %69, %cst_44 {dimension_numbers = #tpu.dot_dimension_numbers<[2], [1], [1], [2], [0, 0, 0, 1, 1, 2], [0], [0]>} : vector<4x5x5xbf16>, vector<4x5x8xbf16>, vector<4x5x8xf32> -> vector<4x5x8xf32>
    "tpu.trace_stop"() : () -> ()
    %83 = vector.shape_cast %82 : vector<4x5x8xf32> to vector<4x1x5x8xf32>
    %84 = vector.extract_strided_slice %83 {offsets = [0, 0, 0, 0], sizes = [1, 1, 5, 8], strides = [1, 1, 1, 1]} : vector<4x1x5x8xf32> to vector<1x1x5x8xf32>
    %85 = vector.shape_cast %84 : vector<1x1x5x8xf32> to vector<1x5x8xf32>
    %86 = vector.extract_strided_slice %83 {offsets = [1, 0, 0, 0], sizes = [1, 1, 5, 8], strides = [1, 1, 1, 1]} : vector<4x1x5x8xf32> to vector<1x1x5x8xf32>
    %87 = vector.shape_cast %86 : vector<1x1x5x8xf32> to vector<1x5x8xf32>
    %88 = vector.extract_strided_slice %83 {offsets = [2, 0, 0, 0], sizes = [1, 1, 5, 8], strides = [1, 1, 1, 1]} : vector<4x1x5x8xf32> to vector<1x1x5x8xf32>
    %89 = vector.shape_cast %88 : vector<1x1x5x8xf32> to vector<1x5x8xf32>
    %90 = vector.extract_strided_slice %83 {offsets = [3, 0, 0, 0], sizes = [1, 1, 5, 8], strides = [1, 1, 1, 1]} : vector<4x1x5x8xf32> to vector<1x1x5x8xf32>
    %91 = vector.shape_cast %90 : vector<1x1x5x8xf32> to vector<1x5x8xf32>
    %92 = tpu.concatenate %85, %87, %89, %91 in 2 : vector<1x5x8xf32>, vector<1x5x8xf32>, vector<1x5x8xf32>, vector<1x5x8xf32> -> vector<1x5x32xf32>
    %93 = arith.truncf %92 : vector<1x5x32xf32> to vector<1x5x32xbf16>
    "tpu.trace_start"() <{level = 10 : i32, message = "bsc,cd->bsd"}> : () -> ()
    %cst_45 = arith.constant dense<0.000000e+00> : vector<1x5x32xf32>
    %94 = tpu.matmul %93, %11, %cst_45 {dimension_numbers = #tpu.dot_dimension_numbers<[2], [0], [0, 1], [1], [0, 0, 0, 1, 1, 1], [], []>} : vector<1x5x32xbf16>, vector<32x32xbf16>, vector<1x5x32xf32> -> vector<1x5x32xf32>
    "tpu.trace_stop"() : () -> ()
    %95 = vector.shape_cast %13 : vector<1x32xf32> to vector<1x1x32xf32>
    %96 = vector.broadcast %95 : vector<1x1x32xf32> to vector<1x5x32xf32>
    %97 = arith.addf %94, %96 : vector<1x5x32xf32>
    %98 = arith.addf %3, %97 : vector<1x5x32xf32>
    %cst_46 = arith.constant dense<0.000000e+00> : vector<1x5xf32>
    %99 = vector.multi_reduction <add>, %98, %cst_46 [2] : vector<1x5x32xf32> to vector<1x5xf32>
    %100 = vector.shape_cast %99 : vector<1x5xf32> to vector<1x5x1xf32>
    %cst_47 = arith.constant 3.200000e+01 : f32
    %101 = vector.broadcast %cst_47 : f32 to vector<1x5x1xf32>
    %102 = arith.divf %100, %101 : vector<1x5x1xf32>
    %103 = vector.broadcast %102 : vector<1x5x1xf32> to vector<1x5x32xf32>
    %104 = arith.subf %98, %103 : vector<1x5x32xf32>
    %105 = arith.mulf %104, %104 : vector<1x5x32xf32>
    %cst_48 = arith.constant dense<0.000000e+00> : vector<1x5xf32>
    %106 = vector.multi_reduction <add>, %105, %cst_48 [2] : vector<1x5x32xf32> to vector<1x5xf32>
    %107 = vector.shape_cast %106 : vector<1x5xf32> to vector<1x5x1xf32>
    %cst_49 = arith.constant 3.200000e+01 : f32
    %108 = vector.broadcast %cst_49 : f32 to vector<1x5x1xf32>
    %109 = arith.divf %107, %108 : vector<1x5x1xf32>
    %110 = vector.broadcast %102 : vector<1x5x1xf32> to vector<1x5x32xf32>
    %111 = arith.subf %98, %110 : vector<1x5x32xf32>
    %cst_50 = arith.constant 9.99999974E-6 : f32
    %112 = vector.broadcast %cst_50 : f32 to vector<1x5x1xf32>
    %113 = arith.addf %109, %112 : vector<1x5x1xf32>
    %114 = math.rsqrt %113 : vector<1x5x1xf32>
    %115 = vector.broadcast %114 : vector<1x5x1xf32> to vector<1x5x32xf32>
    %116 = arith.mulf %111, %115 : vector<1x5x32xf32>
    %117 = vector.shape_cast %15 : vector<1x32xf32> to vector<1x1x32xf32>
    %118 = vector.broadcast %117 : vector<1x1x32xf32> to vector<1x5x32xf32>
    %119 = arith.mulf %116, %118 : vector<1x5x32xf32>
    %120 = vector.shape_cast %17 : vector<1x32xf32> to vector<1x1x32xf32>
    %121 = vector.broadcast %120 : vector<1x1x32xf32> to vector<1x5x32xf32>
    %122 = arith.addf %119, %121 : vector<1x5x32xf32>
    %123 = arith.truncf %122 : vector<1x5x32xf32> to vector<1x5x32xbf16>
    "tpu.trace_start"() <{level = 10 : i32, message = "bsc,cd->bsd"}> : () -> ()
    %cst_51 = arith.constant dense<0.000000e+00> : vector<1x5x128xf32>
    %124 = tpu.matmul %123, %19, %cst_51 {dimension_numbers = #tpu.dot_dimension_numbers<[2], [0], [0, 1], [1], [0, 0, 0, 1, 1, 1], [], []>} : vector<1x5x32xbf16>, vector<32x128xbf16>, vector<1x5x128xf32> -> vector<1x5x128xf32>
    "tpu.trace_stop"() : () -> ()
    %125 = vector.shape_cast %21 : vector<1x128xf32> to vector<1x1x128xf32>
    %126 = vector.broadcast %125 : vector<1x1x128xf32> to vector<1x5x128xf32>
    %127 = arith.addf %124, %126 : vector<1x5x128xf32>
    %128 = arith.mulf %127, %127 : vector<1x5x128xf32>
    %129 = arith.mulf %127, %128 : vector<1x5x128xf32>
    %cst_52 = arith.constant 4.471500e-02 : f32
    %130 = vector.broadcast %cst_52 : f32 to vector<1x5x128xf32>
    %131 = arith.mulf %130, %129 : vector<1x5x128xf32>
    %132 = arith.addf %127, %131 : vector<1x5x128xf32>
    %cst_53 = arith.constant 0.797884583 : f32
    %133 = vector.broadcast %cst_53 : f32 to vector<1x5x128xf32>
    %134 = arith.mulf %133, %132 : vector<1x5x128xf32>
    %135 = math.tanh %134 : vector<1x5x128xf32>
    %cst_54 = arith.constant 1.000000e+00 : f32
    %136 = vector.broadcast %cst_54 : f32 to vector<1x5x128xf32>
    %137 = arith.addf %136, %135 : vector<1x5x128xf32>
    %cst_55 = arith.constant 5.000000e-01 : f32
    %138 = vector.broadcast %cst_55 : f32 to vector<1x5x128xf32>
    %139 = arith.mulf %138, %137 : vector<1x5x128xf32>
    %140 = arith.mulf %127, %139 : vector<1x5x128xf32>
    %141 = arith.truncf %140 : vector<1x5x128xf32> to vector<1x5x128xbf16>
    "tpu.trace_start"() <{level = 10 : i32, message = "bsd,dc->bsc"}> : () -> ()
    %cst_56 = arith.constant dense<0.000000e+00> : vector<1x5x32xf32>
    %142 = tpu.matmul %141, %23, %cst_56 {dimension_numbers = #tpu.dot_dimension_numbers<[2], [0], [0, 1], [1], [0, 0, 0, 1, 1, 1], [], []>} : vector<1x5x128xbf16>, vector<128x32xbf16>, vector<1x5x32xf32> -> vector<1x5x32xf32>
    "tpu.trace_stop"() : () -> ()
    %143 = vector.shape_cast %25 : vector<1x32xf32> to vector<1x1x32xf32>
    %144 = vector.broadcast %143 : vector<1x1x32xf32> to vector<1x5x32xf32>
    %145 = arith.addf %142, %144 : vector<1x5x32xf32>
    %146 = arith.addf %98, %145 : vector<1x5x32xf32>
    %c0_57 = arith.constant 0 : index
    %c0_58 = arith.constant 0 : index
    %c0_59 = arith.constant 0 : index
    %147 = vector.load %arg20[%c0_57, %c0_58, %c0_59] : memref<1x5x32xf32, #tpu.memory_space<vmem>>, vector<1x5x32xf32>
    tpu.vector_store %arg20[%c0_57, %c0_58, %c0_59], %146 {strides = array<i32>} : memref<1x5x32xf32, #tpu.memory_space<vmem>>, vector<1x5x32xf32>,
    %c1_i32 = arith.constant 1 : i32
    %148 = arith.cmpi eq, %arg1, %c1_i32 : i32
    %149 = arith.extui %148 : i1 to i32
    %c0_i32_60 = arith.constant 0 : i32
    %150 = arith.cmpi ne, %149, %c0_i32_60 : i32
    scf.if %150 {
      %c0_61 = arith.constant 0 : index
      %c0_62 = arith.constant 0 : index
      %151 = vector.load %arg7[%c0_61, %c0_62] : memref<1x32xf32, #tpu.memory_space<vmem>>, vector<1x32xf32>
      %c0_63 = arith.constant 0 : index
      %c0_64 = arith.constant 0 : index
      %152 = vector.load %arg8[%c0_63, %c0_64] : memref<1x32xf32, #tpu.memory_space<vmem>>, vector<1x32xf32>
      %cst_65 = arith.constant dense<0.000000e+00> : vector<1x5xf32>
      %153 = vector.multi_reduction <add>, %146, %cst_65 [2] : vector<1x5x32xf32> to vector<1x5xf32>
      %154 = vector.shape_cast %153 : vector<1x5xf32> to vector<1x5x1xf32>
      %cst_66 = arith.constant 3.200000e+01 : f32
      %155 = vector.broadcast %cst_66 : f32 to vector<1x5x1xf32>
      %156 = arith.divf %154, %155 : vector<1x5x1xf32>
      %157 = vector.broadcast %156 : vector<1x5x1xf32> to vector<1x5x32xf32>
      %158 = arith.subf %146, %157 : vector<1x5x32xf32>
      %159 = arith.mulf %158, %158 : vector<1x5x32xf32>
      %cst_67 = arith.constant dense<0.000000e+00> : vector<1x5xf32>
      %160 = vector.multi_reduction <add>, %159, %cst_67 [2] : vector<1x5x32xf32> to vector<1x5xf32>
      %161 = vector.shape_cast %160 : vector<1x5xf32> to vector<1x5x1xf32>
      %cst_68 = arith.constant 3.200000e+01 : f32
      %162 = vector.broadcast %cst_68 : f32 to vector<1x5x1xf32>
      %163 = arith.divf %161, %162 : vector<1x5x1xf32>
      %164 = vector.broadcast %156 : vector<1x5x1xf32> to vector<1x5x32xf32>
      %165 = arith.subf %146, %164 : vector<1x5x32xf32>
      %cst_69 = arith.constant 9.99999974E-6 : f32
      %166 = vector.broadcast %cst_69 : f32 to vector<1x5x1xf32>
      %167 = arith.addf %163, %166 : vector<1x5x1xf32>
      %168 = math.rsqrt %167 : vector<1x5x1xf32>
      %169 = vector.broadcast %168 : vector<1x5x1xf32> to vector<1x5x32xf32>
      %170 = arith.mulf %165, %169 : vector<1x5x32xf32>
      %171 = vector.shape_cast %151 : vector<1x32xf32> to vector<1x1x32xf32>
      %172 = vector.broadcast %171 : vector<1x1x32xf32> to vector<1x5x32xf32>
      %173 = arith.mulf %170, %172 : vector<1x5x32xf32>
      %174 = vector.shape_cast %152 : vector<1x32xf32> to vector<1x1x32xf32>
      %175 = vector.broadcast %174 : vector<1x1x32xf32> to vector<1x5x32xf32>
      %176 = arith.addf %173, %175 : vector<1x5x32xf32>
      %c0_70 = arith.constant 0 : index
      %c0_71 = arith.constant 0 : index
      %c0_72 = arith.constant 0 : index
      %177 = vector.load %arg20[%c0_70, %c0_71, %c0_72] : memref<1x5x32xf32, #tpu.memory_space<vmem>>, vector<1x5x32xf32>
      tpu.vector_store %arg20[%c0_70, %c0_71, %c0_72], %176 {strides = array<i32>} : memref<1x5x32xf32, #tpu.memory_space<vmem>>, vector<1x5x32xf32>,
    } else {
    }
    return
  }
  func.func @transform_0(%arg0: i32, %arg1: i32) -> (i32, i32, i32) {
    %c0_i32 = arith.constant 0 : i32
    %c0_i32_0 = arith.constant 0 : i32
    %c0_i32_1 = arith.constant 0 : i32
    return %arg0, %c0_i32, %c0_i32_0 : i32, i32, i32
  }
  func.func @transform_1(%arg0: i32, %arg1: i32) -> (i32, i32) {
    %c0_i32 = arith.constant 0 : i32
    %c0_i32_0 = arith.constant 0 : i32
    %c0_i32_1 = arith.constant 0 : i32
    return %c0_i32, %c0_i32_0 : i32, i32
  }
  func.func @transform_2(%arg0: i32, %arg1: i32) -> (i32, i32) {
    %c0_i32 = arith.constant 0 : i32
    %c0_i32_0 = arith.constant 0 : i32
    %c0_i32_1 = arith.constant 0 : i32
    return %c0_i32, %c0_i32_0 : i32, i32
  }
  func.func @transform_3(%arg0: i32, %arg1: i32) -> (i32, i32, i32) {
    %c0_i32 = arith.constant 0 : i32
    %c0_i32_0 = arith.constant 0 : i32
    %c0_i32_1 = arith.constant 0 : i32
    return %arg0, %c0_i32, %c0_i32_0 : i32, i32, i32
  }
  func.func @transform_4(%arg0: i32, %arg1: i32) -> (i32, i32, i32) {
    %c0_i32 = arith.constant 0 : i32
    %c0_i32_0 = arith.constant 0 : i32
    %c0_i32_1 = arith.constant 0 : i32
    %c0_i32_2 = arith.constant 0 : i32
    return %c0_i32, %c0_i32_0, %c0_i32_1 : i32, i32, i32
  }
  func.func @transform_5(%arg0: i32, %arg1: i32) -> (i32, i32) {
    %c0_i32 = arith.constant 0 : i32
    %c0_i32_0 = arith.constant 0 : i32
    %c0_i32_1 = arith.constant 0 : i32
    return %c0_i32, %c0_i32_0 : i32, i32
  }
  func.func @transform_6(%arg0: i32, %arg1: i32) -> (i32, i32) {
    %c0_i32 = arith.constant 0 : i32
    %c0_i32_0 = arith.constant 0 : i32
    %c0_i32_1 = arith.constant 0 : i32
    return %c0_i32, %c0_i32_0 : i32, i32
  }
  func.func @transform_7(%arg0: i32, %arg1: i32) -> (i32, i32, i32) {
    %c0_i32 = arith.constant 0 : i32
    %c0_i32_0 = arith.constant 0 : i32
    %c0_i32_1 = arith.constant 0 : i32
    return %arg1, %c0_i32, %c0_i32_0 : i32, i32, i32
  }
  func.func @transform_8(%arg0: i32, %arg1: i32) -> (i32, i32, i32) {
    %c0_i32 = arith.constant 0 : i32
    %c0_i32_0 = arith.constant 0 : i32
    %c0_i32_1 = arith.constant 0 : i32
    return %arg1, %c0_i32, %c0_i32_0 : i32, i32, i32
  }
  func.func @transform_9(%arg0: i32, %arg1: i32) -> (i32, i32, i32) {
    %c0_i32 = arith.constant 0 : i32
    %c0_i32_0 = arith.constant 0 : i32
    %c0_i32_1 = arith.constant 0 : i32
    return %arg1, %c0_i32, %c0_i32_0 : i32, i32, i32
  }
  func.func @transform_10(%arg0: i32, %arg1: i32) -> (i32, i32, i32) {
    %c0_i32 = arith.constant 0 : i32
    %c0_i32_0 = arith.constant 0 : i32
    %c0_i32_1 = arith.constant 0 : i32
    return %arg1, %c0_i32, %c0_i32_0 : i32, i32, i32
  }
  func.func @transform_11(%arg0: i32, %arg1: i32) -> (i32, i32, i32) {
    %c0_i32 = arith.constant 0 : i32
    %c0_i32_0 = arith.constant 0 : i32
    %c0_i32_1 = arith.constant 0 : i32
    return %arg1, %c0_i32, %c0_i32_0 : i32, i32, i32
  }
  func.func @transform_12(%arg0: i32, %arg1: i32) -> (i32, i32, i32) {
    %c0_i32 = arith.constant 0 : i32
    %c0_i32_0 = arith.constant 0 : i32
    %c0_i32_1 = arith.constant 0 : i32
    return %arg1, %c0_i32, %c0_i32_0 : i32, i32, i32
  }
  func.func @transform_13(%arg0: i32, %arg1: i32) -> (i32, i32, i32) {
    %c0_i32 = arith.constant 0 : i32
    %c0_i32_0 = arith.constant 0 : i32
    %c0_i32_1 = arith.constant 0 : i32
    return %arg1, %c0_i32, %c0_i32_0 : i32, i32, i32
  }
  func.func @transform_14(%arg0: i32, %arg1: i32) -> (i32, i32, i32) {
    %c0_i32 = arith.constant 0 : i32
    %c0_i32_0 = arith.constant 0 : i32
    %c0_i32_1 = arith.constant 0 : i32
    return %arg1, %c0_i32, %c0_i32_0 : i32, i32, i32
  }
  func.func @transform_15(%arg0: i32, %arg1: i32) -> (i32, i32, i32) {
    %c0_i32 = arith.constant 0 : i32
    %c0_i32_0 = arith.constant 0 : i32
    %c0_i32_1 = arith.constant 0 : i32
    return %arg1, %c0_i32, %c0_i32_0 : i32, i32, i32
  }
  func.func @transform_16(%arg0: i32, %arg1: i32) -> (i32, i32, i32) {
    %c0_i32 = arith.constant 0 : i32
    %c0_i32_0 = arith.constant 0 : i32
    %c0_i32_1 = arith.constant 0 : i32
    return %arg1, %c0_i32, %c0_i32_0 : i32, i32, i32
  }
  func.func @transform_17(%arg0: i32, %arg1: i32) -> (i32, i32, i32) {
    %c0_i32 = arith.constant 0 : i32
    %c0_i32_0 = arith.constant 0 : i32
    %c0_i32_1 = arith.constant 0 : i32
    return %arg1, %c0_i32, %c0_i32_0 : i32, i32, i32
  }
  func.func @transform_18(%arg0: i32, %arg1: i32) -> (i32, i32, i32) {
    %c0_i32 = arith.constant 0 : i32
    %c0_i32_0 = arith.constant 0 : i32
    %c0_i32_1 = arith.constant 0 : i32
    return %arg0, %c0_i32, %c0_i32_0 : i32, i32, i32
  }
}

module attributes {stable_mosaic.version = 11 : i64} {
  func.func @_decoder_kernel(%arg0: i32, %arg1: i32, %arg2: memref<1x17x32xf32, #tpu.memory_space<vmem>>, %arg3: memref<1x17x32xf32, #tpu.memory_space<vmem>>, %arg4: memref<32x10xbf16, #tpu.memory_space<vmem>>, %arg5: memref<1x10xf32, #tpu.memory_space<vmem>>, %arg6: memref<1x1x32xf32, #tpu.memory_space<vmem>>, %arg7: memref<1x1x32xf32, #tpu.memory_space<vmem>>, %arg8: memref<1x32x96xbf16, #tpu.memory_space<vmem>>, %arg9: memref<1x32x32xbf16, #tpu.memory_space<vmem>>, %arg10: memref<1x1x32xf32, #tpu.memory_space<vmem>>, %arg11: memref<1x1x32xf32, #tpu.memory_space<vmem>>, %arg12: memref<1x1x32xf32, #tpu.memory_space<vmem>>, %arg13: memref<1x32x128xbf16, #tpu.memory_space<vmem>>, %arg14: memref<1x1x128xf32, #tpu.memory_space<vmem>>, %arg15: memref<1x128x32xbf16, #tpu.memory_space<vmem>>, %arg16: memref<1x1x32xf32, #tpu.memory_space<vmem>>, %arg17: memref<1x16x10xf32, #tpu.memory_space<vmem>>, %arg18: memref<1x17x32xf32, #tpu.memory_space<vmem>>) attributes {dimension_semantics = [#tpu.dimension_semantics<parallel>, #tpu.dimension_semantics<arbitrary>], iteration_bounds = array<i64: 2, 2>, scalar_prefetch = 0 : i64, scratch_operands = 1 : i64, tpu.core_type = #tpu.core_type<tc>, window_params = [{transform_indices = @transform_0, window_bounds = array<i64: 1, 17, 32>}, {pipeline_mode = #tpu.pipeline_mode<synchronous>, transform_indices = @transform_1, window_bounds = array<i64: 1, 17, 32>}, {pipeline_mode = #tpu.pipeline_mode<synchronous>, transform_indices = @transform_2, window_bounds = array<i64: 32, 10>}, {pipeline_mode = #tpu.pipeline_mode<synchronous>, transform_indices = @transform_3, window_bounds = array<i64: 1, 10>}, {transform_indices = @transform_4, window_bounds = array<i64: 1, 1, 32>}, {transform_indices = @transform_5, window_bounds = array<i64: 1, 1, 32>}, {transform_indices = @transform_6, window_bounds = array<i64: 1, 32, 96>}, {transform_indices = @transform_7, window_bounds = array<i64: 1, 32, 32>}, {transform_indices = @transform_8, window_bounds = array<i64: 1, 1, 32>}, {transform_indices = @transform_9, window_bounds = array<i64: 1, 1, 32>}, {transform_indices = @transform_10, window_bounds = array<i64: 1, 1, 32>}, {transform_indices = @transform_11, window_bounds = array<i64: 1, 32, 128>}, {transform_indices = @transform_12, window_bounds = array<i64: 1, 1, 128>}, {transform_indices = @transform_13, window_bounds = array<i64: 1, 128, 32>}, {transform_indices = @transform_14, window_bounds = array<i64: 1, 1, 32>}, {transform_indices = @transform_15, window_bounds = array<i64: 1, 16, 10>}]} {
    %c0_i32 = arith.constant 0 : i32
    %0 = arith.cmpi eq, %arg1, %c0_i32 : i32
    %1 = arith.extui %0 : i1 to i32
    %c0_i32_0 = arith.constant 0 : i32
    %2 = arith.cmpi ne, %1, %c0_i32_0 : i32
    scf.if %2 {
      %c0_61 = arith.constant 0 : index
      %c0_62 = arith.constant 0 : index
      %c0_63 = arith.constant 0 : index
      %151 = vector.load %arg2[%c0_61, %c0_62, %c0_63] : memref<1x17x32xf32, #tpu.memory_space<vmem>>, vector<1x17x32xf32>
      %c0_64 = arith.constant 0 : index
      %c0_65 = arith.constant 0 : index
      %c0_66 = arith.constant 0 : index
      %152 = vector.load %arg3[%c0_64, %c0_65, %c0_66] : memref<1x17x32xf32, #tpu.memory_space<vmem>>, vector<1x17x32xf32>
      %153 = arith.addf %151, %152 : vector<1x17x32xf32>
      %c0_67 = arith.constant 0 : index
      %c0_68 = arith.constant 0 : index
      %c0_69 = arith.constant 0 : index
      %154 = vector.load %arg18[%c0_67, %c0_68, %c0_69] : memref<1x17x32xf32, #tpu.memory_space<vmem>>, vector<1x17x32xf32>
      tpu.vector_store %arg18[%c0_67, %c0_68, %c0_69], %153 {strides = array<i32>} : memref<1x17x32xf32, #tpu.memory_space<vmem>>, vector<1x17x32xf32>,
    } else {
    }
    %c0 = arith.constant 0 : index
    %c0_1 = arith.constant 0 : index
    %c0_2 = arith.constant 0 : index
    %3 = vector.load %arg18[%c0, %c0_1, %c0_2] : memref<1x17x32xf32, #tpu.memory_space<vmem>>, vector<1x17x32xf32>
    %c0_3 = arith.constant 0 : index
    %c0_4 = arith.constant 0 : index
    %c0_5 = arith.constant 0 : index
    %4 = vector.load %arg6[%c0_3, %c0_4, %c0_5] : memref<1x1x32xf32, #tpu.memory_space<vmem>>, vector<1x1x32xf32>
    %5 = vector.shape_cast %4 : vector<1x1x32xf32> to vector<1x32xf32>
    %c0_6 = arith.constant 0 : index
    %c0_7 = arith.constant 0 : index
    %c0_8 = arith.constant 0 : index
    %6 = vector.load %arg7[%c0_6, %c0_7, %c0_8] : memref<1x1x32xf32, #tpu.memory_space<vmem>>, vector<1x1x32xf32>
    %7 = vector.shape_cast %6 : vector<1x1x32xf32> to vector<1x32xf32>
    %c0_9 = arith.constant 0 : index
    %c0_10 = arith.constant 0 : index
    %c0_11 = arith.constant 0 : index
    %8 = vector.load %arg8[%c0_9, %c0_10, %c0_11] : memref<1x32x96xbf16, #tpu.memory_space<vmem>>, vector<1x32x96xbf16>
    %9 = vector.shape_cast %8 : vector<1x32x96xbf16> to vector<32x96xbf16>
    %c0_12 = arith.constant 0 : index
    %c0_13 = arith.constant 0 : index
    %c0_14 = arith.constant 0 : index
    %10 = vector.load %arg9[%c0_12, %c0_13, %c0_14] : memref<1x32x32xbf16, #tpu.memory_space<vmem>>, vector<1x32x32xbf16>
    %11 = vector.shape_cast %10 : vector<1x32x32xbf16> to vector<32x32xbf16>
    %c0_15 = arith.constant 0 : index
    %c0_16 = arith.constant 0 : index
    %c0_17 = arith.constant 0 : index
    %12 = vector.load %arg10[%c0_15, %c0_16, %c0_17] : memref<1x1x32xf32, #tpu.memory_space<vmem>>, vector<1x1x32xf32>
    %13 = vector.shape_cast %12 : vector<1x1x32xf32> to vector<1x32xf32>
    %c0_18 = arith.constant 0 : index
    %c0_19 = arith.constant 0 : index
    %c0_20 = arith.constant 0 : index
    %14 = vector.load %arg11[%c0_18, %c0_19, %c0_20] : memref<1x1x32xf32, #tpu.memory_space<vmem>>, vector<1x1x32xf32>
    %15 = vector.shape_cast %14 : vector<1x1x32xf32> to vector<1x32xf32>
    %c0_21 = arith.constant 0 : index
    %c0_22 = arith.constant 0 : index
    %c0_23 = arith.constant 0 : index
    %16 = vector.load %arg12[%c0_21, %c0_22, %c0_23] : memref<1x1x32xf32, #tpu.memory_space<vmem>>, vector<1x1x32xf32>
    %17 = vector.shape_cast %16 : vector<1x1x32xf32> to vector<1x32xf32>
    %c0_24 = arith.constant 0 : index
    %c0_25 = arith.constant 0 : index
    %c0_26 = arith.constant 0 : index
    %18 = vector.load %arg13[%c0_24, %c0_25, %c0_26] : memref<1x32x128xbf16, #tpu.memory_space<vmem>>, vector<1x32x128xbf16>
    %19 = vector.shape_cast %18 : vector<1x32x128xbf16> to vector<32x128xbf16>
    %c0_27 = arith.constant 0 : index
    %c0_28 = arith.constant 0 : index
    %c0_29 = arith.constant 0 : index
    %20 = vector.load %arg14[%c0_27, %c0_28, %c0_29] : memref<1x1x128xf32, #tpu.memory_space<vmem>>, vector<1x1x128xf32>
    %21 = vector.shape_cast %20 : vector<1x1x128xf32> to vector<1x128xf32>
    %c0_30 = arith.constant 0 : index
    %c0_31 = arith.constant 0 : index
    %c0_32 = arith.constant 0 : index
    %22 = vector.load %arg15[%c0_30, %c0_31, %c0_32] : memref<1x128x32xbf16, #tpu.memory_space<vmem>>, vector<1x128x32xbf16>
    %23 = vector.shape_cast %22 : vector<1x128x32xbf16> to vector<128x32xbf16>
    %c0_33 = arith.constant 0 : index
    %c0_34 = arith.constant 0 : index
    %c0_35 = arith.constant 0 : index
    %24 = vector.load %arg16[%c0_33, %c0_34, %c0_35] : memref<1x1x32xf32, #tpu.memory_space<vmem>>, vector<1x1x32xf32>
    %25 = vector.shape_cast %24 : vector<1x1x32xf32> to vector<1x32xf32>
    %cst = arith.constant dense<0.000000e+00> : vector<1x17xf32>
    %26 = vector.multi_reduction <add>, %3, %cst [2] : vector<1x17x32xf32> to vector<1x17xf32>
    %27 = vector.shape_cast %26 : vector<1x17xf32> to vector<1x17x1xf32>
    %cst_36 = arith.constant 3.200000e+01 : f32
    %28 = vector.broadcast %cst_36 : f32 to vector<1x17x1xf32>
    %29 = arith.divf %27, %28 : vector<1x17x1xf32>
    %30 = vector.broadcast %29 : vector<1x17x1xf32> to vector<1x17x32xf32>
    %31 = arith.subf %3, %30 : vector<1x17x32xf32>
    %32 = arith.mulf %31, %31 : vector<1x17x32xf32>
    %cst_37 = arith.constant dense<0.000000e+00> : vector<1x17xf32>
    %33 = vector.multi_reduction <add>, %32, %cst_37 [2] : vector<1x17x32xf32> to vector<1x17xf32>
    %34 = vector.shape_cast %33 : vector<1x17xf32> to vector<1x17x1xf32>
    %cst_38 = arith.constant 3.200000e+01 : f32
    %35 = vector.broadcast %cst_38 : f32 to vector<1x17x1xf32>
    %36 = arith.divf %34, %35 : vector<1x17x1xf32>
    %37 = vector.broadcast %29 : vector<1x17x1xf32> to vector<1x17x32xf32>
    %38 = arith.subf %3, %37 : vector<1x17x32xf32>
    %cst_39 = arith.constant 9.99999974E-6 : f32
    %39 = vector.broadcast %cst_39 : f32 to vector<1x17x1xf32>
    %40 = arith.addf %36, %39 : vector<1x17x1xf32>
    %41 = math.rsqrt %40 : vector<1x17x1xf32>
    %42 = vector.broadcast %41 : vector<1x17x1xf32> to vector<1x17x32xf32>
    %43 = arith.mulf %38, %42 : vector<1x17x32xf32>
    %44 = vector.shape_cast %5 : vector<1x32xf32> to vector<1x1x32xf32>
    %45 = vector.broadcast %44 : vector<1x1x32xf32> to vector<1x17x32xf32>
    %46 = arith.mulf %43, %45 : vector<1x17x32xf32>
    %47 = vector.shape_cast %7 : vector<1x32xf32> to vector<1x1x32xf32>
    %48 = vector.broadcast %47 : vector<1x1x32xf32> to vector<1x17x32xf32>
    %49 = arith.addf %46, %48 : vector<1x17x32xf32>
    %50 = arith.truncf %49 : vector<1x17x32xf32> to vector<1x17x32xbf16>
    "tpu.trace_start"() <{level = 10 : i32, message = "bsc,cd->bsd"}> : () -> ()
    %cst_40 = arith.constant dense<0.000000e+00> : vector<1x17x96xf32>
    %51 = tpu.matmul %50, %9, %cst_40 {dimension_numbers = #tpu.dot_dimension_numbers<[2], [0], [0, 1], [1], [0, 0, 0, 1, 1, 1], [], []>} : vector<1x17x32xbf16>, vector<32x96xbf16>, vector<1x17x96xf32> -> vector<1x17x96xf32>
    "tpu.trace_stop"() : () -> ()
    %52 = vector.extract_strided_slice %51 {offsets = [0, 0, 0], sizes = [1, 17, 8], strides = [1, 1, 1]} : vector<1x17x96xf32> to vector<1x17x8xf32>
    %53 = vector.extract_strided_slice %51 {offsets = [0, 0, 8], sizes = [1, 17, 8], strides = [1, 1, 1]} : vector<1x17x96xf32> to vector<1x17x8xf32>
    %54 = vector.extract_strided_slice %51 {offsets = [0, 0, 16], sizes = [1, 17, 8], strides = [1, 1, 1]} : vector<1x17x96xf32> to vector<1x17x8xf32>
    %55 = vector.extract_strided_slice %51 {offsets = [0, 0, 24], sizes = [1, 17, 8], strides = [1, 1, 1]} : vector<1x17x96xf32> to vector<1x17x8xf32>
    %56 = tpu.concatenate %52, %53, %54, %55 in 0 : vector<1x17x8xf32>, vector<1x17x8xf32>, vector<1x17x8xf32>, vector<1x17x8xf32> -> vector<4x17x8xf32>
    %57 = arith.truncf %56 : vector<4x17x8xf32> to vector<4x17x8xbf16>
    %58 = vector.extract_strided_slice %51 {offsets = [0, 0, 32], sizes = [1, 17, 8], strides = [1, 1, 1]} : vector<1x17x96xf32> to vector<1x17x8xf32>
    %59 = vector.extract_strided_slice %51 {offsets = [0, 0, 40], sizes = [1, 17, 8], strides = [1, 1, 1]} : vector<1x17x96xf32> to vector<1x17x8xf32>
    %60 = vector.extract_strided_slice %51 {offsets = [0, 0, 48], sizes = [1, 17, 8], strides = [1, 1, 1]} : vector<1x17x96xf32> to vector<1x17x8xf32>
    %61 = vector.extract_strided_slice %51 {offsets = [0, 0, 56], sizes = [1, 17, 8], strides = [1, 1, 1]} : vector<1x17x96xf32> to vector<1x17x8xf32>
    %62 = tpu.concatenate %58, %59, %60, %61 in 0 : vector<1x17x8xf32>, vector<1x17x8xf32>, vector<1x17x8xf32>, vector<1x17x8xf32> -> vector<4x17x8xf32>
    %63 = arith.truncf %62 : vector<4x17x8xf32> to vector<4x17x8xbf16>
    %64 = vector.extract_strided_slice %51 {offsets = [0, 0, 64], sizes = [1, 17, 8], strides = [1, 1, 1]} : vector<1x17x96xf32> to vector<1x17x8xf32>
    %65 = vector.extract_strided_slice %51 {offsets = [0, 0, 72], sizes = [1, 17, 8], strides = [1, 1, 1]} : vector<1x17x96xf32> to vector<1x17x8xf32>
    %66 = vector.extract_strided_slice %51 {offsets = [0, 0, 80], sizes = [1, 17, 8], strides = [1, 1, 1]} : vector<1x17x96xf32> to vector<1x17x8xf32>
    %67 = vector.extract_strided_slice %51 {offsets = [0, 0, 88], sizes = [1, 17, 8], strides = [1, 1, 1]} : vector<1x17x96xf32> to vector<1x17x8xf32>
    %68 = tpu.concatenate %64, %65, %66, %67 in 0 : vector<1x17x8xf32>, vector<1x17x8xf32>, vector<1x17x8xf32>, vector<1x17x8xf32> -> vector<4x17x8xf32>
    %69 = arith.truncf %68 : vector<4x17x8xf32> to vector<4x17x8xbf16>
    "tpu.trace_start"() <{level = 10 : i32, message = "gsd,gtd->gst"}> : () -> ()
    %cst_41 = arith.constant dense<0.000000e+00> : vector<4x17x17xf32>
    %70 = tpu.matmul %57, %63, %cst_41 {dimension_numbers = #tpu.dot_dimension_numbers<[2], [2], [1], [1], [0, 0, 0, 1, 1, 1], [0], [0]>} : vector<4x17x8xbf16>, vector<4x17x8xbf16>, vector<4x17x17xf32> -> vector<4x17x17xf32>
    "tpu.trace_stop"() : () -> ()
    %cst_42 = arith.constant dense<0xFF800000> : vector<4x17xf32>
    %71 = vector.multi_reduction <maximumf>, %70, %cst_42 [2] : vector<4x17x17xf32> to vector<4x17xf32>
    %72 = vector.shape_cast %71 : vector<4x17xf32> to vector<4x17x1xf32>
    %73 = vector.broadcast %72 : vector<4x17x1xf32> to vector<4x17x17xf32>
    %74 = arith.subf %70, %73 : vector<4x17x17xf32>
    %75 = math.exp %74 : vector<4x17x17xf32>
    %cst_43 = arith.constant dense<0.000000e+00> : vector<4x17xf32>
    %76 = vector.multi_reduction <add>, %75, %cst_43 [2] : vector<4x17x17xf32> to vector<4x17xf32>
    %77 = vector.shape_cast %76 : vector<4x17xf32> to vector<4x17x1xf32>
    %78 = tpu.reciprocal %77 {approx = true} : vector<4x17x1xf32> -> vector<4x17x1xf32>
    %79 = vector.broadcast %78 : vector<4x17x1xf32> to vector<4x17x17xf32>
    %80 = arith.mulf %75, %79 : vector<4x17x17xf32>
    %81 = arith.truncf %80 : vector<4x17x17xf32> to vector<4x17x17xbf16>
    "tpu.trace_start"() <{level = 10 : i32, message = "gst,gtd->gsd"}> : () -> ()
    %cst_44 = arith.constant dense<0.000000e+00> : vector<4x17x8xf32>
    %82 = tpu.matmul %81, %69, %cst_44 {dimension_numbers = #tpu.dot_dimension_numbers<[2], [1], [1], [2], [0, 0, 0, 1, 1, 2], [0], [0]>} : vector<4x17x17xbf16>, vector<4x17x8xbf16>, vector<4x17x8xf32> -> vector<4x17x8xf32>
    "tpu.trace_stop"() : () -> ()
    %83 = vector.shape_cast %82 : vector<4x17x8xf32> to vector<4x1x17x8xf32>
    %84 = vector.extract_strided_slice %83 {offsets = [0, 0, 0, 0], sizes = [1, 1, 17, 8], strides = [1, 1, 1, 1]} : vector<4x1x17x8xf32> to vector<1x1x17x8xf32>
    %85 = vector.shape_cast %84 : vector<1x1x17x8xf32> to vector<1x17x8xf32>
    %86 = vector.extract_strided_slice %83 {offsets = [1, 0, 0, 0], sizes = [1, 1, 17, 8], strides = [1, 1, 1, 1]} : vector<4x1x17x8xf32> to vector<1x1x17x8xf32>
    %87 = vector.shape_cast %86 : vector<1x1x17x8xf32> to vector<1x17x8xf32>
    %88 = vector.extract_strided_slice %83 {offsets = [2, 0, 0, 0], sizes = [1, 1, 17, 8], strides = [1, 1, 1, 1]} : vector<4x1x17x8xf32> to vector<1x1x17x8xf32>
    %89 = vector.shape_cast %88 : vector<1x1x17x8xf32> to vector<1x17x8xf32>
    %90 = vector.extract_strided_slice %83 {offsets = [3, 0, 0, 0], sizes = [1, 1, 17, 8], strides = [1, 1, 1, 1]} : vector<4x1x17x8xf32> to vector<1x1x17x8xf32>
    %91 = vector.shape_cast %90 : vector<1x1x17x8xf32> to vector<1x17x8xf32>
    %92 = tpu.concatenate %85, %87, %89, %91 in 2 : vector<1x17x8xf32>, vector<1x17x8xf32>, vector<1x17x8xf32>, vector<1x17x8xf32> -> vector<1x17x32xf32>
    %93 = arith.truncf %92 : vector<1x17x32xf32> to vector<1x17x32xbf16>
    "tpu.trace_start"() <{level = 10 : i32, message = "bsc,cd->bsd"}> : () -> ()
    %cst_45 = arith.constant dense<0.000000e+00> : vector<1x17x32xf32>
    %94 = tpu.matmul %93, %11, %cst_45 {dimension_numbers = #tpu.dot_dimension_numbers<[2], [0], [0, 1], [1], [0, 0, 0, 1, 1, 1], [], []>} : vector<1x17x32xbf16>, vector<32x32xbf16>, vector<1x17x32xf32> -> vector<1x17x32xf32>
    "tpu.trace_stop"() : () -> ()
    %95 = vector.shape_cast %13 : vector<1x32xf32> to vector<1x1x32xf32>
    %96 = vector.broadcast %95 : vector<1x1x32xf32> to vector<1x17x32xf32>
    %97 = arith.addf %94, %96 : vector<1x17x32xf32>
    %98 = arith.addf %3, %97 : vector<1x17x32xf32>
    %cst_46 = arith.constant dense<0.000000e+00> : vector<1x17xf32>
    %99 = vector.multi_reduction <add>, %98, %cst_46 [2] : vector<1x17x32xf32> to vector<1x17xf32>
    %100 = vector.shape_cast %99 : vector<1x17xf32> to vector<1x17x1xf32>
    %cst_47 = arith.constant 3.200000e+01 : f32
    %101 = vector.broadcast %cst_47 : f32 to vector<1x17x1xf32>
    %102 = arith.divf %100, %101 : vector<1x17x1xf32>
    %103 = vector.broadcast %102 : vector<1x17x1xf32> to vector<1x17x32xf32>
    %104 = arith.subf %98, %103 : vector<1x17x32xf32>
    %105 = arith.mulf %104, %104 : vector<1x17x32xf32>
    %cst_48 = arith.constant dense<0.000000e+00> : vector<1x17xf32>
    %106 = vector.multi_reduction <add>, %105, %cst_48 [2] : vector<1x17x32xf32> to vector<1x17xf32>
    %107 = vector.shape_cast %106 : vector<1x17xf32> to vector<1x17x1xf32>
    %cst_49 = arith.constant 3.200000e+01 : f32
    %108 = vector.broadcast %cst_49 : f32 to vector<1x17x1xf32>
    %109 = arith.divf %107, %108 : vector<1x17x1xf32>
    %110 = vector.broadcast %102 : vector<1x17x1xf32> to vector<1x17x32xf32>
    %111 = arith.subf %98, %110 : vector<1x17x32xf32>
    %cst_50 = arith.constant 9.99999974E-6 : f32
    %112 = vector.broadcast %cst_50 : f32 to vector<1x17x1xf32>
    %113 = arith.addf %109, %112 : vector<1x17x1xf32>
    %114 = math.rsqrt %113 : vector<1x17x1xf32>
    %115 = vector.broadcast %114 : vector<1x17x1xf32> to vector<1x17x32xf32>
    %116 = arith.mulf %111, %115 : vector<1x17x32xf32>
    %117 = vector.shape_cast %15 : vector<1x32xf32> to vector<1x1x32xf32>
    %118 = vector.broadcast %117 : vector<1x1x32xf32> to vector<1x17x32xf32>
    %119 = arith.mulf %116, %118 : vector<1x17x32xf32>
    %120 = vector.shape_cast %17 : vector<1x32xf32> to vector<1x1x32xf32>
    %121 = vector.broadcast %120 : vector<1x1x32xf32> to vector<1x17x32xf32>
    %122 = arith.addf %119, %121 : vector<1x17x32xf32>
    %123 = arith.truncf %122 : vector<1x17x32xf32> to vector<1x17x32xbf16>
    "tpu.trace_start"() <{level = 10 : i32, message = "bsc,cd->bsd"}> : () -> ()
    %cst_51 = arith.constant dense<0.000000e+00> : vector<1x17x128xf32>
    %124 = tpu.matmul %123, %19, %cst_51 {dimension_numbers = #tpu.dot_dimension_numbers<[2], [0], [0, 1], [1], [0, 0, 0, 1, 1, 1], [], []>} : vector<1x17x32xbf16>, vector<32x128xbf16>, vector<1x17x128xf32> -> vector<1x17x128xf32>
    "tpu.trace_stop"() : () -> ()
    %125 = vector.shape_cast %21 : vector<1x128xf32> to vector<1x1x128xf32>
    %126 = vector.broadcast %125 : vector<1x1x128xf32> to vector<1x17x128xf32>
    %127 = arith.addf %124, %126 : vector<1x17x128xf32>
    %128 = arith.mulf %127, %127 : vector<1x17x128xf32>
    %129 = arith.mulf %127, %128 : vector<1x17x128xf32>
    %cst_52 = arith.constant 4.471500e-02 : f32
    %130 = vector.broadcast %cst_52 : f32 to vector<1x17x128xf32>
    %131 = arith.mulf %130, %129 : vector<1x17x128xf32>
    %132 = arith.addf %127, %131 : vector<1x17x128xf32>
    %cst_53 = arith.constant 0.797884583 : f32
    %133 = vector.broadcast %cst_53 : f32 to vector<1x17x128xf32>
    %134 = arith.mulf %133, %132 : vector<1x17x128xf32>
    %135 = math.tanh %134 : vector<1x17x128xf32>
    %cst_54 = arith.constant 1.000000e+00 : f32
    %136 = vector.broadcast %cst_54 : f32 to vector<1x17x128xf32>
    %137 = arith.addf %136, %135 : vector<1x17x128xf32>
    %cst_55 = arith.constant 5.000000e-01 : f32
    %138 = vector.broadcast %cst_55 : f32 to vector<1x17x128xf32>
    %139 = arith.mulf %138, %137 : vector<1x17x128xf32>
    %140 = arith.mulf %127, %139 : vector<1x17x128xf32>
    %141 = arith.truncf %140 : vector<1x17x128xf32> to vector<1x17x128xbf16>
    "tpu.trace_start"() <{level = 10 : i32, message = "bsd,dc->bsc"}> : () -> ()
    %cst_56 = arith.constant dense<0.000000e+00> : vector<1x17x32xf32>
    %142 = tpu.matmul %141, %23, %cst_56 {dimension_numbers = #tpu.dot_dimension_numbers<[2], [0], [0, 1], [1], [0, 0, 0, 1, 1, 1], [], []>} : vector<1x17x128xbf16>, vector<128x32xbf16>, vector<1x17x32xf32> -> vector<1x17x32xf32>
    "tpu.trace_stop"() : () -> ()
    %143 = vector.shape_cast %25 : vector<1x32xf32> to vector<1x1x32xf32>
    %144 = vector.broadcast %143 : vector<1x1x32xf32> to vector<1x17x32xf32>
    %145 = arith.addf %142, %144 : vector<1x17x32xf32>
    %146 = arith.addf %98, %145 : vector<1x17x32xf32>
    %c0_57 = arith.constant 0 : index
    %c0_58 = arith.constant 0 : index
    %c0_59 = arith.constant 0 : index
    %147 = vector.load %arg18[%c0_57, %c0_58, %c0_59] : memref<1x17x32xf32, #tpu.memory_space<vmem>>, vector<1x17x32xf32>
    tpu.vector_store %arg18[%c0_57, %c0_58, %c0_59], %146 {strides = array<i32>} : memref<1x17x32xf32, #tpu.memory_space<vmem>>, vector<1x17x32xf32>,
    %c1_i32 = arith.constant 1 : i32
    %148 = arith.cmpi eq, %arg1, %c1_i32 : i32
    %149 = arith.extui %148 : i1 to i32
    %c0_i32_60 = arith.constant 0 : i32
    %150 = arith.cmpi ne, %149, %c0_i32_60 : i32
    scf.if %150 {
      %c0_61 = arith.constant 0 : index
      %c1 = arith.constant 1 : index
      %c0_62 = arith.constant 0 : index
      %151 = vector.load %arg18[%c0_61, %c1, %c0_62] : memref<1x17x32xf32, #tpu.memory_space<vmem>>, vector<1x16x32xf32>
      %152 = arith.truncf %151 : vector<1x16x32xf32> to vector<1x16x32xbf16>
      %c0_63 = arith.constant 0 : index
      %c0_64 = arith.constant 0 : index
      %153 = vector.load %arg4[%c0_63, %c0_64] : memref<32x10xbf16, #tpu.memory_space<vmem>>, vector<32x10xbf16>
      "tpu.trace_start"() <{level = 10 : i32, message = "btc,cp->btp"}> : () -> ()
      %cst_65 = arith.constant dense<0.000000e+00> : vector<1x16x10xf32>
      %154 = tpu.matmul %152, %153, %cst_65 {dimension_numbers = #tpu.dot_dimension_numbers<[2], [0], [0, 1], [1], [0, 0, 0, 1, 1, 1], [], []>} : vector<1x16x32xbf16>, vector<32x10xbf16>, vector<1x16x10xf32> -> vector<1x16x10xf32>
      "tpu.trace_stop"() : () -> ()
      %c0_66 = arith.constant 0 : index
      %c0_67 = arith.constant 0 : index
      %155 = vector.load %arg5[%c0_66, %c0_67] : memref<1x10xf32, #tpu.memory_space<vmem>>, vector<1x10xf32>
      %156 = vector.shape_cast %155 : vector<1x10xf32> to vector<1x1x10xf32>
      %157 = vector.broadcast %156 : vector<1x1x10xf32> to vector<1x16x10xf32>
      %158 = arith.addf %154, %157 : vector<1x16x10xf32>
      %c0_68 = arith.constant 0 : index
      %c0_69 = arith.constant 0 : index
      %c0_70 = arith.constant 0 : index
      %159 = vector.load %arg17[%c0_68, %c0_69, %c0_70] : memref<1x16x10xf32, #tpu.memory_space<vmem>>, vector<1x16x10xf32>
      tpu.vector_store %arg17[%c0_68, %c0_69, %c0_70], %158 {strides = array<i32>} : memref<1x16x10xf32, #tpu.memory_space<vmem>>, vector<1x16x10xf32>,
    } else {
    }
    return
  }
  func.func @transform_0(%arg0: i32, %arg1: i32) -> (i32, i32, i32) {
    %c0_i32 = arith.constant 0 : i32
    %c0_i32_0 = arith.constant 0 : i32
    %c0_i32_1 = arith.constant 0 : i32
    return %arg0, %c0_i32, %c0_i32_0 : i32, i32, i32
  }
  func.func @transform_1(%arg0: i32, %arg1: i32) -> (i32, i32, i32) {
    %c0_i32 = arith.constant 0 : i32
    %c0_i32_0 = arith.constant 0 : i32
    %c0_i32_1 = arith.constant 0 : i32
    %c0_i32_2 = arith.constant 0 : i32
    return %c0_i32, %c0_i32_0, %c0_i32_1 : i32, i32, i32
  }
  func.func @transform_2(%arg0: i32, %arg1: i32) -> (i32, i32) {
    %c0_i32 = arith.constant 0 : i32
    %c0_i32_0 = arith.constant 0 : i32
    %c0_i32_1 = arith.constant 0 : i32
    return %c0_i32, %c0_i32_0 : i32, i32
  }
  func.func @transform_3(%arg0: i32, %arg1: i32) -> (i32, i32) {
    %c0_i32 = arith.constant 0 : i32
    %c0_i32_0 = arith.constant 0 : i32
    %c0_i32_1 = arith.constant 0 : i32
    return %c0_i32, %c0_i32_0 : i32, i32
  }
  func.func @transform_4(%arg0: i32, %arg1: i32) -> (i32, i32, i32) {
    %c0_i32 = arith.constant 0 : i32
    %c0_i32_0 = arith.constant 0 : i32
    %c0_i32_1 = arith.constant 0 : i32
    return %arg1, %c0_i32, %c0_i32_0 : i32, i32, i32
  }
  func.func @transform_5(%arg0: i32, %arg1: i32) -> (i32, i32, i32) {
    %c0_i32 = arith.constant 0 : i32
    %c0_i32_0 = arith.constant 0 : i32
    %c0_i32_1 = arith.constant 0 : i32
    return %arg1, %c0_i32, %c0_i32_0 : i32, i32, i32
  }
  func.func @transform_6(%arg0: i32, %arg1: i32) -> (i32, i32, i32) {
    %c0_i32 = arith.constant 0 : i32
    %c0_i32_0 = arith.constant 0 : i32
    %c0_i32_1 = arith.constant 0 : i32
    return %arg1, %c0_i32, %c0_i32_0 : i32, i32, i32
  }
  func.func @transform_7(%arg0: i32, %arg1: i32) -> (i32, i32, i32) {
    %c0_i32 = arith.constant 0 : i32
    %c0_i32_0 = arith.constant 0 : i32
    %c0_i32_1 = arith.constant 0 : i32
    return %arg1, %c0_i32, %c0_i32_0 : i32, i32, i32
  }
  func.func @transform_8(%arg0: i32, %arg1: i32) -> (i32, i32, i32) {
    %c0_i32 = arith.constant 0 : i32
    %c0_i32_0 = arith.constant 0 : i32
    %c0_i32_1 = arith.constant 0 : i32
    return %arg1, %c0_i32, %c0_i32_0 : i32, i32, i32
  }
  func.func @transform_9(%arg0: i32, %arg1: i32) -> (i32, i32, i32) {
    %c0_i32 = arith.constant 0 : i32
    %c0_i32_0 = arith.constant 0 : i32
    %c0_i32_1 = arith.constant 0 : i32
    return %arg1, %c0_i32, %c0_i32_0 : i32, i32, i32
  }
  func.func @transform_10(%arg0: i32, %arg1: i32) -> (i32, i32, i32) {
    %c0_i32 = arith.constant 0 : i32
    %c0_i32_0 = arith.constant 0 : i32
    %c0_i32_1 = arith.constant 0 : i32
    return %arg1, %c0_i32, %c0_i32_0 : i32, i32, i32
  }
  func.func @transform_11(%arg0: i32, %arg1: i32) -> (i32, i32, i32) {
    %c0_i32 = arith.constant 0 : i32
    %c0_i32_0 = arith.constant 0 : i32
    %c0_i32_1 = arith.constant 0 : i32
    return %arg1, %c0_i32, %c0_i32_0 : i32, i32, i32
  }
  func.func @transform_12(%arg0: i32, %arg1: i32) -> (i32, i32, i32) {
    %c0_i32 = arith.constant 0 : i32
    %c0_i32_0 = arith.constant 0 : i32
    %c0_i32_1 = arith.constant 0 : i32
    return %arg1, %c0_i32, %c0_i32_0 : i32, i32, i32
  }
  func.func @transform_13(%arg0: i32, %arg1: i32) -> (i32, i32, i32) {
    %c0_i32 = arith.constant 0 : i32
    %c0_i32_0 = arith.constant 0 : i32
    %c0_i32_1 = arith.constant 0 : i32
    return %arg1, %c0_i32, %c0_i32_0 : i32, i32, i32
  }
  func.func @transform_14(%arg0: i32, %arg1: i32) -> (i32, i32, i32) {
    %c0_i32 = arith.constant 0 : i32
    %c0_i32_0 = arith.constant 0 : i32
    %c0_i32_1 = arith.constant 0 : i32
    return %arg1, %c0_i32, %c0_i32_0 : i32, i32, i32
  }
  func.func @transform_15(%arg0: i32, %arg1: i32) -> (i32, i32, i32) {
    %c0_i32 = arith.constant 0 : i32
    %c0_i32_0 = arith.constant 0 : i32
    %c0_i32_1 = arith.constant 0 : i32
    return %arg0, %c0_i32, %c0_i32_0 : i32, i32, i32
  }
}

</mosaic_0001>

<llo_original>
// kernel: run.2
$region0: #{run.2}
  #allocation0 [shape = 'u32[]', space=smem, size = 0x4, offset = 0x4, fixed_abs, tag = 'smem constant byte address 0x4 - core index']
  #allocation1 [shape = 'u32[144,128]{1,0:T(1,128)}', space=vmem, size = 0x12000, scoped, tag = 'internal scratch']
  %s0 = inlined_call_operand.vmem [shape: f32[2,4,10], index: 0, kind: input, shape index: {}]
  %s1 = inlined_call_operand.vmem [shape: bf16[10,32], index: 1, kind: input, shape index: {}]
  %s2 = inlined_call_operand.vmem [shape: f32[1,32], index: 2, kind: input, shape index: {}]
  %s3 = inlined_call_operand.vmem [shape: f32[2,4,32], index: 3, kind: input, shape index: {}]
  %s4 = inlined_call_operand.vmem [shape: f32[1,1,32], index: 4, kind: input, shape index: {}]
  %s5 = inlined_call_operand.vmem [shape: f32[1,32], index: 5, kind: input, shape index: {}]
  %s6 = inlined_call_operand.vmem [shape: f32[1,32], index: 6, kind: input, shape index: {}]
  %s7 = inlined_call_operand.vmem [shape: f32[2,1,32], index: 7, kind: input, shape index: {}]
  %s8 = inlined_call_operand.vmem [shape: f32[2,1,32], index: 8, kind: input, shape index: {}]
  %s9 = inlined_call_operand.vmem [shape: bf16[2,32,96], index: 9, kind: input, shape index: {}]
  %s10 = inlined_call_operand.vmem [shape: bf16[2,32,32], index: 10, kind: input, shape index: {}]
  %s11 = inlined_call_operand.vmem [shape: f32[2,1,32], index: 11, kind: input, shape index: {}]
  %s12 = inlined_call_operand.vmem [shape: f32[2,1,32], index: 12, kind: input, shape index: {}]
  %s13 = inlined_call_operand.vmem [shape: f32[2,1,32], index: 13, kind: input, shape index: {}]
  %s14 = inlined_call_operand.vmem [shape: bf16[2,32,128], index: 14, kind: input, shape index: {}]
  %s15 = inlined_call_operand.vmem [shape: f32[2,1,128], index: 15, kind: input, shape index: {}]
  %s16 = inlined_call_operand.vmem [shape: bf16[2,128,32], index: 16, kind: input, shape index: {}]
  %s17 = inlined_call_operand.vmem [shape: f32[2,1,32], index: 17, kind: input, shape index: {}]
  %s18 = inlined_call_operand.vmem [shape: f32[2,5,32], index: 18, kind: output, shape index: {}]
  %s19 = sld [smem:[#allocation0]]
  $region113: #{run.2} parent=0
    _
  %s21 = ssub.s32 1, %s19
  %s22 = scalar_select 0, %s21, %s19
  loop: start=0, step=1, limit=6
  $region2: #{run.2} parent=0 // loop_pre_header
    _
  $region3: #{run.2} parent=0 // loop_header
    %s24 = sphi 0, %s28
    %p25 = scmp.ge.s32.totalorder %s24, 6
    %s31 = sphi 0, %s43
    %s32 = sphi 0, %s39
    %s33 = sphi 0, %s31
    %s34 = sphi 0, %s32
    %s35 = sphi 0, %s33
    %s36 = sphi 0, %s34
    %s46 = sphi 0, %s48
    %s49 = sphi 0, %s46
    %s50 = sphi 0, %s49
    %s66 = sphi 0, %s50
    %s70 = sphi 0, %s70
    %s72 = sphi 0, %s70
    %s73 = sphi 0, %s72
    %s87 = sphi 0, %s73
    %s91 = sphi 0, %s91
    %s93 = sphi 0, %s91
    %s94 = sphi 0, %s93
    %s108 = sphi 0, %s94
    %s114 = sphi 0, %s116
    %s117 = sphi 0, %s114
    %s118 = sphi 0, %s117
    %s134 = sphi 0, %s118
    %s138 = sphi 0, %s138
    %s140 = sphi 0, %s138
    %s141 = sphi 0, %s140
    %s155 = sphi 0, %s141
    %s159 = sphi 0, %s159
    %s161 = sphi 0, %s159
    %s162 = sphi 0, %s161
    %s176 = sphi 0, %s162
    %s180 = sphi 0, %s180
    %s182 = sphi 0, %s180
    %s183 = sphi 0, %s182
    %s197 = sphi 0, %s183
    %s203 = sphi 0, %s205
    %s206 = sphi 0, %s203
    %s207 = sphi 0, %s206
    %s223 = sphi 0, %s207
    %s229 = sphi 0, %s231
    %s232 = sphi 0, %s229
    %s233 = sphi 0, %s232
    %s249 = sphi 0, %s233
    %s255 = sphi 0, %s257
    %s258 = sphi 0, %s255
    %s259 = sphi 0, %s258
    %s275 = sphi 0, %s259
    %s281 = sphi 0, %s283
    %s284 = sphi 0, %s281
    %s285 = sphi 0, %s284
    %s301 = sphi 0, %s285
    %s307 = sphi 0, %s309
    %s310 = sphi 0, %s307
    %s311 = sphi 0, %s310
    %s327 = sphi 0, %s311
    %s333 = sphi 0, %s335
    %s336 = sphi 0, %s333
    %s337 = sphi 0, %s336
    %s353 = sphi 0, %s337
    %s359 = sphi 0, %s361
    %s362 = sphi 0, %s359
    %s363 = sphi 0, %s362
    %s379 = sphi 0, %s363
    %s385 = sphi 0, %s387
    %s388 = sphi 0, %s385
    %s389 = sphi 0, %s388
    %s405 = sphi 0, %s389
    %s411 = sphi 0, %s413
    %s414 = sphi 0, %s411
    %s415 = sphi 0, %s414
    %s431 = sphi 0, %s415
    %s437 = sphi 0, %s439
    %s440 = sphi 0, %s437
    %s441 = sphi 0, %s440
    %s457 = sphi 0, %s441
    %s463 = sphi 0, %s465
    %s466 = sphi 0, %s463
    %s467 = sphi 0, %s466
    %s483 = sphi 0, %s467
    %s489 = sphi 0, %s491
    %s492 = sphi 0, %s489
    %s493 = sphi 0, %s492
    %s509 = sphi 0, %s493
  $region4: #{run.2} parent=0 // loop_header_branch
    %27 = sbr.rel (%p25) target = $region8
  $region5: #{run.2} parent=0 // loop_body
    %s29 = ssub.s32 %s24, 1
    %s30 = ssub.s32 %s24, 2
    %s37 = sadd.s32 1, %s32
    %p38 = scmp.ge.s32.totalorder %s37, 2
    %s39 = scalar_select %p38, 0, %s37
    %s40 = sadd.s32 1, %s31
    %s41 = scalar_select %p38, %s40, %s31
    %p42 = scmp.ge.s32.totalorder %s41, 2
    %s43 = scalar_select %p42, 0, %s41
    %s44 = ssub.s32 %s31, %s43
    %p45 = scmp.eq.s32.totalorder %s44, 0
    %s47 = sadd.s32 %s46, 1
    %s48 = scalar_select %p45, %s46, %s47
    %p51 = pneg %p45
    %p52 = scmp.eq.s32.totalorder %s24, 3
    %p53 = por %p51, %p52
    %p54 = scmp.ne.s32.totalorder %s46, %s49
    %p55 = scmp.eq.s32.totalorder %s24, 0
    %p56 = por %p54, %p55
    %p57 = scmp.ne.s32.totalorder %s46, %s49
    %p58 = scmp.eq.s32.totalorder %s29, 3
    %p59 = por %p57, %p58
    %p60 = scmp.ne.s32.totalorder %s49, %s50
    %p61 = scmp.eq.s32.totalorder %s29, 0
    %p62 = por %p60, %p61
    %p63 = scmp.ne.s32.totalorder %s49, %s50
    %p64 = scmp.eq.s32.totalorder %s30, 3
    %p65 = por %p63, %p64
    %p67 = scmp.ne.s32.totalorder %s50, %s66
    %p68 = scmp.eq.s32.totalorder %s30, 0
    %p69 = por %p67, %p68
    %s71 = sadd.s32 %s70, 1
    %p74 = scmp.eq.s32.totalorder %s24, 3
    %p75 = scmp.ne.s32.totalorder %s70, %s72
    %p76 = scmp.eq.s32.totalorder %s24, 0
    %p77 = por %p75, %p76
    %p78 = scmp.ne.s32.totalorder %s70, %s72
    %p79 = scmp.eq.s32.totalorder %s29, 3
    %p80 = por %p78, %p79
    %p81 = scmp.ne.s32.totalorder %s72, %s73
    %p82 = scmp.eq.s32.totalorder %s29, 0
    %p83 = por %p81, %p82
    %p84 = scmp.ne.s32.totalorder %s72, %s73
    %p85 = scmp.eq.s32.totalorder %s30, 3
    %p86 = por %p84, %p85
    %p88 = scmp.ne.s32.totalorder %s73, %s87
    %p89 = scmp.eq.s32.totalorder %s30, 0
    %p90 = por %p88, %p89
    %s92 = sadd.s32 %s91, 1
    %p95 = scmp.eq.s32.totalorder %s24, 3
    %p96 = scmp.ne.s32.totalorder %s91, %s93
    %p97 = scmp.eq.s32.totalorder %s24, 0
    %p98 = por %p96, %p97
    %p99 = scmp.ne.s32.totalorder %s91, %s93
    %p100 = scmp.eq.s32.totalorder %s29, 3
    %p101 = por %p99, %p100
    %p102 = scmp.ne.s32.totalorder %s93, %s94
    %p103 = scmp.eq.s32.totalorder %s29, 0
    %p104 = por %p102, %p103
    %p105 = scmp.ne.s32.totalorder %s93, %s94
    %p106 = scmp.eq.s32.totalorder %s30, 3
    %p107 = por %p105, %p106
    %p109 = scmp.ne.s32.totalorder %s94, %s108
    %p110 = scmp.eq.s32.totalorder %s30, 0
    %p111 = por %p109, %p110
    %s112 = ssub.s32 %s31, %s43
    %p113 = scmp.eq.s32.totalorder %s112, 0
    %s115 = sadd.s32 %s114, 1
    %s116 = scalar_select %p113, %s114, %s115
    %p119 = pneg %p113
    %p120 = scmp.eq.s32.totalorder %s24, 3
    %p121 = por %p119, %p120
    %p122 = scmp.ne.s32.totalorder %s114, %s117
    %p123 = scmp.eq.s32.totalorder %s24, 0
    %p124 = por %p122, %p123
    %p125 = scmp.ne.s32.totalorder %s114, %s117
    %p126 = scmp.eq.s32.totalorder %s29, 3
    %p127 = por %p125, %p126
    %p128 = scmp.ne.s32.totalorder %s117, %s118
    %p129 = scmp.eq.s32.totalorder %s29, 0
    %p130 = por %p128, %p129
    %p131 = scmp.ne.s32.totalorder %s117, %s118
    %p132 = scmp.eq.s32.totalorder %s30, 3
    %p133 = por %p131, %p132
    %p135 = scmp.ne.s32.totalorder %s118, %s134
    %p136 = scmp.eq.s32.totalorder %s30, 0
    %p137 = por %p135, %p136
    %s139 = sadd.s32 %s138, 1
    %p142 = scmp.eq.s32.totalorder %s24, 3
    %p143 = scmp.ne.s32.totalorder %s138, %s140
    %p144 = scmp.eq.s32.totalorder %s24, 0
    %p145 = por %p143, %p144
    %p146 = scmp.ne.s32.totalorder %s138, %s140
    %p147 = scmp.eq.s32.totalorder %s29, 3
    %p148 = por %p146, %p147
    %p149 = scmp.ne.s32.totalorder %s140, %s141
    %p150 = scmp.eq.s32.totalorder %s29, 0
    %p151 = por %p149, %p150
    %p152 = scmp.ne.s32.totalorder %s140, %s141
    %p153 = scmp.eq.s32.totalorder %s30, 3
    %p154 = por %p152, %p153
    %p156 = scmp.ne.s32.totalorder %s141, %s155
    %p157 = scmp.eq.s32.totalorder %s30, 0
    %p158 = por %p156, %p157
    %s160 = sadd.s32 %s159, 1
    %p163 = scmp.eq.s32.totalorder %s24, 3
    %p164 = scmp.ne.s32.totalorder %s159, %s161
    %p165 = scmp.eq.s32.totalorder %s24, 0
    %p166 = por %p164, %p165
    %p167 = scmp.ne.s32.totalorder %s159, %s161
    %p168 = scmp.eq.s32.totalorder %s29, 3
    %p169 = por %p167, %p168
    %p170 = scmp.ne.s32.totalorder %s161, %s162
    %p171 = scmp.eq.s32.totalorder %s29, 0
    %p172 = por %p170, %p171
    %p173 = scmp.ne.s32.totalorder %s161, %s162
    %p174 = scmp.eq.s32.totalorder %s30, 3
    %p175 = por %p173, %p174
    %p177 = scmp.ne.s32.totalorder %s162, %s176
    %p178 = scmp.eq.s32.totalorder %s30, 0
    %p179 = por %p177, %p178
    %s181 = sadd.s32 %s180, 1
    %p184 = scmp.eq.s32.totalorder %s24, 3
    %p185 = scmp.ne.s32.totalorder %s180, %s182
    %p186 = scmp.eq.s32.totalorder %s24, 0
    %p187 = por %p185, %p186
    %p188 = scmp.ne.s32.totalorder %s180, %s182
    %p189 = scmp.eq.s32.totalorder %s29, 3
    %p190 = por %p188, %p189
    %p191 = scmp.ne.s32.totalorder %s182, %s183
    %p192 = scmp.eq.s32.totalorder %s29, 0
    %p193 = por %p191, %p192
    %p194 = scmp.ne.s32.totalorder %s182, %s183
    %p195 = scmp.eq.s32.totalorder %s30, 3
    %p196 = por %p194, %p195
    %p198 = scmp.ne.s32.totalorder %s183, %s197
    %p199 = scmp.eq.s32.totalorder %s30, 0
    %p200 = por %p198, %p199
    %s201 = ssub.s32 %s32, %s39
    %p202 = scmp.eq.s32.totalorder %s201, 0
    %s204 = sadd.s32 %s203, 1
    %s205 = scalar_select %p202, %s203, %s204
    %p208 = pneg %p202
    %p209 = scmp.eq.s32.totalorder %s24, 3
    %p210 = por %p208, %p209
    %p211 = scmp.ne.s32.totalorder %s203, %s206
    %p212 = scmp.eq.s32.totalorder %s24, 0
    %p213 = por %p211, %p212
    %p214 = scmp.ne.s32.totalorder %s203, %s206
    %p215 = scmp.eq.s32.totalorder %s29, 3
    %p216 = por %p214, %p215
    %p217 = scmp.ne.s32.totalorder %s206, %s207
    %p218 = scmp.eq.s32.totalorder %s29, 0
    %p219 = por %p217, %p218
    %p220 = scmp.ne.s32.totalorder %s206, %s207
    %p221 = scmp.eq.s32.totalorder %s30, 3
    %p222 = por %p220, %p221
    %p224 = scmp.ne.s32.totalorder %s207, %s223
    %p225 = scmp.eq.s32.totalorder %s30, 0
    %p226 = por %p224, %p225
    %s227 = ssub.s32 %s32, %s39
    %p228 = scmp.eq.s32.totalorder %s227, 0
    %s230 = sadd.s32 %s229, 1
    %s231 = scalar_select %p228, %s229, %s230
    %p234 = pneg %p228
    %p235 = scmp.eq.s32.totalorder %s24, 3
    %p236 = por %p234, %p235
    %p237 = scmp.ne.s32.totalorder %s229, %s232
    %p238 = scmp.eq.s32.totalorder %s24, 0
    %p239 = por %p237, %p238
    %p240 = scmp.ne.s32.totalorder %s229, %s232
    %p241 = scmp.eq.s32.totalorder %s29, 3
    %p242 = por %p240, %p241
    %p243 = scmp.ne.s32.totalorder %s232, %s233
    %p244 = scmp.eq.s32.totalorder %s29, 0
    %p245 = por %p243, %p244
    %p246 = scmp.ne.s32.totalorder %s232, %s233
    %p247 = scmp.eq.s32.totalorder %s30, 3
    %p248 = por %p246, %p247
    %p250 = scmp.ne.s32.totalorder %s233, %s249
    %p251 = scmp.eq.s32.totalorder %s30, 0
    %p252 = por %p250, %p251
    %s253 = ssub.s32 %s32, %s39
    %p254 = scmp.eq.s32.totalorder %s253, 0
    %s256 = sadd.s32 %s255, 1
    %s257 = scalar_select %p254, %s255, %s256
    %p260 = pneg %p254
    %p261 = scmp.eq.s32.totalorder %s24, 3
    %p262 = por %p260, %p261
    %p263 = scmp.ne.s32.totalorder %s255, %s258
    %p264 = scmp.eq.s32.totalorder %s24, 0
    %p265 = por %p263, %p264
    %p266 = scmp.ne.s32.totalorder %s255, %s258
    %p267 = scmp.eq.s32.totalorder %s29, 3
    %p268 = por %p266, %p267
    %p269 = scmp.ne.s32.totalorder %s258, %s259
    %p270 = scmp.eq.s32.totalorder %s29, 0
    %p271 = por %p269, %p270
    %p272 = scmp.ne.s32.totalorder %s258, %s259
    %p273 = scmp.eq.s32.totalorder %s30, 3
    %p274 = por %p272, %p273
    %p276 = scmp.ne.s32.totalorder %s259, %s275
    %p277 = scmp.eq.s32.totalorder %s30, 0
    %p278 = por %p276, %p277
    %s279 = ssub.s32 %s32, %s39
    %p280 = scmp.eq.s32.totalorder %s279, 0
    %s282 = sadd.s32 %s281, 1
    %s283 = scalar_select %p280, %s281, %s282
    %p286 = pneg %p280
    %p287 = scmp.eq.s32.totalorder %s24, 3
    %p288 = por %p286, %p287
    %p289 = scmp.ne.s32.totalorder %s281, %s284
    %p290 = scmp.eq.s32.totalorder %s24, 0
    %p291 = por %p289, %p290
    %p292 = scmp.ne.s32.totalorder %s281, %s284
    %p293 = scmp.eq.s32.totalorder %s29, 3
    %p294 = por %p292, %p293
    %p295 = scmp.ne.s32.totalorder %s284, %s285
    %p296 = scmp.eq.s32.totalorder %s29, 0
    %p297 = por %p295, %p296
    %p298 = scmp.ne.s32.totalorder %s284, %s285
    %p299 = scmp.eq.s32.totalorder %s30, 3
    %p300 = por %p298, %p299
    %p302 = scmp.ne.s32.totalorder %s285, %s301
    %p303 = scmp.eq.s32.totalorder %s30, 0
    %p304 = por %p302, %p303
    %s305 = ssub.s32 %s32, %s39
    %p306 = scmp.eq.s32.totalorder %s305, 0
    %s308 = sadd.s32 %s307, 1
    %s309 = scalar_select %p306, %s307, %s308
    %p312 = pneg %p306
    %p313 = scmp.eq.s32.totalorder %s24, 3
    %p314 = por %p312, %p313
    %p315 = scmp.ne.s32.totalorder %s307, %s310
    %p316 = scmp.eq.s32.totalorder %s24, 0
    %p317 = por %p315, %p316
    %p318 = scmp.ne.s32.totalorder %s307, %s310
    %p319 = scmp.eq.s32.totalorder %s29, 3
    %p320 = por %p318, %p319
    %p321 = scmp.ne.s32.totalorder %s310, %s311
    %p322 = scmp.eq.s32.totalorder %s29, 0
    %p323 = por %p321, %p322
    %p324 = scmp.ne.s32.totalorder %s310, %s311
    %p325 = scmp.eq.s32.totalorder %s30, 3
    %p326 = por %p324, %p325
    %p328 = scmp.ne.s32.totalorder %s311, %s327
    %p329 = scmp.eq.s32.totalorder %s30, 0
    %p330 = por %p328, %p329
    %s331 = ssub.s32 %s32, %s39
    %p332 = scmp.eq.s32.totalorder %s331, 0
    %s334 = sadd.s32 %s333, 1
    %s335 = scalar_select %p332, %s333, %s334
    %p338 = pneg %p332
    %p339 = scmp.eq.s32.totalorder %s24, 3
    %p340 = por %p338, %p339
    %p341 = scmp.ne.s32.totalorder %s333, %s336
    %p342 = scmp.eq.s32.totalorder %s24, 0
    %p343 = por %p341, %p342
    %p344 = scmp.ne.s32.totalorder %s333, %s336
    %p345 = scmp.eq.s32.totalorder %s29, 3
    %p346 = por %p344, %p345
    %p347 = scmp.ne.s32.totalorder %s336, %s337
    %p348 = scmp.eq.s32.totalorder %s29, 0
    %p349 = por %p347, %p348
    %p350 = scmp.ne.s32.totalorder %s336, %s337
    %p351 = scmp.eq.s32.totalorder %s30, 3
    %p352 = por %p350, %p351
    %p354 = scmp.ne.s32.totalorder %s337, %s353
    %p355 = scmp.eq.s32.totalorder %s30, 0
    %p356 = por %p354, %p355
    %s357 = ssub.s32 %s32, %s39
    %p358 = scmp.eq.s32.totalorder %s357, 0
    %s360 = sadd.s32 %s359, 1
    %s361 = scalar_select %p358, %s359, %s360
    %p364 = pneg %p358
    %p365 = scmp.eq.s32.totalorder %s24, 3
    %p366 = por %p364, %p365
    %p367 = scmp.ne.s32.totalorder %s359, %s362
    %p368 = scmp.eq.s32.totalorder %s24, 0
    %p369 = por %p367, %p368
    %p370 = scmp.ne.s32.totalorder %s359, %s362
    %p371 = scmp.eq.s32.totalorder %s29, 3
    %p372 = por %p370, %p371
    %p373 = scmp.ne.s32.totalorder %s362, %s363
    %p374 = scmp.eq.s32.totalorder %s29, 0
    %p375 = por %p373, %p374
    %p376 = scmp.ne.s32.totalorder %s362, %s363
    %p377 = scmp.eq.s32.totalorder %s30, 3
    %p378 = por %p376, %p377
    %p380 = scmp.ne.s32.totalorder %s363, %s379
    %p381 = scmp.eq.s32.totalorder %s30, 0
    %p382 = por %p380, %p381
    %s383 = ssub.s32 %s32, %s39
    %p384 = scmp.eq.s32.totalorder %s383, 0
    %s386 = sadd.s32 %s385, 1
    %s387 = scalar_select %p384, %s385, %s386
    %p390 = pneg %p384
    %p391 = scmp.eq.s32.totalorder %s24, 3
    %p392 = por %p390, %p391
    %p393 = scmp.ne.s32.totalorder %s385, %s388
    %p394 = scmp.eq.s32.totalorder %s24, 0
    %p395 = por %p393, %p394
    %p396 = scmp.ne.s32.totalorder %s385, %s388
    %p397 = scmp.eq.s32.totalorder %s29, 3
    %p398 = por %p396, %p397
    %p399 = scmp.ne.s32.totalorder %s388, %s389
    %p400 = scmp.eq.s32.totalorder %s29, 0
    %p401 = por %p399, %p400
    %p402 = scmp.ne.s32.totalorder %s388, %s389
    %p403 = scmp.eq.s32.totalorder %s30, 3
    %p404 = por %p402, %p403
    %p406 = scmp.ne.s32.totalorder %s389, %s405
    %p407 = scmp.eq.s32.totalorder %s30, 0
    %p408 = por %p406, %p407
    %s409 = ssub.s32 %s32, %s39
    %p410 = scmp.eq.s32.totalorder %s409, 0
    %s412 = sadd.s32 %s411, 1
    %s413 = scalar_select %p410, %s411, %s412
    %p416 = pneg %p410
    %p417 = scmp.eq.s32.totalorder %s24, 3
    %p418 = por %p416, %p417
    %p419 = scmp.ne.s32.totalorder %s411, %s414
    %p420 = scmp.eq.s32.totalorder %s24, 0
    %p421 = por %p419, %p420
    %p422 = scmp.ne.s32.totalorder %s411, %s414
    %p423 = scmp.eq.s32.totalorder %s29, 3
    %p424 = por %p422, %p423
    %p425 = scmp.ne.s32.totalorder %s414, %s415
    %p426 = scmp.eq.s32.totalorder %s29, 0
    %p427 = por %p425, %p426
    %p428 = scmp.ne.s32.totalorder %s414, %s415
    %p429 = scmp.eq.s32.totalorder %s30, 3
    %p430 = por %p428, %p429
    %p432 = scmp.ne.s32.totalorder %s415, %s431
    %p433 = scmp.eq.s32.totalorder %s30, 0
    %p434 = por %p432, %p433
    %s435 = ssub.s32 %s32, %s39
    %p436 = scmp.eq.s32.totalorder %s435, 0
    %s438 = sadd.s32 %s437, 1
    %s439 = scalar_select %p436, %s437, %s438
    %p442 = pneg %p436
    %p443 = scmp.eq.s32.totalorder %s24, 3
    %p444 = por %p442, %p443
    %p445 = scmp.ne.s32.totalorder %s437, %s440
    %p446 = scmp.eq.s32.totalorder %s24, 0
    %p447 = por %p445, %p446
    %p448 = scmp.ne.s32.totalorder %s437, %s440
    %p449 = scmp.eq.s32.totalorder %s29, 3
    %p450 = por %p448, %p449
    %p451 = scmp.ne.s32.totalorder %s440, %s441
    %p452 = scmp.eq.s32.totalorder %s29, 0
    %p453 = por %p451, %p452
    %p454 = scmp.ne.s32.totalorder %s440, %s441
    %p455 = scmp.eq.s32.totalorder %s30, 3
    %p456 = por %p454, %p455
    %p458 = scmp.ne.s32.totalorder %s441, %s457
    %p459 = scmp.eq.s32.totalorder %s30, 0
    %p460 = por %p458, %p459
    %s461 = ssub.s32 %s32, %s39
    %p462 = scmp.eq.s32.totalorder %s461, 0
    %s464 = sadd.s32 %s463, 1
    %s465 = scalar_select %p462, %s463, %s464
    %p468 = pneg %p462
    %p469 = scmp.eq.s32.totalorder %s24, 3
    %p470 = por %p468, %p469
    %p471 = scmp.ne.s32.totalorder %s463, %s466
    %p472 = scmp.eq.s32.totalorder %s24, 0
    %p473 = por %p471, %p472
    %p474 = scmp.ne.s32.totalorder %s463, %s466
    %p475 = scmp.eq.s32.totalorder %s29, 3
    %p476 = por %p474, %p475
    %p477 = scmp.ne.s32.totalorder %s466, %s467
    %p478 = scmp.eq.s32.totalorder %s29, 0
    %p479 = por %p477, %p478
    %p480 = scmp.ne.s32.totalorder %s466, %s467
    %p481 = scmp.eq.s32.totalorder %s30, 3
    %p482 = por %p480, %p481
    %p484 = scmp.ne.s32.totalorder %s467, %s483
    %p485 = scmp.eq.s32.totalorder %s30, 0
    %p486 = por %p484, %p485
    %s487 = ssub.s32 %s31, %s43
    %p488 = scmp.eq.s32.totalorder %s487, 0
    %s490 = sadd.s32 %s489, 1
    %s491 = scalar_select %p488, %s489, %s490
    %p494 = pneg %p488
    %p495 = scmp.eq.s32.totalorder %s24, 3
    %p496 = por %p494, %p495
    %p497 = scmp.ne.s32.totalorder %s489, %s492
    %p498 = scmp.eq.s32.totalorder %s24, 0
    %p499 = por %p497, %p498
    %p500 = scmp.ne.s32.totalorder %s489, %s492
    %p501 = scmp.eq.s32.totalorder %s29, 3
    %p502 = por %p500, %p501
    %p503 = scmp.ne.s32.totalorder %s492, %s493
    %p504 = scmp.eq.s32.totalorder %s29, 0
    %p505 = por %p503, %p504
    %p506 = scmp.ne.s32.totalorder %s492, %s493
    %p507 = scmp.eq.s32.totalorder %s30, 3
    %p508 = por %p506, %p507
    %p510 = scmp.ne.s32.totalorder %s493, %s509
    %p511 = scmp.eq.s32.totalorder %s30, 0
    %p512 = por %p510, %p511
    %p513 = scmp.le.s32.totalorder 1, %s24
    %p514 = scmp.lt.s32.totalorder %s24, 5
    %p515 = pnand %p513, %p514
    %p516 = pneg %p515
    // Predicated region
    $region9: #{run.2} parent=5 // pred_check
      _
    $region10: #{run.2} parent=5 // pred_check_branch
      %518 = sbr.rel (%p515) target = $region12
    $region11: #{run.2} parent=5 // pred_region
      %s519 = ssub.s32 %s24, 1
      // Predicated region
      $region13: #{run.2} parent=11 // pred_check
        %p520 = pneg %p83
      $region14: #{run.2} parent=11 // pred_check_branch
        %522 = sbr.rel (%p520) target = $region16
      $region15: #{run.2} parent=11 // pred_region
        _
      $region16: #{run.2} parent=11 // pred_fallthru
        _
      // Predicated region
      $region17: #{run.2} parent=11 // pred_check
        %p523 = pneg %p104
      $region18: #{run.2} parent=11 // pred_check_branch
        %525 = sbr.rel (%p523) target = $region20
      $region19: #{run.2} parent=11 // pred_region
        _
      $region20: #{run.2} parent=11 // pred_fallthru
        _
      // Predicated region
      $region21: #{run.2} parent=11 // pred_check
        %p526 = pneg %p151
      $region22: #{run.2} parent=11 // pred_check_branch
        %528 = sbr.rel (%p526) target = $region24
      $region23: #{run.2} parent=11 // pred_region
        _
      $region24: #{run.2} parent=11 // pred_fallthru
        _
      // Predicated region
      $region25: #{run.2} parent=11 // pred_check
        %p529 = pneg %p172
      $region26: #{run.2} parent=11 // pred_check_branch
        %531 = sbr.rel (%p529) target = $region28
      $region27: #{run.2} parent=11 // pred_region
        _
      $region28: #{run.2} parent=11 // pred_fallthru
        _
      // Predicated region
      $region29: #{run.2} parent=11 // pred_check
        %p532 = pneg %p193
      $region30: #{run.2} parent=11 // pred_check_branch
        %534 = sbr.rel (%p532) target = $region32
      $region31: #{run.2} parent=11 // pred_region
        _
      $region32: #{run.2} parent=11 // pred_fallthru
        _
    $region12: #{run.2} parent=5 // pred_fallthru
      _
    %p535 = scmp.lt.s32.totalorder %s24, 4
    // Predicated region
    $region33: #{run.2} parent=5 // pred_check
      %p536 = pneg %p535
    $region34: #{run.2} parent=5 // pred_check_branch
      %538 = sbr.rel (%p536) target = $region36
    $region35: #{run.2} parent=5 // pred_region
      // Predicated region
      $region37: #{run.2} parent=35 // pred_check
        %p539 = pneg %p56
      $region38: #{run.2} parent=35 // pred_check_branch
        %541 = sbr.rel (%p539) target = $region40
      $region39: #{run.2} parent=35 // pred_region
        %p542 = scmp.lt.s32.totalorder %s31, 1
        %s543 = scalar_select %p542, %s31, 1
        %s544 = smul.addr %s543, 4
        %s545 = scalar_lea.vmem %s0, %s544
      $region40: #{run.2} parent=35 // pred_fallthru
        _
      // Predicated region
      $region41: #{run.2} parent=35 // pred_check
        %p546 = pneg %p124
      $region42: #{run.2} parent=35 // pred_check_branch
        %548 = sbr.rel (%p546) target = $region44
      $region43: #{run.2} parent=35 // pred_region
        %p549 = scmp.lt.s32.totalorder %s31, 1
        %s550 = scalar_select %p549, %s31, 1
        %s551 = smul.addr %s550, 4
        %s552 = scalar_lea.vmem %s3, %s551
      $region44: #{run.2} parent=35 // pred_fallthru
        _
      // Predicated region
      $region45: #{run.2} parent=35 // pred_check
        %p553 = pneg %p213
      $region46: #{run.2} parent=35 // pred_check_branch
        %555 = sbr.rel (%p553) target = $region48
      $region47: #{run.2} parent=35 // pred_region
        %p556 = scmp.lt.s32.totalorder %s32, 1
        %s557 = scalar_select %p556, %s32, 1
        %s558 = scalar_lea.vmem %s7, %s557
      $region48: #{run.2} parent=35 // pred_fallthru
        _
      // Predicated region
      $region49: #{run.2} parent=35 // pred_check
        %p559 = pneg %p239
      $region50: #{run.2} parent=35 // pred_check_branch
        %561 = sbr.rel (%p559) target = $region52
      $region51: #{run.2} parent=35 // pred_region
        %p562 = scmp.lt.s32.totalorder %s32, 1
        %s563 = scalar_select %p562, %s32, 1
        %s564 = scalar_lea.vmem %s8, %s563
      $region52: #{run.2} parent=35 // pred_fallthru
        _
      // Predicated region
      $region53: #{run.2} parent=35 // pred_check
        %p565 = pneg %p265
      $region54: #{run.2} parent=35 // pred_check_branch
        %567 = sbr.rel (%p565) target = $region56
      $region55: #{run.2} parent=35 // pred_region
        %p568 = scmp.lt.s32.totalorder %s32, 1
        %s569 = scalar_select %p568, %s32, 1
        %s570 = smul.addr %s569, 4
        %s571 = smul.addr %s570, 4
        %s572 = scalar_lea.vmem %s9, %s571
      $region56: #{run.2} parent=35 // pred_fallthru
        _
      // Predicated region
      $region57: #{run.2} parent=35 // pred_check
        %p573 = pneg %p291
      $region58: #{run.2} parent=35 // pred_check_branch
        %575 = sbr.rel (%p573) target = $region60
      $region59: #{run.2} parent=35 // pred_region
        %p576 = scmp.lt.s32.totalorder %s32, 1
        %s577 = scalar_select %p576, %s32, 1
        %s578 = smul.addr %s577, 4
        %s579 = smul.addr %s578, 4
        %s580 = scalar_lea.vmem %s10, %s579
      $region60: #{run.2} parent=35 // pred_fallthru
        _
      // Predicated region
      $region61: #{run.2} parent=35 // pred_check
        %p581 = pneg %p317
      $region62: #{run.2} parent=35 // pred_check_branch
        %583 = sbr.rel (%p581) target = $region64
      $region63: #{run.2} parent=35 // pred_region
        %p584 = scmp.lt.s32.totalorder %s32, 1
        %s585 = scalar_select %p584, %s32, 1
        %s586 = scalar_lea.vmem %s11, %s585
      $region64: #{run.2} parent=35 // pred_fallthru
        _
      // Predicated region
      $region65: #{run.2} parent=35 // pred_check
        %p587 = pneg %p343
      $region66: #{run.2} parent=35 // pred_check_branch
        %589 = sbr.rel (%p587) target = $region68
      $region67: #{run.2} parent=35 // pred_region
        %p590 = scmp.lt.s32.totalorder %s32, 1
        %s591 = scalar_select %p590, %s32, 1
        %s592 = scalar_lea.vmem %s12, %s591
      $region68: #{run.2} parent=35 // pred_fallthru
        _
      // Predicated region
      $region69: #{run.2} parent=35 // pred_check
        %p593 = pneg %p369
      $region70: #{run.2} parent=35 // pred_check_branch
        %595 = sbr.rel (%p593) target = $region72
      $region71: #{run.2} parent=35 // pred_region
        %p596 = scmp.lt.s32.totalorder %s32, 1
        %s597 = scalar_select %p596, %s32, 1
        %s598 = scalar_lea.vmem %s13, %s597
      $region72: #{run.2} parent=35 // pred_fallthru
        _
      // Predicated region
      $region73: #{run.2} parent=35 // pred_check
        %p599 = pneg %p395
      $region74: #{run.2} parent=35 // pred_check_branch
        %601 = sbr.rel (%p599) target = $region76
      $region75: #{run.2} parent=35 // pred_region
        %p602 = scmp.lt.s32.totalorder %s32, 1
        %s603 = scalar_select %p602, %s32, 1
        %s604 = smul.addr %s603, 4
        %s605 = smul.addr %s604, 4
        %s606 = scalar_lea.vmem %s14, %s605
      $region76: #{run.2} parent=35 // pred_fallthru
        _
      // Predicated region
      $region77: #{run.2} parent=35 // pred_check
        %p607 = pneg %p421
      $region78: #{run.2} parent=35 // pred_check_branch
        %609 = sbr.rel (%p607) target = $region80
      $region79: #{run.2} parent=35 // pred_region
        %p610 = scmp.lt.s32.totalorder %s32, 1
        %s611 = scalar_select %p610, %s32, 1
        %s612 = scalar_lea.vmem %s15, %s611
      $region80: #{run.2} parent=35 // pred_fallthru
        _
      // Predicated region
      $region81: #{run.2} parent=35 // pred_check
        %p613 = pneg %p447
      $region82: #{run.2} parent=35 // pred_check_branch
        %615 = sbr.rel (%p613) target = $region84
      $region83: #{run.2} parent=35 // pred_region
        %p616 = scmp.lt.s32.totalorder %s32, 1
        %s617 = scalar_select %p616, %s32, 1
        %s618 = smul.addr %s617, 16
        %s619 = smul.addr %s618, 4
        %s620 = scalar_lea.vmem %s16, %s619
      $region84: #{run.2} parent=35 // pred_fallthru
        _
      // Predicated region
      $region85: #{run.2} parent=35 // pred_check
        %p621 = pneg %p473
      $region86: #{run.2} parent=35 // pred_check_branch
        %623 = sbr.rel (%p621) target = $region88
      $region87: #{run.2} parent=35 // pred_region
        %p624 = scmp.lt.s32.totalorder %s32, 1
        %s625 = scalar_select %p624, %s32, 1
        %s626 = scalar_lea.vmem %s17, %s625
      $region88: #{run.2} parent=35 // pred_fallthru
        _
    $region36: #{run.2} parent=5 // pred_fallthru
      _
    %p627 = scmp.le.s32.totalorder 1, %s24
    %p628 = scmp.lt.s32.totalorder %s24, 5
    %p629 = pnand %p627, %p628
    %p630 = pneg %p629
    // Predicated region
    $region89: #{run.2} parent=5 // pred_check
      _
    $region90: #{run.2} parent=5 // pred_check_branch
      %632 = sbr.rel (%p629) target = $region92
    $region91: #{run.2} parent=5 // pred_region
      %s633 = ssub.s32 %s24, 1
      %p634 = scmp.lt.s32.totalorder %s33, 1
      %s635 = scalar_select %p634, %s33, 1
      %s636 = smul.addr %s635, 4
      %s637 = scalar_lea.vmem %s0, %s636
      %p638 = pneg %p62
      %p639 = pneg %p59
      %p640 = pneg %p83
      %p641 = pneg %p80
      %p642 = pneg %p104
      %p643 = pneg %p101
      %p644 = scmp.lt.s32.totalorder %s33, 1
      %s645 = scalar_select %p644, %s33, 1
      %s646 = smul.addr %s645, 4
      %s647 = scalar_lea.vmem %s3, %s646
      %p648 = pneg %p130
      %p649 = pneg %p127
      %p650 = pneg %p151
      %p651 = pneg %p148
      %p652 = pneg %p172
      %p653 = pneg %p169
      %p654 = pneg %p193
      %p655 = pneg %p190
      %p656 = scmp.lt.s32.totalorder %s34, 1
      %s657 = scalar_select %p656, %s34, 1
      %s658 = scalar_lea.vmem %s7, %s657
      %p659 = pneg %p219
      %p660 = pneg %p216
      %p661 = scmp.lt.s32.totalorder %s34, 1
      %s662 = scalar_select %p661, %s34, 1
      %s663 = scalar_lea.vmem %s8, %s662
      %p664 = pneg %p245
      %p665 = pneg %p242
      %p666 = scmp.lt.s32.totalorder %s34, 1
      %s667 = scalar_select %p666, %s34, 1
      %s668 = smul.addr %s667, 4
      %s669 = smul.addr %s668, 4
      %s670 = scalar_lea.vmem %s9, %s669
      %p671 = pneg %p271
      %p672 = pneg %p268
      %p673 = scmp.lt.s32.totalorder %s34, 1
      %s674 = scalar_select %p673, %s34, 1
      %s675 = smul.addr %s674, 4
      %s676 = smul.addr %s675, 4
      %s677 = scalar_lea.vmem %s10, %s676
      %p678 = pneg %p297
      %p679 = pneg %p294
      %p680 = scmp.lt.s32.totalorder %s34, 1
      %s681 = scalar_select %p680, %s34, 1
      %s682 = scalar_lea.vmem %s11, %s681
      %p683 = pneg %p323
      %p684 = pneg %p320
      %p685 = scmp.lt.s32.totalorder %s34, 1
      %s686 = scalar_select %p685, %s34, 1
      %s687 = scalar_lea.vmem %s12, %s686
      %p688 = pneg %p349
      %p689 = pneg %p346
      %p690 = scmp.lt.s32.totalorder %s34, 1
      %s691 = scalar_select %p690, %s34, 1
      %s692 = scalar_lea.vmem %s13, %s691
      %p693 = pneg %p375
      %p694 = pneg %p372
      %p695 = scmp.lt.s32.totalorder %s34, 1
      %s696 = scalar_select %p695, %s34, 1
      %s697 = smul.addr %s696, 4
      %s698 = smul.addr %s697, 4
      %s699 = scalar_lea.vmem %s14, %s698
      %p700 = pneg %p401
      %p701 = pneg %p398
      %p702 = scmp.lt.s32.totalorder %s34, 1
      %s703 = scalar_select %p702, %s34, 1
      %s704 = scalar_lea.vmem %s15, %s703
      %p705 = pneg %p427
      %p706 = pneg %p424
      %p707 = scmp.lt.s32.totalorder %s34, 1
      %s708 = scalar_select %p707, %s34, 1
      %s709 = smul.addr %s708, 16
      %s710 = smul.addr %s709, 4
      %s711 = scalar_lea.vmem %s16, %s710
      %p712 = pneg %p453
      %p713 = pneg %p450
      %p714 = scmp.lt.s32.totalorder %s34, 1
      %s715 = scalar_select %p714, %s34, 1
      %s716 = scalar_lea.vmem %s17, %s715
      %p717 = pneg %p479
      %p718 = pneg %p476
      %p719 = pneg %p505
      %p720 = pneg %p502
      %p721 = scmp.lt.s32.totalorder %s33, 1
      %s722 = scalar_select %p721, %s33, 1
      %s723 = smul.addr %s722, 8
      %s724 = scalar_lea.vmem %s18, %s723
      %p725 = scmp.lt.s32.totalorder %s33, 1
      %s726 = scalar_select %p725, %s33, 1
      %s727 = smul.addr %s726, 4
      %s728 = scalar_lea.vmem %s0, %s727
      %p729 = scmp.lt.s32.totalorder %s33, 1
      %s730 = scalar_select %p729, %s33, 1
      %s731 = smul.addr %s730, 4
      %s732 = scalar_lea.vmem %s3, %s731
      %p733 = scmp.lt.s32.totalorder %s34, 1
      %s734 = scalar_select %p733, %s34, 1
      %s735 = scalar_lea.vmem %s7, %s734
      %p736 = scmp.lt.s32.totalorder %s34, 1
      %s737 = scalar_select %p736, %s34, 1
      %s738 = scalar_lea.vmem %s8, %s737
      %p739 = scmp.lt.s32.totalorder %s34, 1
      %s740 = scalar_select %p739, %s34, 1
      %s741 = smul.addr %s740, 4
      %s742 = smul.addr %s741, 4
      %s743 = scalar_lea.vmem %s9, %s742
      %p744 = scmp.lt.s32.totalorder %s34, 1
      %s745 = scalar_select %p744, %s34, 1
      %s746 = smul.addr %s745, 4
      %s747 = smul.addr %s746, 4
      %s748 = scalar_lea.vmem %s10, %s747
      %p749 = scmp.lt.s32.totalorder %s34, 1
      %s750 = scalar_select %p749, %s34, 1
      %s751 = scalar_lea.vmem %s11, %s750
      %p752 = scmp.lt.s32.totalorder %s34, 1
      %s753 = scalar_select %p752, %s34, 1
      %s754 = scalar_lea.vmem %s12, %s753
      %p755 = scmp.lt.s32.totalorder %s34, 1
      %s756 = scalar_select %p755, %s34, 1
      %s757 = scalar_lea.vmem %s13, %s756
      %p758 = scmp.lt.s32.totalorder %s34, 1
      %s759 = scalar_select %p758, %s34, 1
      %s760 = smul.addr %s759, 4
      %s761 = smul.addr %s760, 4
      %s762 = scalar_lea.vmem %s14, %s761
      %p763 = scmp.lt.s32.totalorder %s34, 1
      %s764 = scalar_select %p763, %s34, 1
      %s765 = scalar_lea.vmem %s15, %s764
      %p766 = scmp.lt.s32.totalorder %s34, 1
      %s767 = scalar_select %p766, %s34, 1
      %s768 = smul.addr %s767, 16
      %s769 = smul.addr %s768, 4
      %s770 = scalar_lea.vmem %s16, %s769
      %p771 = scmp.lt.s32.totalorder %s34, 1
      %s772 = scalar_select %p771, %s34, 1
      %s773 = scalar_lea.vmem %s17, %s772
      %p774 = scmp.lt.s32.totalorder %s33, 1
      %s775 = scalar_select %p774, %s33, 1
      %s776 = smul.addr %s775, 8
      %s777 = scalar_lea.vmem %s18, %s776
      %p779 = scmp.eq.s32.totalorder %s34, 0
      // Predicated region
      $region93: #{run.2} parent=91 // pred_check
        %p780 = pneg %p779
      $region94: #{run.2} parent=91 // pred_check_branch
        %782 = sbr.rel (%p780) target = $region96
      $region95: #{run.2} parent=91 // pred_region
        %v783 = vld [vmem:[%s728] sm:$0xf]
        %v784 = vpack.c.bf16 %v783, %v783
        %v785 = vld [vmem:[%s1] sm:$0xf]
        %v786 = vld [vmem:[%s1 + $0x4] sm:$0x1]
        %v787 = vld [vmem:[%s2] sm:$0x1]
        %v789 = vlaneseq
        %v790 = vshrl.u32 %v789, 7
        %v791 = vsub.s32 0, %v790
        %v792 = vrot.slane %v787, %v791
        %v796 = vunpack.c.l.b16 %v785
        %v797 = vunpack.c.l.b16 %v786
        %v798 = vpack.c.b16 %v797, %v796
        %vm799 = vcmask 80896
        %v801 = vsel %vm799, %v784, 0
        %vm803 = vcmask 1044480
        %v805 = vsel %vm803, %v798, 0
        %807 = vmatprep.subr.bf16.mxu0 0
        %808 = vmatpush1.bf16.msra.mxu0 %v805
        %809 = vmatprep.subr.bf16.mxu0 0
        %810 = vmatpush1.bf16.msra.mxu0 0
        %811 = vmatprep.subr.bf16.mxu0 0
        %812 = vmatpush1.bf16.msra.mxu0 0
        %813 = vmatprep.subr.bf16.mxu0 0
        %814 = vmatpush1.bf16.msra.mxu0 0
        %815 = vmatprep.subr.bf16.mxu0 0
        %816 = vmatpush1.bf16.msra.mxu0 0
        %817 = vmatprep.subr.bf16.mxu0 0
        %818 = vmatpush1.bf16.msra.mxu0 0
        %819 = vmatprep.subr.bf16.mxu0 0
        %820 = vmatpush1.bf16.msra.mxu0 0
        %821 = vmatprep.subr.bf16.mxu0 0
        %822 = vmatpush1.bf16.msra.mxu0 0
        %823 = vmatprep.subr.bf16.mxu0 0
        %824 = vmatpush1.bf16.msra.mxu0 0
        %825 = vmatprep.subr.bf16.mxu0 0
        %826 = vmatpush1.bf16.msra.mxu0 0
        %827 = vmatprep.subr.bf16.mxu0 0
        %828 = vmatpush1.bf16.msra.mxu0 0
        %829 = vmatprep.subr.bf16.mxu0 0
        %830 = vmatpush1.bf16.msra.mxu0 0
        %831 = vmatprep.subr.bf16.mxu0 0
        %832 = vmatpush1.bf16.msra.mxu0 0
        %833 = vmatprep.subr.bf16.mxu0 0
        %834 = vmatpush1.bf16.msra.mxu0 0
        %835 = vmatprep.subr.bf16.mxu0 0
        %836 = vmatpush1.bf16.msra.mxu0 0
        %837 = vmatprep.subr.bf16.mxu0 0
        %838 = vmatpush1.bf16.msra.mxu0 0
        %839 = vmatprep.mubr.bf16.mxu0 0
        %840 = vmatmul.mubr.bf16.gmra.mrb[0].mxu0 %v801
        %v841 = vpop.f32.mrb[0].mxu0
        %v842 = vadd.f32 %v792, %v841
        %v843 = vpop.f32.mrb[0].mxu0
        %v844 = vpop.f32.mrb[0].mxu0
        %v845 = vpop.f32.mrb[0].mxu0
        %846 = vdwg.mxu0
        %v847 = vld [vmem:[%s732] sm:$0xf]
        %v848 = vadd.f32 %v842, %v847
        %vm849 = vcmask 257024
        %850 = vst.msk [vmem:[%s777 + $0x1] sm:$0xf] %vm849, %v848
        %v851 = vld [vmem:[%s4] sm:$0x1]
        %vm852 = vcmask 253952
        %853 = vst.msk [vmem:[%s777] sm:$0x1] %vm852, %v851
      $region96: #{run.2} parent=91 // pred_fallthru
        _
      %v854 = vld [vmem:[%s777] sm:$0x1f]
      %v855 = vld [vmem:[%s735] sm:$0x1]
      %v856 = vld [vmem:[%s738] sm:$0x1]
      %v857 = vld [vmem:[%s743] sm:$0xf]
      %v858 = vld [vmem:[%s743 + $0x4] sm:$0xf]
      %v859 = vld [vmem:[%s743 + $0x8] sm:$0xf]
      %v860 = vld [vmem:[%s743 + $0xc] sm:$0xf]
      %v861 = vld [vmem:[%s748] sm:$0xf]
      %v862 = vld [vmem:[%s748 + $0x4] sm:$0xf]
      %v863 = vld [vmem:[%s748 + $0x8] sm:$0xf]
      %v864 = vld [vmem:[%s748 + $0xc] sm:$0xf]
      %v865 = vld [vmem:[%s751] sm:$0x1]
      %v866 = vld [vmem:[%s754] sm:$0x1]
      %v867 = vld [vmem:[%s757] sm:$0x1]
      %v868 = vld [vmem:[%s762] sm:$0xf]
      %v869 = vld [vmem:[%s762 + $0x4] sm:$0xf]
      %v870 = vld [vmem:[%s762 + $0x8] sm:$0xf]
      %v871 = vld [vmem:[%s762 + $0xc] sm:$0xf]
      %v872 = vld [vmem:[%s765] sm:$0x1]
      %v873 = vld [vmem:[%s770] sm:$0xf]
      %v874 = vld [vmem:[%s770 + $0x4] sm:$0xf]
      %v875 = vld [vmem:[%s770 + $0x8] sm:$0xf]
      %v876 = vld [vmem:[%s770 + $0xc] sm:$0xf]
      %v877 = vld [vmem:[%s770 + $0x10] sm:$0xf]
      %v878 = vld [vmem:[%s770 + $0x14] sm:$0xf]
      %v879 = vld [vmem:[%s770 + $0x18] sm:$0xf]
      %v880 = vld [vmem:[%s770 + $0x1c] sm:$0xf]
      %v881 = vld [vmem:[%s770 + $0x20] sm:$0xf]
      %v882 = vld [vmem:[%s770 + $0x24] sm:$0xf]
      %v883 = vld [vmem:[%s770 + $0x28] sm:$0xf]
      %v884 = vld [vmem:[%s770 + $0x2c] sm:$0xf]
      %v885 = vld [vmem:[%s770 + $0x30] sm:$0xf]
      %v886 = vld [vmem:[%s770 + $0x34] sm:$0xf]
      %v887 = vld [vmem:[%s770 + $0x38] sm:$0xf]
      %v888 = vld [vmem:[%s770 + $0x3c] sm:$0xf]
      %v889 = vld [vmem:[%s773] sm:$0x1]
      %vm890 = vcmask 258048
      %v891 = vsel %vm890, %v854, 0.0
      %892 = vadd.xlane.f32.xlu0 %v891
      %v893 = vpop.xlane.xlu0 %892
      %v894 = vrcp.pop 32.0
      %v895 = vmul.f32 %v893, %v894
      %v896 = vsub.f32 %v854, %v895
      %v897 = vmul.f32 %v896, %v896
      %v898 = vsel %vm890, %v897, 0.0
      %899 = vadd.xlane.f32.xlu0 %v898
      %v900 = vpop.xlane.xlu0 %899
      %v901 = vmul.f32 %v900, %v894
      %v902 = vadd.f32 %v901, 1e-05
      %v903 = vrsqrt.pop %v902
      %v904 = vmul.f32 %v896, %v903
      %v906 = vlaneseq
      %v907 = vshrl.u32 %v906, 7
      %v908 = vsub.s32 0, %v907
      %v909 = vrot.slane %v855, %v908
      %v911 = vmul.f32 %v904, %v909
      %v913 = vlaneseq
      %v914 = vshrl.u32 %v913, 7
      %v915 = vsub.s32 0, %v914
      %v916 = vrot.slane %v856, %v915
      %v918 = vadd.f32 %v911, %v916
      %v919 = vpack.c.bf16 %v918, %v918
      %v924 = vunpack.c.l.b16 %v857
      %v925 = vunpack.c.l.b16 %v858
      %v926 = vunpack.c.l.b16 %v859
      %v927 = vunpack.c.l.b16 %v860
      %v928 = vpack.c.b16 %v925, %v924
      %v929 = vpack.c.b16 %v927, %v926
      %vm932 = vcmask 261120
      %v934 = vsel %vm932, %v919, 0
      %936 = vmatprep.subr.bf16.mxu0 0
      %937 = vmatpush1.bf16.msra.mxu0 %v928
      %938 = vmatprep.subr.bf16.mxu0 0
      %939 = vmatpush1.bf16.msra.mxu0 %v929
      %940 = vmatprep.subr.bf16.mxu0 0
      %941 = vmatpush1.bf16.msra.mxu0 0
      %942 = vmatprep.subr.bf16.mxu0 0
      %943 = vmatpush1.bf16.msra.mxu0 0
      %944 = vmatprep.subr.bf16.mxu0 0
      %945 = vmatpush1.bf16.msra.mxu0 0
      %946 = vmatprep.subr.bf16.mxu0 0
      %947 = vmatpush1.bf16.msra.mxu0 0
      %948 = vmatprep.subr.bf16.mxu0 0
      %949 = vmatpush1.bf16.msra.mxu0 0
      %950 = vmatprep.subr.bf16.mxu0 0
      %951 = vmatpush1.bf16.msra.mxu0 0
      %952 = vmatprep.subr.bf16.mxu0 0
      %953 = vmatpush1.bf16.msra.mxu0 0
      %954 = vmatprep.subr.bf16.mxu0 0
      %955 = vmatpush1.bf16.msra.mxu0 0
      %956 = vmatprep.subr.bf16.mxu0 0
      %957 = vmatpush1.bf16.msra.mxu0 0
      %958 = vmatprep.subr.bf16.mxu0 0
      %959 = vmatpush1.bf16.msra.mxu0 0
      %960 = vmatprep.subr.bf16.mxu0 0
      %961 = vmatpush1.bf16.msra.mxu0 0
      %962 = vmatprep.subr.bf16.mxu0 0
      %963 = vmatpush1.bf16.msra.mxu0 0
      %964 = vmatprep.subr.bf16.mxu0 0
      %965 = vmatpush1.bf16.msra.mxu0 0
      %966 = vmatprep.subr.bf16.mxu0 0
      %967 = vmatpush1.bf16.msra.mxu0 0
      %968 = vmatprep.mubr.bf16.mxu0 0
      %969 = vmatmul.mubr.bf16.gmra.mrb[0].mxu0 %v934
      %v970 = vpop.f32.mrb[0].mxu0
      %v971 = vadd.f32 0.0, %v970
      %v972 = vpop.f32.mrb[0].mxu0
      %v973 = vpop.f32.mrb[0].mxu0
      %v974 = vpop.f32.mrb[0].mxu0
      %975 = vdwg.mxu0
      %977 = vrot.lane.b32.xlu0 %v971, 120
      %v978 = vpop.permute.xlu0 %977
      %980 = vrot.lane.b32.xlu0 %v971, 112
      %v981 = vpop.permute.xlu0 %980
      %983 = vrot.lane.b32.xlu0 %v971, 104
      %v984 = vpop.permute.xlu0 %983
      %v986 = vpack.c.bf16 %v971, %v971
      %v987 = vpack.c.bf16 %v978, %v978
      %v988 = vpack.c.bf16 %v981, %v981
      %v989 = vpack.c.bf16 %v984, %v984
      %991 = vrot.lane.b32.xlu0 %v986, 96
      %v992 = vpop.permute.xlu0 %991
      %vm993 = vcmask 64512
      %v995 = vsel %vm993, %v986, 0
      %v998 = vsel %vm993, %v992, 0
      %1000 = vmatprep.subr.bf16.mxu0 0
      %1001 = vmatpush1.bf16.xpose.msra.mxu0 %v998
      %1002 = vmatprep.subr.bf16.mxu0 0
      %1003 = vmatpush1.bf16.xpose.msra.mxu0 0
      %1004 = vmatprep.subr.bf16.mxu0 0
      %1005 = vmatpush1.bf16.xpose.msra.mxu0 0
      %1006 = vmatprep.subr.bf16.mxu0 0
      %1007 = vmatpush1.bf16.xpose.msra.mxu0 0
      %1008 = vmatprep.subr.bf16.mxu0 0
      %1009 = vmatpush1.bf16.xpose.msra.mxu0 0
      %1010 = vmatprep.subr.bf16.mxu0 0
      %1011 = vmatpush1.bf16.xpose.msra.mxu0 0
      %1012 = vmatprep.subr.bf16.mxu0 0
      %1013 = vmatpush1.bf16.xpose.msra.mxu0 0
      %1014 = vmatprep.subr.bf16.mxu0 0
      %1015 = vmatpush1.bf16.xpose.msra.mxu0 0
      %1016 = vmatprep.subr.bf16.mxu0 0
      %1017 = vmatpush1.bf16.xpose.msra.mxu0 0
      %1018 = vmatprep.subr.bf16.mxu0 0
      %1019 = vmatpush1.bf16.xpose.msra.mxu0 0
      %1020 = vmatprep.subr.bf16.mxu0 0
      %1021 = vmatpush1.bf16.xpose.msra.mxu0 0
      %1022 = vmatprep.subr.bf16.mxu0 0
      %1023 = vmatpush1.bf16.xpose.msra.mxu0 0
      %1024 = vmatprep.subr.bf16.mxu0 0
      %1025 = vmatpush1.bf16.xpose.msra.mxu0 0
      %1026 = vmatprep.subr.bf16.mxu0 0
      %1027 = vmatpush1.bf16.xpose.msra.mxu0 0
      %1028 = vmatprep.subr.bf16.mxu0 0
      %1029 = vmatpush1.bf16.xpose.msra.mxu0 0
      %1030 = vmatprep.subr.bf16.mxu0 0
      %1031 = vmatpush1.bf16.xpose.msra.mxu0 0
      %1032 = vmatprep.mubr.bf16.mxu0 0
      %1033 = vmatmul.mubr.bf16.gmra.mrb[0].mxu0 %v995
      %v1034 = vpop.f32.mrb[0].mxu0
      %v1035 = vadd.f32 0.0, %v1034
      %v1036 = vpop.f32.mrb[0].mxu0
      %v1037 = vpop.f32.mrb[0].mxu0
      %v1038 = vpop.f32.mrb[0].mxu0
      %1039 = vdwg.mxu0
      %1041 = vrot.lane.b32.xlu0 %v987, 96
      %v1042 = vpop.permute.xlu0 %1041
      %v1044 = vsel %vm993, %v987, 0
      %v1047 = vsel %vm993, %v1042, 0
      %1049 = vmatprep.subr.bf16.mxu0 0
      %1050 = vmatpush1.bf16.xpose.msra.mxu0 %v1047
      %1051 = vmatprep.subr.bf16.mxu0 0
      %1052 = vmatpush1.bf16.xpose.msra.mxu0 0
      %1053 = vmatprep.subr.bf16.mxu0 0
      %1054 = vmatpush1.bf16.xpose.msra.mxu0 0
      %1055 = vmatprep.subr.bf16.mxu0 0
      %1056 = vmatpush1.bf16.xpose.msra.mxu0 0
      %1057 = vmatprep.subr.bf16.mxu0 0
      %1058 = vmatpush1.bf16.xpose.msra.mxu0 0
      %1059 = vmatprep.subr.bf16.mxu0 0
      %1060 = vmatpush1.bf16.xpose.msra.mxu0 0
      %1061 = vmatprep.subr.bf16.mxu0 0
      %1062 = vmatpush1.bf16.xpose.msra.mxu0 0
      %1063 = vmatprep.subr.bf16.mxu0 0
      %1064 = vmatpush1.bf16.xpose.msra.mxu0 0
      %1065 = vmatprep.subr.bf16.mxu0 0
      %1066 = vmatpush1.bf16.xpose.msra.mxu0 0
      %1067 = vmatprep.subr.bf16.mxu0 0
      %1068 = vmatpush1.bf16.xpose.msra.mxu0 0
      %1069 = vmatprep.subr.bf16.mxu0 0
      %1070 = vmatpush1.bf16.xpose.msra.mxu0 0
      %1071 = vmatprep.subr.bf16.mxu0 0
      %1072 = vmatpush1.bf16.xpose.msra.mxu0 0
      %1073 = vmatprep.subr.bf16.mxu0 0
      %1074 = vmatpush1.bf16.xpose.msra.mxu0 0
      %1075 = vmatprep.subr.bf16.mxu0 0
      %1076 = vmatpush1.bf16.xpose.msra.mxu0 0
      %1077 = vmatprep.subr.bf16.mxu0 0
      %1078 = vmatpush1.bf16.xpose.msra.mxu0 0
      %1079 = vmatprep.subr.bf16.mxu0 0
      %1080 = vmatpush1.bf16.xpose.msra.mxu0 0
      %1081 = vmatprep.mubr.bf16.mxu0 0
      %1082 = vmatmul.mubr.bf16.gmra.mrb[0].mxu0 %v1044
      %v1083 = vpop.f32.mrb[0].mxu0
      %v1084 = vadd.f32 0.0, %v1083
      %v1085 = vpop.f32.mrb[0].mxu0
      %v1086 = vpop.f32.mrb[0].mxu0
      %v1087 = vpop.f32.mrb[0].mxu0
      %1088 = vdwg.mxu0
      %1090 = vrot.lane.b32.xlu0 %v988, 96
      %v1091 = vpop.permute.xlu0 %1090
      %v1093 = vsel %vm993, %v988, 0
      %v1096 = vsel %vm993, %v1091, 0
      %1098 = vmatprep.subr.bf16.mxu0 0
      %1099 = vmatpush1.bf16.xpose.msra.mxu0 %v1096
      %1100 = vmatprep.subr.bf16.mxu0 0
      %1101 = vmatpush1.bf16.xpose.msra.mxu0 0
      %1102 = vmatprep.subr.bf16.mxu0 0
      %1103 = vmatpush1.bf16.xpose.msra.mxu0 0
      %1104 = vmatprep.subr.bf16.mxu0 0
      %1105 = vmatpush1.bf16.xpose.msra.mxu0 0
      %1106 = vmatprep.subr.bf16.mxu0 0
      %1107 = vmatpush1.bf16.xpose.msra.mxu0 0
      %1108 = vmatprep.subr.bf16.mxu0 0
      %1109 = vmatpush1.bf16.xpose.msra.mxu0 0
      %1110 = vmatprep.subr.bf16.mxu0 0
      %1111 = vmatpush1.bf16.xpose.msra.mxu0 0
      %1112 = vmatprep.subr.bf16.mxu0 0
      %1113 = vmatpush1.bf16.xpose.msra.mxu0 0
      %1114 = vmatprep.subr.bf16.mxu0 0
      %1115 = vmatpush1.bf16.xpose.msra.mxu0 0
      %1116 = vmatprep.subr.bf16.mxu0 0
      %1117 = vmatpush1.bf16.xpose.msra.mxu0 0
      %1118 = vmatprep.subr.bf16.mxu0 0
      %1119 = vmatpush1.bf16.xpose.msra.mxu0 0
      %1120 = vmatprep.subr.bf16.mxu0 0
      %1121 = vmatpush1.bf16.xpose.msra.mxu0 0
      %1122 = vmatprep.subr.bf16.mxu0 0
      %1123 = vmatpush1.bf16.xpose.msra.mxu0 0
      %1124 = vmatprep.subr.bf16.mxu0 0
      %1125 = vmatpush1.bf16.xpose.msra.mxu0 0
      %1126 = vmatprep.subr.bf16.mxu0 0
      %1127 = vmatpush1.bf16.xpose.msra.mxu0 0
      %1128 = vmatprep.subr.bf16.mxu0 0
      %1129 = vmatpush1.bf16.xpose.msra.mxu0 0
      %1130 = vmatprep.mubr.bf16.mxu0 0
      %1131 = vmatmul.mubr.bf16.gmra.mrb[0].mxu0 %v1093
      %v1132 = vpop.f32.mrb[0].mxu0
      %v1133 = vadd.f32 0.0, %v1132
      %v1134 = vpop.f32.mrb[0].mxu0
      %v1135 = vpop.f32.mrb[0].mxu0
      %v1136 = vpop.f32.mrb[0].mxu0
      %1137 = vdwg.mxu0
      %1139 = vrot.lane.b32.xlu0 %v989, 96
      %v1140 = vpop.permute.xlu0 %1139
      %v1142 = vsel %vm993, %v989, 0
      %v1145 = vsel %vm993, %v1140, 0
      %1147 = vmatprep.subr.bf16.mxu0 0
      %1148 = vmatpush1.bf16.xpose.msra.mxu0 %v1145
      %1149 = vmatprep.subr.bf16.mxu0 0
      %1150 = vmatpush1.bf16.xpose.msra.mxu0 0
      %1151 = vmatprep.subr.bf16.mxu0 0
      %1152 = vmatpush1.bf16.xpose.msra.mxu0 0
      %1153 = vmatprep.subr.bf16.mxu0 0
      %1154 = vmatpush1.bf16.xpose.msra.mxu0 0
      %1155 = vmatprep.subr.bf16.mxu0 0
      %1156 = vmatpush1.bf16.xpose.msra.mxu0 0
      %1157 = vmatprep.subr.bf16.mxu0 0
      %1158 = vmatpush1.bf16.xpose.msra.mxu0 0
      %1159 = vmatprep.subr.bf16.mxu0 0
      %1160 = vmatpush1.bf16.xpose.msra.mxu0 0
      %1161 = vmatprep.subr.bf16.mxu0 0
      %1162 = vmatpush1.bf16.xpose.msra.mxu0 0
      %1163 = vmatprep.subr.bf16.mxu0 0
      %1164 = vmatpush1.bf16.xpose.msra.mxu0 0
      %1165 = vmatprep.subr.bf16.mxu0 0
      %1166 = vmatpush1.bf16.xpose.msra.mxu0 0
      %1167 = vmatprep.subr.bf16.mxu0 0
      %1168 = vmatpush1.bf16.xpose.msra.mxu0 0
      %1169 = vmatprep.subr.bf16.mxu0 0
      %1170 = vmatpush1.bf16.xpose.msra.mxu0 0
      %1171 = vmatprep.subr.bf16.mxu0 0
      %1172 = vmatpush1.bf16.xpose.msra.mxu0 0
      %1173 = vmatprep.subr.bf16.mxu0 0
      %1174 = vmatpush1.bf16.xpose.msra.mxu0 0
      %1175 = vmatprep.subr.bf16.mxu0 0
      %1176 = vmatpush1.bf16.xpose.msra.mxu0 0
      %1177 = vmatprep.subr.bf16.mxu0 0
      %1178 = vmatpush1.bf16.xpose.msra.mxu0 0
      %1179 = vmatprep.mubr.bf16.mxu0 0
      %1180 = vmatmul.mubr.bf16.gmra.mrb[0].mxu0 %v1142
      %v1181 = vpop.f32.mrb[0].mxu0
      %v1182 = vadd.f32 0.0, %v1181
      %v1183 = vpop.f32.mrb[0].mxu0
      %v1184 = vpop.f32.mrb[0].mxu0
      %v1185 = vpop.f32.mrb[0].mxu0
      %1186 = vdwg.mxu0
      %vm1187 = vcmask 36864
      %v1188 = vsel %vm1187, %v1035, -inf
      %1189 = vmax.xlane.f32.xlu0 %v1188
      %v1190 = vpop.xlane.xlu0 %1189
      %v1191 = vsel %vm1187, %v1084, -inf
      %1192 = vmax.xlane.f32.xlu0 %v1191
      %v1193 = vpop.xlane.xlu0 %1192
      %v1194 = vsel %vm1187, %v1133, -inf
      %1195 = vmax.xlane.f32.xlu0 %v1194
      %v1196 = vpop.xlane.xlu0 %1195
      %v1197 = vsel %vm1187, %v1182, -inf
      %1198 = vmax.xlane.f32.xlu0 %v1197
      %v1199 = vpop.xlane.xlu0 %1198
      %v1200 = vsub.f32 %v1035, %v1190
      %v1201 = vsub.f32 %v1084, %v1193
      %v1202 = vsub.f32 %v1133, %v1196
      %v1203 = vsub.f32 %v1182, %v1199
      %v1204 = vmul.f32 %v1200, 1.442695
      %v1205 = vpow.pop %v1204
      %v1206 = vmul.f32 %v1201, 1.442695
      %v1207 = vpow.pop %v1206
      %v1208 = vmul.f32 %v1202, 1.442695
      %v1209 = vpow.pop %v1208
      %v1210 = vmul.f32 %v1203, 1.442695
      %v1211 = vpow.pop %v1210
      %v1212 = vsel %vm1187, %v1205, 0.0
      %1213 = vadd.xlane.f32.xlu0 %v1212
      %v1214 = vpop.xlane.xlu0 %1213
      %v1215 = vsel %vm1187, %v1207, 0.0
      %1216 = vadd.xlane.f32.xlu0 %v1215
      %v1217 = vpop.xlane.xlu0 %1216
      %v1218 = vsel %vm1187, %v1209, 0.0
      %1219 = vadd.xlane.f32.xlu0 %v1218
      %v1220 = vpop.xlane.xlu0 %1219
      %v1221 = vsel %vm1187, %v1211, 0.0
      %1222 = vadd.xlane.f32.xlu0 %v1221
      %v1223 = vpop.xlane.xlu0 %1222
      %v1224 = vrcp.pop %v1214
      %v1225 = vrcp.pop %v1217
      %v1226 = vrcp.pop %v1220
      %v1227 = vrcp.pop %v1223
      %v1228 = vmul.f32 %v1205, %v1224
      %v1229 = vmul.f32 %v1207, %v1225
      %v1230 = vmul.f32 %v1209, %v1226
      %v1231 = vmul.f32 %v1211, %v1227
      %v1232 = vpack.c.bf16 %v1228, %v1228
      %v1233 = vpack.c.bf16 %v1229, %v1229
      %v1234 = vpack.c.bf16 %v1230, %v1230
      %v1235 = vpack.c.bf16 %v1231, %v1231
      %1236 = vrot.lane.b32.xlu0 %v986, 64
      %v1237 = vpop.permute.xlu0 %1236
      %vm1238 = vcmask 39936
      %v1240 = vsel %vm1238, %v1232, 0
      %vm1242 = vcmask 1041408
      %vm1243 = vcmask 1042432
      %v1244 = vsel %vm1242, 4294967295, 65535
      %v1245 = vsel %vm1243, %v1244, 0
      %v1247 = vand.u32 %v1237, %v1245
      %1249 = vmatprep.subr.bf16.mxu0 0
      %1250 = vmatpush1.bf16.msra.mxu0 %v1247
      %1251 = vmatprep.subr.bf16.mxu0 0
      %1252 = vmatpush1.bf16.msra.mxu0 0
      %1253 = vmatprep.subr.bf16.mxu0 0
      %1254 = vmatpush1.bf16.msra.mxu0 0
      %1255 = vmatprep.subr.bf16.mxu0 0
      %1256 = vmatpush1.bf16.msra.mxu0 0
      %1257 = vmatprep.subr.bf16.mxu0 0
      %1258 = vmatpush1.bf16.msra.mxu0 0
      %1259 = vmatprep.subr.bf16.mxu0 0
      %1260 = vmatpush1.bf16.msra.mxu0 0
      %1261 = vmatprep.subr.bf16.mxu0 0
      %1262 = vmatpush1.bf16.msra.mxu0 0
      %1263 = vmatprep.subr.bf16.mxu0 0
      %1264 = vmatpush1.bf16.msra.mxu0 0
      %1265 = vmatprep.subr.bf16.mxu0 0
      %1266 = vmatpush1.bf16.msra.mxu0 0
      %1267 = vmatprep.subr.bf16.mxu0 0
      %1268 = vmatpush1.bf16.msra.mxu0 0
      %1269 = vmatprep.subr.bf16.mxu0 0
      %1270 = vmatpush1.bf16.msra.mxu0 0
      %1271 = vmatprep.subr.bf16.mxu0 0
      %1272 = vmatpush1.bf16.msra.mxu0 0
      %1273 = vmatprep.subr.bf16.mxu0 0
      %1274 = vmatpush1.bf16.msra.mxu0 0
      %1275 = vmatprep.subr.bf16.mxu0 0
      %1276 = vmatpush1.bf16.msra.mxu0 0
      %1277 = vmatprep.subr.bf16.mxu0 0
      %1278 = vmatpush1.bf16.msra.mxu0 0
      %1279 = vmatprep.subr.bf16.mxu0 0
      %1280 = vmatpush1.bf16.msra.mxu0 0
      %1281 = vmatprep.mubr.bf16.mxu0 0
      %1282 = vmatmul.mubr.bf16.gmra.mrb[0].mxu0 %v1240
      %v1283 = vpop.f32.mrb[0].mxu0
      %v1284 = vadd.f32 0.0, %v1283
      %v1285 = vpop.f32.mrb[0].mxu0
      %v1286 = vpop.f32.mrb[0].mxu0
      %v1287 = vpop.f32.mrb[0].mxu0
      %1288 = vdwg.mxu0
      %1289 = vrot.lane.b32.xlu0 %v987, 64
      %v1290 = vpop.permute.xlu0 %1289
      %v1292 = vsel %vm1238, %v1233, 0
      %v1295 = vand.u32 %v1290, %v1245
      %1297 = vmatprep.subr.bf16.mxu0 0
      %1298 = vmatpush1.bf16.msra.mxu0 %v1295
      %1299 = vmatprep.subr.bf16.mxu0 0
      %1300 = vmatpush1.bf16.msra.mxu0 0
      %1301 = vmatprep.subr.bf16.mxu0 0
      %1302 = vmatpush1.bf16.msra.mxu0 0
      %1303 = vmatprep.subr.bf16.mxu0 0
      %1304 = vmatpush1.bf16.msra.mxu0 0
      %1305 = vmatprep.subr.bf16.mxu0 0
      %1306 = vmatpush1.bf16.msra.mxu0 0
      %1307 = vmatprep.subr.bf16.mxu0 0
      %1308 = vmatpush1.bf16.msra.mxu0 0
      %1309 = vmatprep.subr.bf16.mxu0 0
      %1310 = vmatpush1.bf16.msra.mxu0 0
      %1311 = vmatprep.subr.bf16.mxu0 0
      %1312 = vmatpush1.bf16.msra.mxu0 0
      %1313 = vmatprep.subr.bf16.mxu0 0
      %1314 = vmatpush1.bf16.msra.mxu0 0
      %1315 = vmatprep.subr.bf16.mxu0 0
      %1316 = vmatpush1.bf16.msra.mxu0 0
      %1317 = vmatprep.subr.bf16.mxu0 0
      %1318 = vmatpush1.bf16.msra.mxu0 0
      %1319 = vmatprep.subr.bf16.mxu0 0
      %1320 = vmatpush1.bf16.msra.mxu0 0
      %1321 = vmatprep.subr.bf16.mxu0 0
      %1322 = vmatpush1.bf16.msra.mxu0 0
      %1323 = vmatprep.subr.bf16.mxu0 0
      %1324 = vmatpush1.bf16.msra.mxu0 0
      %1325 = vmatprep.subr.bf16.mxu0 0
      %1326 = vmatpush1.bf16.msra.mxu0 0
      %1327 = vmatprep.subr.bf16.mxu0 0
      %1328 = vmatpush1.bf16.msra.mxu0 0
      %1329 = vmatprep.mubr.bf16.mxu0 0
      %1330 = vmatmul.mubr.bf16.gmra.mrb[0].mxu0 %v1292
      %v1331 = vpop.f32.mrb[0].mxu0
      %v1332 = vadd.f32 0.0, %v1331
      %v1333 = vpop.f32.mrb[0].mxu0
      %v1334 = vpop.f32.mrb[0].mxu0
      %v1335 = vpop.f32.mrb[0].mxu0
      %1336 = vdwg.mxu0
      %1337 = vrot.lane.b32.xlu0 %v988, 64
      %v1338 = vpop.permute.xlu0 %1337
      %v1340 = vsel %vm1238, %v1234, 0
      %v1343 = vand.u32 %v1338, %v1245
      %1345 = vmatprep.subr.bf16.mxu0 0
      %1346 = vmatpush1.bf16.msra.mxu0 %v1343
      %1347 = vmatprep.subr.bf16.mxu0 0
      %1348 = vmatpush1.bf16.msra.mxu0 0
      %1349 = vmatprep.subr.bf16.mxu0 0
      %1350 = vmatpush1.bf16.msra.mxu0 0
      %1351 = vmatprep.subr.bf16.mxu0 0
      %1352 = vmatpush1.bf16.msra.mxu0 0
      %1353 = vmatprep.subr.bf16.mxu0 0
      %1354 = vmatpush1.bf16.msra.mxu0 0
      %1355 = vmatprep.subr.bf16.mxu0 0
      %1356 = vmatpush1.bf16.msra.mxu0 0
      %1357 = vmatprep.subr.bf16.mxu0 0
      %1358 = vmatpush1.bf16.msra.mxu0 0
      %1359 = vmatprep.subr.bf16.mxu0 0
      %1360 = vmatpush1.bf16.msra.mxu0 0
      %1361 = vmatprep.subr.bf16.mxu0 0
      %1362 = vmatpush1.bf16.msra.mxu0 0
      %1363 = vmatprep.subr.bf16.mxu0 0
      %1364 = vmatpush1.bf16.msra.mxu0 0
      %1365 = vmatprep.subr.bf16.mxu0 0
      %1366 = vmatpush1.bf16.msra.mxu0 0
      %1367 = vmatprep.subr.bf16.mxu0 0
      %1368 = vmatpush1.bf16.msra.mxu0 0
      %1369 = vmatprep.subr.bf16.mxu0 0
      %1370 = vmatpush1.bf16.msra.mxu0 0
      %1371 = vmatprep.subr.bf16.mxu0 0
      %1372 = vmatpush1.bf16.msra.mxu0 0
      %1373 = vmatprep.subr.bf16.mxu0 0
      %1374 = vmatpush1.bf16.msra.mxu0 0
      %1375 = vmatprep.subr.bf16.mxu0 0
      %1376 = vmatpush1.bf16.msra.mxu0 0
      %1377 = vmatprep.mubr.bf16.mxu0 0
      %1378 = vmatmul.mubr.bf16.gmra.mrb[0].mxu0 %v1340
      %v1379 = vpop.f32.mrb[0].mxu0
      %v1380 = vadd.f32 0.0, %v1379
      %v1381 = vpop.f32.mrb[0].mxu0
      %v1382 = vpop.f32.mrb[0].mxu0
      %v1383 = vpop.f32.mrb[0].mxu0
      %1384 = vdwg.mxu0
      %1385 = vrot.lane.b32.xlu0 %v989, 64
      %v1386 = vpop.permute.xlu0 %1385
      %v1388 = vsel %vm1238, %v1235, 0
      %v1391 = vand.u32 %v1386, %v1245
      %1393 = vmatprep.subr.bf16.mxu0 0
      %1394 = vmatpush1.bf16.msra.mxu0 %v1391
      %1395 = vmatprep.subr.bf16.mxu0 0
      %1396 = vmatpush1.bf16.msra.mxu0 0
      %1397 = vmatprep.subr.bf16.mxu0 0
      %1398 = vmatpush1.bf16.msra.mxu0 0
      %1399 = vmatprep.subr.bf16.mxu0 0
      %1400 = vmatpush1.bf16.msra.mxu0 0
      %1401 = vmatprep.subr.bf16.mxu0 0
      %1402 = vmatpush1.bf16.msra.mxu0 0
      %1403 = vmatprep.subr.bf16.mxu0 0
      %1404 = vmatpush1.bf16.msra.mxu0 0
      %1405 = vmatprep.subr.bf16.mxu0 0
      %1406 = vmatpush1.bf16.msra.mxu0 0
      %1407 = vmatprep.subr.bf16.mxu0 0
      %1408 = vmatpush1.bf16.msra.mxu0 0
      %1409 = vmatprep.subr.bf16.mxu0 0
      %1410 = vmatpush1.bf16.msra.mxu0 0
      %1411 = vmatprep.subr.bf16.mxu0 0
      %1412 = vmatpush1.bf16.msra.mxu0 0
      %1413 = vmatprep.subr.bf16.mxu0 0
      %1414 = vmatpush1.bf16.msra.mxu0 0
      %1415 = vmatprep.subr.bf16.mxu0 0
      %1416 = vmatpush1.bf16.msra.mxu0 0
      %1417 = vmatprep.subr.bf16.mxu0 0
      %1418 = vmatpush1.bf16.msra.mxu0 0
      %1419 = vmatprep.subr.bf16.mxu0 0
      %1420 = vmatpush1.bf16.msra.mxu0 0
      %1421 = vmatprep.subr.bf16.mxu0 0
      %1422 = vmatpush1.bf16.msra.mxu0 0
      %1423 = vmatprep.subr.bf16.mxu0 0
      %1424 = vmatpush1.bf16.msra.mxu0 0
      %1425 = vmatprep.mubr.bf16.mxu0 0
      %1426 = vmatmul.mubr.bf16.gmra.mrb[0].mxu0 %v1388
      %v1427 = vpop.f32.mrb[0].mxu0
      %v1428 = vadd.f32 0.0, %v1427
      %v1429 = vpop.f32.mrb[0].mxu0
      %v1430 = vpop.f32.mrb[0].mxu0
      %v1431 = vpop.f32.mrb[0].mxu0
      %1432 = vdwg.mxu0
      %1434 = vrot.lane.b32.xlu0 %v1332, 8
      %v1435 = vpop.permute.xlu0 %1434
      %1438 = vrot.lane.b32.xlu0 %v1380, 16
      %v1439 = vpop.permute.xlu0 %1438
      %1442 = vrot.lane.b32.xlu0 %v1428, 24
      %v1443 = vpop.permute.xlu0 %1442
      %v1445 = vsel %vm993, %v1284, %v1435
      %vm1446 = vcmask 130048
      %v1447 = vsel %vm1446, %v1445, %v1439
      %vm1448 = vcmask 195584
      %v1449 = vsel %vm1448, %v1447, %v1443
      %v1450 = vpack.c.bf16 %v1449, %v1449
      %v1452 = vlaneseq
      %v1453 = vshrl.u32 %v1452, 7
      %v1454 = vsub.s32 0, %v1453
      %v1455 = vrot.slane %v865, %v1454
      %v1461 = vunpack.c.l.b16 %v861
      %v1462 = vunpack.c.l.b16 %v862
      %v1463 = vunpack.c.l.b16 %v863
      %v1464 = vunpack.c.l.b16 %v864
      %v1465 = vpack.c.b16 %v1462, %v1461
      %v1466 = vpack.c.b16 %v1464, %v1463
      %v1470 = vsel %vm932, %v1450, 0
      %1472 = vmatprep.subr.bf16.mxu0 0
      %1473 = vmatpush1.bf16.msra.mxu0 %v1465
      %1474 = vmatprep.subr.bf16.mxu0 0
      %1475 = vmatpush1.bf16.msra.mxu0 %v1466
      %1476 = vmatprep.subr.bf16.mxu0 0
      %1477 = vmatpush1.bf16.msra.mxu0 0
      %1478 = vmatprep.subr.bf16.mxu0 0
      %1479 = vmatpush1.bf16.msra.mxu0 0
      %1480 = vmatprep.subr.bf16.mxu0 0
      %1481 = vmatpush1.bf16.msra.mxu0 0
      %1482 = vmatprep.subr.bf16.mxu0 0
      %1483 = vmatpush1.bf16.msra.mxu0 0
      %1484 = vmatprep.subr.bf16.mxu0 0
      %1485 = vmatpush1.bf16.msra.mxu0 0
      %1486 = vmatprep.subr.bf16.mxu0 0
      %1487 = vmatpush1.bf16.msra.mxu0 0
      %1488 = vmatprep.subr.bf16.mxu0 0
      %1489 = vmatpush1.bf16.msra.mxu0 0
      %1490 = vmatprep.subr.bf16.mxu0 0
      %1491 = vmatpush1.bf16.msra.mxu0 0
      %1492 = vmatprep.subr.bf16.mxu0 0
      %1493 = vmatpush1.bf16.msra.mxu0 0
      %1494 = vmatprep.subr.bf16.mxu0 0
      %1495 = vmatpush1.bf16.msra.mxu0 0
      %1496 = vmatprep.subr.bf16.mxu0 0
      %1497 = vmatpush1.bf16.msra.mxu0 0
      %1498 = vmatprep.subr.bf16.mxu0 0
      %1499 = vmatpush1.bf16.msra.mxu0 0
      %1500 = vmatprep.subr.bf16.mxu0 0
      %1501 = vmatpush1.bf16.msra.mxu0 0
      %1502 = vmatprep.subr.bf16.mxu0 0
      %1503 = vmatpush1.bf16.msra.mxu0 0
      %1504 = vmatprep.mubr.bf16.mxu0 0
      %1505 = vmatmul.mubr.bf16.gmra.mrb[0].mxu0 %v1470
      %v1506 = vpop.f32.mrb[0].mxu0
      %v1507 = vadd.f32 %v1455, %v1506
      %v1508 = vpop.f32.mrb[0].mxu0
      %v1509 = vpop.f32.mrb[0].mxu0
      %v1510 = vpop.f32.mrb[0].mxu0
      %1511 = vdwg.mxu0
      %v1512 = vadd.f32 %v854, %v1507
      %v1513 = vsel %vm890, %v1512, 0.0
      %1514 = vadd.xlane.f32.xlu0 %v1513
      %v1515 = vpop.xlane.xlu0 %1514
      %v1516 = vmul.f32 %v1515, %v894
      %v1517 = vsub.f32 %v1512, %v1516
      %v1518 = vmul.f32 %v1517, %v1517
      %v1519 = vsel %vm890, %v1518, 0.0
      %1520 = vadd.xlane.f32.xlu0 %v1519
      %v1521 = vpop.xlane.xlu0 %1520
      %v1522 = vmul.f32 %v1521, %v894
      %v1523 = vadd.f32 %v1522, 1e-05
      %v1524 = vrsqrt.pop %v1523
      %v1525 = vmul.f32 %v1517, %v1524
      %v1527 = vlaneseq
      %v1528 = vshrl.u32 %v1527, 7
      %v1529 = vsub.s32 0, %v1528
      %v1530 = vrot.slane %v866, %v1529
      %v1532 = vmul.f32 %v1525, %v1530
      %v1534 = vlaneseq
      %v1535 = vshrl.u32 %v1534, 7
      %v1536 = vsub.s32 0, %v1535
      %v1537 = vrot.slane %v867, %v1536
      %v1539 = vadd.f32 %v1532, %v1537
      %v1540 = vpack.c.bf16 %v1539, %v1539
      %v1542 = vlaneseq
      %v1543 = vshrl.u32 %v1542, 7
      %v1544 = vsub.s32 0, %v1543
      %v1545 = vrot.slane %v872, %v1544
      %v1551 = vunpack.c.l.b16 %v868
      %v1552 = vunpack.c.l.b16 %v869
      %v1553 = vunpack.c.l.b16 %v870
      %v1554 = vunpack.c.l.b16 %v871
      %v1555 = vpack.c.b16 %v1552, %v1551
      %v1556 = vpack.c.b16 %v1554, %v1553
      %v1560 = vsel %vm932, %v1540, 0
      %1562 = vmatprep.subr.bf16.mxu0 0
      %1563 = vmatpush1.bf16.msra.mxu0 %v1555
      %1564 = vmatprep.subr.bf16.mxu0 0
      %1565 = vmatpush1.bf16.msra.mxu0 %v1556
      %1566 = vmatprep.subr.bf16.mxu0 0
      %1567 = vmatpush1.bf16.msra.mxu0 0
      %1568 = vmatprep.subr.bf16.mxu0 0
      %1569 = vmatpush1.bf16.msra.mxu0 0
      %1570 = vmatprep.subr.bf16.mxu0 0
      %1571 = vmatpush1.bf16.msra.mxu0 0
      %1572 = vmatprep.subr.bf16.mxu0 0
      %1573 = vmatpush1.bf16.msra.mxu0 0
      %1574 = vmatprep.subr.bf16.mxu0 0
      %1575 = vmatpush1.bf16.msra.mxu0 0
      %1576 = vmatprep.subr.bf16.mxu0 0
      %1577 = vmatpush1.bf16.msra.mxu0 0
      %1578 = vmatprep.subr.bf16.mxu0 0
      %1579 = vmatpush1.bf16.msra.mxu0 0
      %1580 = vmatprep.subr.bf16.mxu0 0
      %1581 = vmatpush1.bf16.msra.mxu0 0
      %1582 = vmatprep.subr.bf16.mxu0 0
      %1583 = vmatpush1.bf16.msra.mxu0 0
      %1584 = vmatprep.subr.bf16.mxu0 0
      %1585 = vmatpush1.bf16.msra.mxu0 0
      %1586 = vmatprep.subr.bf16.mxu0 0
      %1587 = vmatpush1.bf16.msra.mxu0 0
      %1588 = vmatprep.subr.bf16.mxu0 0
      %1589 = vmatpush1.bf16.msra.mxu0 0
      %1590 = vmatprep.subr.bf16.mxu0 0
      %1591 = vmatpush1.bf16.msra.mxu0 0
      %1592 = vmatprep.subr.bf16.mxu0 0
      %1593 = vmatpush1.bf16.msra.mxu0 0
      %1594 = vmatprep.mubr.bf16.mxu0 0
      %1595 = vmatmul.mubr.bf16.gmra.mrb[0].mxu0 %v1560
      %v1596 = vpop.f32.mrb[0].mxu0
      %v1597 = vadd.f32 %v1545, %v1596
      %v1598 = vpop.f32.mrb[0].mxu0
      %v1599 = vpop.f32.mrb[0].mxu0
      %v1600 = vpop.f32.mrb[0].mxu0
      %1601 = vdwg.mxu0
      %v1602 = vmul.f32 %v1597, %v1597
      %v1603 = vmul.f32 %v1597, %v1602
      %v1604 = vmul.f32 %v1603, 0.044715
      %v1605 = vadd.f32 %v1597, %v1604
      %v1606 = vmul.f32 %v1605, 0.7978846
      %v1607 = vtanh.pop %v1606
      %v1608 = vadd.f32 %v1607, 1.0
      %v1609 = vmul.f32 %v1608, 0.5
      %v1610 = vmul.f32 %v1597, %v1609
      %v1611 = vpack.c.bf16 %v1610, %v1610
      %v1613 = vlaneseq
      %v1614 = vshrl.u32 %v1613, 7
      %v1615 = vsub.s32 0, %v1614
      %v1616 = vrot.slane %v889, %v1615
      %v1634 = vunpack.c.l.b16 %v873
      %v1635 = vunpack.c.l.b16 %v874
      %v1636 = vunpack.c.l.b16 %v875
      %v1637 = vunpack.c.l.b16 %v876
      %v1638 = vunpack.c.l.b16 %v877
      %v1639 = vunpack.c.l.b16 %v878
      %v1640 = vunpack.c.l.b16 %v879
      %v1641 = vunpack.c.l.b16 %v880
      %v1642 = vunpack.c.l.b16 %v881
      %v1643 = vunpack.c.l.b16 %v882
      %v1644 = vunpack.c.l.b16 %v883
      %v1645 = vunpack.c.l.b16 %v884
      %v1646 = vunpack.c.l.b16 %v885
      %v1647 = vunpack.c.l.b16 %v886
      %v1648 = vunpack.c.l.b16 %v887
      %v1649 = vunpack.c.l.b16 %v888
      %v1650 = vpack.c.b16 %v1635, %v1634
      %v1651 = vpack.c.b16 %v1637, %v1636
      %v1652 = vpack.c.b16 %v1639, %v1638
      %v1653 = vpack.c.b16 %v1641, %v1640
      %v1654 = vpack.c.b16 %v1643, %v1642
      %v1655 = vpack.c.b16 %v1645, %v1644
      %v1656 = vpack.c.b16 %v1647, %v1646
      %v1657 = vpack.c.b16 %v1649, %v1648
      %1666 = vmatprep.subr.bf16.mxu0 0
      %1667 = vmatpush1.bf16.msra.mxu0 %v1650
      %1668 = vmatprep.subr.bf16.mxu0 0
      %1669 = vmatpush1.bf16.msra.mxu0 %v1651
      %1670 = vmatprep.subr.bf16.mxu0 0
      %1671 = vmatpush1.bf16.msra.mxu0 %v1652
      %1672 = vmatprep.subr.bf16.mxu0 0
      %1673 = vmatpush1.bf16.msra.mxu0 %v1653
      %1674 = vmatprep.subr.bf16.mxu0 0
      %1675 = vmatpush1.bf16.msra.mxu0 %v1654
      %1676 = vmatprep.subr.bf16.mxu0 0
      %1677 = vmatpush1.bf16.msra.mxu0 %v1655
      %1678 = vmatprep.subr.bf16.mxu0 0
      %1679 = vmatpush1.bf16.msra.mxu0 %v1656
      %1680 = vmatprep.subr.bf16.mxu0 0
      %1681 = vmatpush1.bf16.msra.mxu0 %v1657
      %1682 = vmatprep.subr.bf16.mxu0 0
      %1683 = vmatpush1.bf16.msra.mxu0 0
      %1684 = vmatprep.subr.bf16.mxu0 0
      %1685 = vmatpush1.bf16.msra.mxu0 0
      %1686 = vmatprep.subr.bf16.mxu0 0
      %1687 = vmatpush1.bf16.msra.mxu0 0
      %1688 = vmatprep.subr.bf16.mxu0 0
      %1689 = vmatpush1.bf16.msra.mxu0 0
      %1690 = vmatprep.subr.bf16.mxu0 0
      %1691 = vmatpush1.bf16.msra.mxu0 0
      %1692 = vmatprep.subr.bf16.mxu0 0
      %1693 = vmatpush1.bf16.msra.mxu0 0
      %1694 = vmatprep.subr.bf16.mxu0 0
      %1695 = vmatpush1.bf16.msra.mxu0 0
      %1696 = vmatprep.subr.bf16.mxu0 0
      %1697 = vmatpush1.bf16.msra.mxu0 0
      %1698 = vmatprep.mubr.bf16.mxu0 0
      %1699 = vmatmul.mubr.bf16.gmra.mrb[0].mxu0 %v1611
      %v1700 = vpop.f32.mrb[0].mxu0
      %v1701 = vadd.f32 %v1616, %v1700
      %v1702 = vpop.f32.mrb[0].mxu0
      %v1703 = vpop.f32.mrb[0].mxu0
      %v1704 = vpop.f32.mrb[0].mxu0
      %1705 = vdwg.mxu0
      %v1706 = vadd.f32 %v1512, %v1701
      %1707 = vst.msk [vmem:[%s777] sm:$0x1f] %vm890, %v1706
      %p1708 = scmp.eq.s32.totalorder %s34, 1
      // Predicated region
      $region97: #{run.2} parent=91 // pred_check
        %p1709 = pneg %p1708
      $region98: #{run.2} parent=91 // pred_check_branch
        %1711 = sbr.rel (%p1709) target = $region100
      $region99: #{run.2} parent=91 // pred_region
        %v1712 = vld [vmem:[%s5] sm:$0x1]
        %v1713 = vld [vmem:[%s6] sm:$0x1]
        %v1714 = vsel %vm890, %v1706, 0.0
        %1715 = vadd.xlane.f32.xlu0 %v1714
        %v1716 = vpop.xlane.xlu0 %1715
        %v1717 = vmul.f32 %v1716, %v894
        %v1718 = vsub.f32 %v1706, %v1717
        %v1719 = vmul.f32 %v1718, %v1718
        %v1720 = vsel %vm890, %v1719, 0.0
        %1721 = vadd.xlane.f32.xlu0 %v1720
        %v1722 = vpop.xlane.xlu0 %1721
        %v1723 = vmul.f32 %v1722, %v894
        %v1724 = vadd.f32 %v1723, 1e-05
        %v1725 = vrsqrt.pop %v1724
        %v1726 = vmul.f32 %v1718, %v1725
        %v1728 = vlaneseq
        %v1729 = vshrl.u32 %v1728, 7
        %v1730 = vsub.s32 0, %v1729
        %v1731 = vrot.slane %v1712, %v1730
        %v1733 = vmul.f32 %v1726, %v1731
        %v1735 = vlaneseq
        %v1736 = vshrl.u32 %v1735, 7
        %v1737 = vsub.s32 0, %v1736
        %v1738 = vrot.slane %v1713, %v1737
        %v1740 = vadd.f32 %v1733, %v1738
        %1741 = vst.msk [vmem:[%s777] sm:$0x1f] %vm890, %v1740
      $region100: #{run.2} parent=91 // pred_fallthru
        _
      %p1742 = scmp.lt.s32.totalorder %s33, 1
      %s1743 = scalar_select %p1742, %s33, 1
      %s1744 = smul.addr %s1743, 8
      %s1745 = scalar_lea.vmem %s18, %s1744
      // Predicated region
      $region101: #{run.2} parent=91 // pred_check
        %p1746 = pneg %p502
      $region102: #{run.2} parent=91 // pred_check_branch
        %1748 = sbr.rel (%p1746) target = $region104
      $region103: #{run.2} parent=91 // pred_region
        _
      $region104: #{run.2} parent=91 // pred_fallthru
        _
    $region92: #{run.2} parent=5 // pred_fallthru
      _
    %p1749 = scmp.le.s32.totalorder 2, %s24
    // Predicated region
    $region105: #{run.2} parent=5 // pred_check
      %p1750 = pneg %p1749
    $region106: #{run.2} parent=5 // pred_check_branch
      %1752 = sbr.rel (%p1750) target = $region108
    $region107: #{run.2} parent=5 // pred_region
      %s1753 = ssub.s32 %s24, 2
      // Predicated region
      $region109: #{run.2} parent=107 // pred_check
        %p1754 = pneg %p508
      $region110: #{run.2} parent=107 // pred_check_branch
        %1756 = sbr.rel (%p1754) target = $region112
      $region111: #{run.2} parent=107 // pred_region
        %p1757 = scmp.lt.s32.totalorder %s35, 1
        %s1758 = scalar_select %p1757, %s35, 1
        %s1759 = smul.addr %s1758, 8
        %s1760 = scalar_lea.vmem %s18, %s1759
      $region112: #{run.2} parent=107 // pred_fallthru
        _
    $region108: #{run.2} parent=5 // pred_fallthru
      _
  $region6: #{run.2} parent=0 // loop_footer
    %s28 = sadd.s32 1, %s24
  $region7: #{run.2} parent=0 // loop_footer_branch
    %23 = sbr.rel target = $region3
  $region8: #{run.2} parent=0 // loop_exit
    _

// kernel: run.3
$region0: #{run.3}
  #allocation0 [shape = 'u32[]', space=smem, size = 0x4, offset = 0x4, fixed_abs, tag = 'smem constant byte address 0x4 - core index']
  #allocation1 [shape = 'u32[144,128]{1,0:T(1,128)}', space=vmem, size = 0x12000, scoped, tag = 'internal scratch']
  #allocation2 [shape = 'f32[1,17,32]{2,1,0:T(8,128)}', space=vmem, size = 0x3000, scoped, tag = 'scratch operand']
  %s0 = inlined_call_operand.vmem [shape: f32[2,17,32], index: 0, kind: input, shape index: {}]
  %s1 = inlined_call_operand.vmem [shape: f32[1,17,32], index: 1, kind: input, shape index: {}]
  %s2 = inlined_call_operand.vmem [shape: bf16[32,10], index: 2, kind: input, shape index: {}]
  %s3 = inlined_call_operand.vmem [shape: f32[1,10], index: 3, kind: input, shape index: {}]
  %s4 = inlined_call_operand.vmem [shape: f32[2,1,32], index: 4, kind: input, shape index: {}]
  %s5 = inlined_call_operand.vmem [shape: f32[2,1,32], index: 5, kind: input, shape index: {}]
  %s6 = inlined_call_operand.vmem [shape: bf16[2,32,96], index: 6, kind: input, shape index: {}]
  %s7 = inlined_call_operand.vmem [shape: bf16[2,32,32], index: 7, kind: input, shape index: {}]
  %s8 = inlined_call_operand.vmem [shape: f32[2,1,32], index: 8, kind: input, shape index: {}]
  %s9 = inlined_call_operand.vmem [shape: f32[2,1,32], index: 9, kind: input, shape index: {}]
  %s10 = inlined_call_operand.vmem [shape: f32[2,1,32], index: 10, kind: input, shape index: {}]
  %s11 = inlined_call_operand.vmem [shape: bf16[2,32,128], index: 11, kind: input, shape index: {}]
  %s12 = inlined_call_operand.vmem [shape: f32[2,1,128], index: 12, kind: input, shape index: {}]
  %s13 = inlined_call_operand.vmem [shape: bf16[2,128,32], index: 13, kind: input, shape index: {}]
  %s14 = inlined_call_operand.vmem [shape: f32[2,1,32], index: 14, kind: input, shape index: {}]
  %s15 = inlined_call_operand.vmem [shape: f32[2,16,10], index: 15, kind: output, shape index: {}]
  %s16 = sld [smem:[#allocation0]]
  $region101: #{run.3} parent=0
    _
  %s18 = ssub.s32 1, %s16
  %s19 = scalar_select 0, %s18, %s16
  loop: start=0, step=1, limit=6
  $region2: #{run.3} parent=0 // loop_pre_header
    _
  $region3: #{run.3} parent=0 // loop_header
    %s21 = sphi 0, %s25
    %p22 = scmp.ge.s32.totalorder %s21, 6
    %s28 = sphi 0, %s40
    %s29 = sphi 0, %s36
    %s30 = sphi 0, %s28
    %s31 = sphi 0, %s29
    %s32 = sphi 0, %s30
    %s33 = sphi 0, %s31
    %s43 = sphi 0, %s45
    %s46 = sphi 0, %s43
    %s47 = sphi 0, %s46
    %s63 = sphi 0, %s47
    %s67 = sphi 0, %s67
    %s69 = sphi 0, %s67
    %s70 = sphi 0, %s69
    %s84 = sphi 0, %s70
    %s88 = sphi 0, %s88
    %s90 = sphi 0, %s88
    %s91 = sphi 0, %s90
    %s105 = sphi 0, %s91
    %s109 = sphi 0, %s109
    %s111 = sphi 0, %s109
    %s112 = sphi 0, %s111
    %s126 = sphi 0, %s112
    %s132 = sphi 0, %s134
    %s135 = sphi 0, %s132
    %s136 = sphi 0, %s135
    %s152 = sphi 0, %s136
    %s158 = sphi 0, %s160
    %s161 = sphi 0, %s158
    %s162 = sphi 0, %s161
    %s178 = sphi 0, %s162
    %s184 = sphi 0, %s186
    %s187 = sphi 0, %s184
    %s188 = sphi 0, %s187
    %s204 = sphi 0, %s188
    %s210 = sphi 0, %s212
    %s213 = sphi 0, %s210
    %s214 = sphi 0, %s213
    %s230 = sphi 0, %s214
    %s236 = sphi 0, %s238
    %s239 = sphi 0, %s236
    %s240 = sphi 0, %s239
    %s256 = sphi 0, %s240
    %s262 = sphi 0, %s264
    %s265 = sphi 0, %s262
    %s266 = sphi 0, %s265
    %s282 = sphi 0, %s266
    %s288 = sphi 0, %s290
    %s291 = sphi 0, %s288
    %s292 = sphi 0, %s291
    %s308 = sphi 0, %s292
    %s314 = sphi 0, %s316
    %s317 = sphi 0, %s314
    %s318 = sphi 0, %s317
    %s334 = sphi 0, %s318
    %s340 = sphi 0, %s342
    %s343 = sphi 0, %s340
    %s344 = sphi 0, %s343
    %s360 = sphi 0, %s344
    %s366 = sphi 0, %s368
    %s369 = sphi 0, %s366
    %s370 = sphi 0, %s369
    %s386 = sphi 0, %s370
    %s392 = sphi 0, %s394
    %s395 = sphi 0, %s392
    %s396 = sphi 0, %s395
    %s412 = sphi 0, %s396
    %s418 = sphi 0, %s420
    %s421 = sphi 0, %s418
    %s422 = sphi 0, %s421
    %s438 = sphi 0, %s422
  $region4: #{run.3} parent=0 // loop_header_branch
    %24 = sbr.rel (%p22) target = $region8
  $region5: #{run.3} parent=0 // loop_body
    %s26 = ssub.s32 %s21, 1
    %s27 = ssub.s32 %s21, 2
    %s34 = sadd.s32 1, %s29
    %p35 = scmp.ge.s32.totalorder %s34, 2
    %s36 = scalar_select %p35, 0, %s34
    %s37 = sadd.s32 1, %s28
    %s38 = scalar_select %p35, %s37, %s28
    %p39 = scmp.ge.s32.totalorder %s38, 2
    %s40 = scalar_select %p39, 0, %s38
    %s41 = ssub.s32 %s28, %s40
    %p42 = scmp.eq.s32.totalorder %s41, 0
    %s44 = sadd.s32 %s43, 1
    %s45 = scalar_select %p42, %s43, %s44
    %p48 = pneg %p42
    %p49 = scmp.eq.s32.totalorder %s21, 3
    %p50 = por %p48, %p49
    %p51 = scmp.ne.s32.totalorder %s43, %s46
    %p52 = scmp.eq.s32.totalorder %s21, 0
    %p53 = por %p51, %p52
    %p54 = scmp.ne.s32.totalorder %s43, %s46
    %p55 = scmp.eq.s32.totalorder %s26, 3
    %p56 = por %p54, %p55
    %p57 = scmp.ne.s32.totalorder %s46, %s47
    %p58 = scmp.eq.s32.totalorder %s26, 0
    %p59 = por %p57, %p58
    %p60 = scmp.ne.s32.totalorder %s46, %s47
    %p61 = scmp.eq.s32.totalorder %s27, 3
    %p62 = por %p60, %p61
    %p64 = scmp.ne.s32.totalorder %s47, %s63
    %p65 = scmp.eq.s32.totalorder %s27, 0
    %p66 = por %p64, %p65
    %s68 = sadd.s32 %s67, 1
    %p71 = scmp.eq.s32.totalorder %s21, 3
    %p72 = scmp.ne.s32.totalorder %s67, %s69
    %p73 = scmp.eq.s32.totalorder %s21, 0
    %p74 = por %p72, %p73
    %p75 = scmp.ne.s32.totalorder %s67, %s69
    %p76 = scmp.eq.s32.totalorder %s26, 3
    %p77 = por %p75, %p76
    %p78 = scmp.ne.s32.totalorder %s69, %s70
    %p79 = scmp.eq.s32.totalorder %s26, 0
    %p80 = por %p78, %p79
    %p81 = scmp.ne.s32.totalorder %s69, %s70
    %p82 = scmp.eq.s32.totalorder %s27, 3
    %p83 = por %p81, %p82
    %p85 = scmp.ne.s32.totalorder %s70, %s84
    %p86 = scmp.eq.s32.totalorder %s27, 0
    %p87 = por %p85, %p86
    %s89 = sadd.s32 %s88, 1
    %p92 = scmp.eq.s32.totalorder %s21, 3
    %p93 = scmp.ne.s32.totalorder %s88, %s90
    %p94 = scmp.eq.s32.totalorder %s21, 0
    %p95 = por %p93, %p94
    %p96 = scmp.ne.s32.totalorder %s88, %s90
    %p97 = scmp.eq.s32.totalorder %s26, 3
    %p98 = por %p96, %p97
    %p99 = scmp.ne.s32.totalorder %s90, %s91
    %p100 = scmp.eq.s32.totalorder %s26, 0
    %p101 = por %p99, %p100
    %p102 = scmp.ne.s32.totalorder %s90, %s91
    %p103 = scmp.eq.s32.totalorder %s27, 3
    %p104 = por %p102, %p103
    %p106 = scmp.ne.s32.totalorder %s91, %s105
    %p107 = scmp.eq.s32.totalorder %s27, 0
    %p108 = por %p106, %p107
    %s110 = sadd.s32 %s109, 1
    %p113 = scmp.eq.s32.totalorder %s21, 3
    %p114 = scmp.ne.s32.totalorder %s109, %s111
    %p115 = scmp.eq.s32.totalorder %s21, 0
    %p116 = por %p114, %p115
    %p117 = scmp.ne.s32.totalorder %s109, %s111
    %p118 = scmp.eq.s32.totalorder %s26, 3
    %p119 = por %p117, %p118
    %p120 = scmp.ne.s32.totalorder %s111, %s112
    %p121 = scmp.eq.s32.totalorder %s26, 0
    %p122 = por %p120, %p121
    %p123 = scmp.ne.s32.totalorder %s111, %s112
    %p124 = scmp.eq.s32.totalorder %s27, 3
    %p125 = por %p123, %p124
    %p127 = scmp.ne.s32.totalorder %s112, %s126
    %p128 = scmp.eq.s32.totalorder %s27, 0
    %p129 = por %p127, %p128
    %s130 = ssub.s32 %s29, %s36
    %p131 = scmp.eq.s32.totalorder %s130, 0
    %s133 = sadd.s32 %s132, 1
    %s134 = scalar_select %p131, %s132, %s133
    %p137 = pneg %p131
    %p138 = scmp.eq.s32.totalorder %s21, 3
    %p139 = por %p137, %p138
    %p140 = scmp.ne.s32.totalorder %s132, %s135
    %p141 = scmp.eq.s32.totalorder %s21, 0
    %p142 = por %p140, %p141
    %p143 = scmp.ne.s32.totalorder %s132, %s135
    %p144 = scmp.eq.s32.totalorder %s26, 3
    %p145 = por %p143, %p144
    %p146 = scmp.ne.s32.totalorder %s135, %s136
    %p147 = scmp.eq.s32.totalorder %s26, 0
    %p148 = por %p146, %p147
    %p149 = scmp.ne.s32.totalorder %s135, %s136
    %p150 = scmp.eq.s32.totalorder %s27, 3
    %p151 = por %p149, %p150
    %p153 = scmp.ne.s32.totalorder %s136, %s152
    %p154 = scmp.eq.s32.totalorder %s27, 0
    %p155 = por %p153, %p154
    %s156 = ssub.s32 %s29, %s36
    %p157 = scmp.eq.s32.totalorder %s156, 0
    %s159 = sadd.s32 %s158, 1
    %s160 = scalar_select %p157, %s158, %s159
    %p163 = pneg %p157
    %p164 = scmp.eq.s32.totalorder %s21, 3
    %p165 = por %p163, %p164
    %p166 = scmp.ne.s32.totalorder %s158, %s161
    %p167 = scmp.eq.s32.totalorder %s21, 0
    %p168 = por %p166, %p167
    %p169 = scmp.ne.s32.totalorder %s158, %s161
    %p170 = scmp.eq.s32.totalorder %s26, 3
    %p171 = por %p169, %p170
    %p172 = scmp.ne.s32.totalorder %s161, %s162
    %p173 = scmp.eq.s32.totalorder %s26, 0
    %p174 = por %p172, %p173
    %p175 = scmp.ne.s32.totalorder %s161, %s162
    %p176 = scmp.eq.s32.totalorder %s27, 3
    %p177 = por %p175, %p176
    %p179 = scmp.ne.s32.totalorder %s162, %s178
    %p180 = scmp.eq.s32.totalorder %s27, 0
    %p181 = por %p179, %p180
    %s182 = ssub.s32 %s29, %s36
    %p183 = scmp.eq.s32.totalorder %s182, 0
    %s185 = sadd.s32 %s184, 1
    %s186 = scalar_select %p183, %s184, %s185
    %p189 = pneg %p183
    %p190 = scmp.eq.s32.totalorder %s21, 3
    %p191 = por %p189, %p190
    %p192 = scmp.ne.s32.totalorder %s184, %s187
    %p193 = scmp.eq.s32.totalorder %s21, 0
    %p194 = por %p192, %p193
    %p195 = scmp.ne.s32.totalorder %s184, %s187
    %p196 = scmp.eq.s32.totalorder %s26, 3
    %p197 = por %p195, %p196
    %p198 = scmp.ne.s32.totalorder %s187, %s188
    %p199 = scmp.eq.s32.totalorder %s26, 0
    %p200 = por %p198, %p199
    %p201 = scmp.ne.s32.totalorder %s187, %s188
    %p202 = scmp.eq.s32.totalorder %s27, 3
    %p203 = por %p201, %p202
    %p205 = scmp.ne.s32.totalorder %s188, %s204
    %p206 = scmp.eq.s32.totalorder %s27, 0
    %p207 = por %p205, %p206
    %s208 = ssub.s32 %s29, %s36
    %p209 = scmp.eq.s32.totalorder %s208, 0
    %s211 = sadd.s32 %s210, 1
    %s212 = scalar_select %p209, %s210, %s211
    %p215 = pneg %p209
    %p216 = scmp.eq.s32.totalorder %s21, 3
    %p217 = por %p215, %p216
    %p218 = scmp.ne.s32.totalorder %s210, %s213
    %p219 = scmp.eq.s32.totalorder %s21, 0
    %p220 = por %p218, %p219
    %p221 = scmp.ne.s32.totalorder %s210, %s213
    %p222 = scmp.eq.s32.totalorder %s26, 3
    %p223 = por %p221, %p222
    %p224 = scmp.ne.s32.totalorder %s213, %s214
    %p225 = scmp.eq.s32.totalorder %s26, 0
    %p226 = por %p224, %p225
    %p227 = scmp.ne.s32.totalorder %s213, %s214
    %p228 = scmp.eq.s32.totalorder %s27, 3
    %p229 = por %p227, %p228
    %p231 = scmp.ne.s32.totalorder %s214, %s230
    %p232 = scmp.eq.s32.totalorder %s27, 0
    %p233 = por %p231, %p232
    %s234 = ssub.s32 %s29, %s36
    %p235 = scmp.eq.s32.totalorder %s234, 0
    %s237 = sadd.s32 %s236, 1
    %s238 = scalar_select %p235, %s236, %s237
    %p241 = pneg %p235
    %p242 = scmp.eq.s32.totalorder %s21, 3
    %p243 = por %p241, %p242
    %p244 = scmp.ne.s32.totalorder %s236, %s239
    %p245 = scmp.eq.s32.totalorder %s21, 0
    %p246 = por %p244, %p245
    %p247 = scmp.ne.s32.totalorder %s236, %s239
    %p248 = scmp.eq.s32.totalorder %s26, 3
    %p249 = por %p247, %p248
    %p250 = scmp.ne.s32.totalorder %s239, %s240
    %p251 = scmp.eq.s32.totalorder %s26, 0
    %p252 = por %p250, %p251
    %p253 = scmp.ne.s32.totalorder %s239, %s240
    %p254 = scmp.eq.s32.totalorder %s27, 3
    %p255 = por %p253, %p254
    %p257 = scmp.ne.s32.totalorder %s240, %s256
    %p258 = scmp.eq.s32.totalorder %s27, 0
    %p259 = por %p257, %p258
    %s260 = ssub.s32 %s29, %s36
    %p261 = scmp.eq.s32.totalorder %s260, 0
    %s263 = sadd.s32 %s262, 1
    %s264 = scalar_select %p261, %s262, %s263
    %p267 = pneg %p261
    %p268 = scmp.eq.s32.totalorder %s21, 3
    %p269 = por %p267, %p268
    %p270 = scmp.ne.s32.totalorder %s262, %s265
    %p271 = scmp.eq.s32.totalorder %s21, 0
    %p272 = por %p270, %p271
    %p273 = scmp.ne.s32.totalorder %s262, %s265
    %p274 = scmp.eq.s32.totalorder %s26, 3
    %p275 = por %p273, %p274
    %p276 = scmp.ne.s32.totalorder %s265, %s266
    %p277 = scmp.eq.s32.totalorder %s26, 0
    %p278 = por %p276, %p277
    %p279 = scmp.ne.s32.totalorder %s265, %s266
    %p280 = scmp.eq.s32.totalorder %s27, 3
    %p281 = por %p279, %p280
    %p283 = scmp.ne.s32.totalorder %s266, %s282
    %p284 = scmp.eq.s32.totalorder %s27, 0
    %p285 = por %p283, %p284
    %s286 = ssub.s32 %s29, %s36
    %p287 = scmp.eq.s32.totalorder %s286, 0
    %s289 = sadd.s32 %s288, 1
    %s290 = scalar_select %p287, %s288, %s289
    %p293 = pneg %p287
    %p294 = scmp.eq.s32.totalorder %s21, 3
    %p295 = por %p293, %p294
    %p296 = scmp.ne.s32.totalorder %s288, %s291
    %p297 = scmp.eq.s32.totalorder %s21, 0
    %p298 = por %p296, %p297
    %p299 = scmp.ne.s32.totalorder %s288, %s291
    %p300 = scmp.eq.s32.totalorder %s26, 3
    %p301 = por %p299, %p300
    %p302 = scmp.ne.s32.totalorder %s291, %s292
    %p303 = scmp.eq.s32.totalorder %s26, 0
    %p304 = por %p302, %p303
    %p305 = scmp.ne.s32.totalorder %s291, %s292
    %p306 = scmp.eq.s32.totalorder %s27, 3
    %p307 = por %p305, %p306
    %p309 = scmp.ne.s32.totalorder %s292, %s308
    %p310 = scmp.eq.s32.totalorder %s27, 0
    %p311 = por %p309, %p310
    %s312 = ssub.s32 %s29, %s36
    %p313 = scmp.eq.s32.totalorder %s312, 0
    %s315 = sadd.s32 %s314, 1
    %s316 = scalar_select %p313, %s314, %s315
    %p319 = pneg %p313
    %p320 = scmp.eq.s32.totalorder %s21, 3
    %p321 = por %p319, %p320
    %p322 = scmp.ne.s32.totalorder %s314, %s317
    %p323 = scmp.eq.s32.totalorder %s21, 0
    %p324 = por %p322, %p323
    %p325 = scmp.ne.s32.totalorder %s314, %s317
    %p326 = scmp.eq.s32.totalorder %s26, 3
    %p327 = por %p325, %p326
    %p328 = scmp.ne.s32.totalorder %s317, %s318
    %p329 = scmp.eq.s32.totalorder %s26, 0
    %p330 = por %p328, %p329
    %p331 = scmp.ne.s32.totalorder %s317, %s318
    %p332 = scmp.eq.s32.totalorder %s27, 3
    %p333 = por %p331, %p332
    %p335 = scmp.ne.s32.totalorder %s318, %s334
    %p336 = scmp.eq.s32.totalorder %s27, 0
    %p337 = por %p335, %p336
    %s338 = ssub.s32 %s29, %s36
    %p339 = scmp.eq.s32.totalorder %s338, 0
    %s341 = sadd.s32 %s340, 1
    %s342 = scalar_select %p339, %s340, %s341
    %p345 = pneg %p339
    %p346 = scmp.eq.s32.totalorder %s21, 3
    %p347 = por %p345, %p346
    %p348 = scmp.ne.s32.totalorder %s340, %s343
    %p349 = scmp.eq.s32.totalorder %s21, 0
    %p350 = por %p348, %p349
    %p351 = scmp.ne.s32.totalorder %s340, %s343
    %p352 = scmp.eq.s32.totalorder %s26, 3
    %p353 = por %p351, %p352
    %p354 = scmp.ne.s32.totalorder %s343, %s344
    %p355 = scmp.eq.s32.totalorder %s26, 0
    %p356 = por %p354, %p355
    %p357 = scmp.ne.s32.totalorder %s343, %s344
    %p358 = scmp.eq.s32.totalorder %s27, 3
    %p359 = por %p357, %p358
    %p361 = scmp.ne.s32.totalorder %s344, %s360
    %p362 = scmp.eq.s32.totalorder %s27, 0
    %p363 = por %p361, %p362
    %s364 = ssub.s32 %s29, %s36
    %p365 = scmp.eq.s32.totalorder %s364, 0
    %s367 = sadd.s32 %s366, 1
    %s368 = scalar_select %p365, %s366, %s367
    %p371 = pneg %p365
    %p372 = scmp.eq.s32.totalorder %s21, 3
    %p373 = por %p371, %p372
    %p374 = scmp.ne.s32.totalorder %s366, %s369
    %p375 = scmp.eq.s32.totalorder %s21, 0
    %p376 = por %p374, %p375
    %p377 = scmp.ne.s32.totalorder %s366, %s369
    %p378 = scmp.eq.s32.totalorder %s26, 3
    %p379 = por %p377, %p378
    %p380 = scmp.ne.s32.totalorder %s369, %s370
    %p381 = scmp.eq.s32.totalorder %s26, 0
    %p382 = por %p380, %p381
    %p383 = scmp.ne.s32.totalorder %s369, %s370
    %p384 = scmp.eq.s32.totalorder %s27, 3
    %p385 = por %p383, %p384
    %p387 = scmp.ne.s32.totalorder %s370, %s386
    %p388 = scmp.eq.s32.totalorder %s27, 0
    %p389 = por %p387, %p388
    %s390 = ssub.s32 %s29, %s36
    %p391 = scmp.eq.s32.totalorder %s390, 0
    %s393 = sadd.s32 %s392, 1
    %s394 = scalar_select %p391, %s392, %s393
    %p397 = pneg %p391
    %p398 = scmp.eq.s32.totalorder %s21, 3
    %p399 = por %p397, %p398
    %p400 = scmp.ne.s32.totalorder %s392, %s395
    %p401 = scmp.eq.s32.totalorder %s21, 0
    %p402 = por %p400, %p401
    %p403 = scmp.ne.s32.totalorder %s392, %s395
    %p404 = scmp.eq.s32.totalorder %s26, 3
    %p405 = por %p403, %p404
    %p406 = scmp.ne.s32.totalorder %s395, %s396
    %p407 = scmp.eq.s32.totalorder %s26, 0
    %p408 = por %p406, %p407
    %p409 = scmp.ne.s32.totalorder %s395, %s396
    %p410 = scmp.eq.s32.totalorder %s27, 3
    %p411 = por %p409, %p410
    %p413 = scmp.ne.s32.totalorder %s396, %s412
    %p414 = scmp.eq.s32.totalorder %s27, 0
    %p415 = por %p413, %p414
    %s416 = ssub.s32 %s28, %s40
    %p417 = scmp.eq.s32.totalorder %s416, 0
    %s419 = sadd.s32 %s418, 1
    %s420 = scalar_select %p417, %s418, %s419
    %p423 = pneg %p417
    %p424 = scmp.eq.s32.totalorder %s21, 3
    %p425 = por %p423, %p424
    %p426 = scmp.ne.s32.totalorder %s418, %s421
    %p427 = scmp.eq.s32.totalorder %s21, 0
    %p428 = por %p426, %p427
    %p429 = scmp.ne.s32.totalorder %s418, %s421
    %p430 = scmp.eq.s32.totalorder %s26, 3
    %p431 = por %p429, %p430
    %p432 = scmp.ne.s32.totalorder %s421, %s422
    %p433 = scmp.eq.s32.totalorder %s26, 0
    %p434 = por %p432, %p433
    %p435 = scmp.ne.s32.totalorder %s421, %s422
    %p436 = scmp.eq.s32.totalorder %s27, 3
    %p437 = por %p435, %p436
    %p439 = scmp.ne.s32.totalorder %s422, %s438
    %p440 = scmp.eq.s32.totalorder %s27, 0
    %p441 = por %p439, %p440
    %p442 = scmp.le.s32.totalorder 1, %s21
    %p443 = scmp.lt.s32.totalorder %s21, 5
    %p444 = pnand %p442, %p443
    %p445 = pneg %p444
    // Predicated region
    $region9: #{run.3} parent=5 // pred_check
      _
    $region10: #{run.3} parent=5 // pred_check_branch
      %447 = sbr.rel (%p444) target = $region12
    $region11: #{run.3} parent=5 // pred_region
      %s448 = ssub.s32 %s21, 1
      // Predicated region
      $region13: #{run.3} parent=11 // pred_check
        %p449 = pneg %p80
      $region14: #{run.3} parent=11 // pred_check_branch
        %451 = sbr.rel (%p449) target = $region16
      $region15: #{run.3} parent=11 // pred_region
        _
      $region16: #{run.3} parent=11 // pred_fallthru
        _
      // Predicated region
      $region17: #{run.3} parent=11 // pred_check
        %p452 = pneg %p101
      $region18: #{run.3} parent=11 // pred_check_branch
        %454 = sbr.rel (%p452) target = $region20
      $region19: #{run.3} parent=11 // pred_region
        _
      $region20: #{run.3} parent=11 // pred_fallthru
        _
      // Predicated region
      $region21: #{run.3} parent=11 // pred_check
        %p455 = pneg %p122
      $region22: #{run.3} parent=11 // pred_check_branch
        %457 = sbr.rel (%p455) target = $region24
      $region23: #{run.3} parent=11 // pred_region
        _
      $region24: #{run.3} parent=11 // pred_fallthru
        _
    $region12: #{run.3} parent=5 // pred_fallthru
      _
    %p458 = scmp.lt.s32.totalorder %s21, 4
    // Predicated region
    $region25: #{run.3} parent=5 // pred_check
      %p459 = pneg %p458
    $region26: #{run.3} parent=5 // pred_check_branch
      %461 = sbr.rel (%p459) target = $region28
    $region27: #{run.3} parent=5 // pred_region
      // Predicated region
      $region29: #{run.3} parent=27 // pred_check
        %p462 = pneg %p53
      $region30: #{run.3} parent=27 // pred_check_branch
        %464 = sbr.rel (%p462) target = $region32
      $region31: #{run.3} parent=27 // pred_region
        %p465 = scmp.lt.s32.totalorder %s28, 1
        %s466 = scalar_select %p465, %s28, 1
        %s467 = smul.addr %s466, 3
        %s468 = smul.addr %s467, 8
        %s469 = scalar_lea.vmem %s0, %s468
      $region32: #{run.3} parent=27 // pred_fallthru
        _
      // Predicated region
      $region33: #{run.3} parent=27 // pred_check
        %p470 = pneg %p142
      $region34: #{run.3} parent=27 // pred_check_branch
        %472 = sbr.rel (%p470) target = $region36
      $region35: #{run.3} parent=27 // pred_region
        %p473 = scmp.lt.s32.totalorder %s29, 1
        %s474 = scalar_select %p473, %s29, 1
        %s475 = scalar_lea.vmem %s4, %s474
      $region36: #{run.3} parent=27 // pred_fallthru
        _
      // Predicated region
      $region37: #{run.3} parent=27 // pred_check
        %p476 = pneg %p168
      $region38: #{run.3} parent=27 // pred_check_branch
        %478 = sbr.rel (%p476) target = $region40
      $region39: #{run.3} parent=27 // pred_region
        %p479 = scmp.lt.s32.totalorder %s29, 1
        %s480 = scalar_select %p479, %s29, 1
        %s481 = scalar_lea.vmem %s5, %s480
      $region40: #{run.3} parent=27 // pred_fallthru
        _
      // Predicated region
      $region41: #{run.3} parent=27 // pred_check
        %p482 = pneg %p194
      $region42: #{run.3} parent=27 // pred_check_branch
        %484 = sbr.rel (%p482) target = $region44
      $region43: #{run.3} parent=27 // pred_region
        %p485 = scmp.lt.s32.totalorder %s29, 1
        %s486 = scalar_select %p485, %s29, 1
        %s487 = smul.addr %s486, 4
        %s488 = smul.addr %s487, 4
        %s489 = scalar_lea.vmem %s6, %s488
      $region44: #{run.3} parent=27 // pred_fallthru
        _
      // Predicated region
      $region45: #{run.3} parent=27 // pred_check
        %p490 = pneg %p220
      $region46: #{run.3} parent=27 // pred_check_branch
        %492 = sbr.rel (%p490) target = $region48
      $region47: #{run.3} parent=27 // pred_region
        %p493 = scmp.lt.s32.totalorder %s29, 1
        %s494 = scalar_select %p493, %s29, 1
        %s495 = smul.addr %s494, 4
        %s496 = smul.addr %s495, 4
        %s497 = scalar_lea.vmem %s7, %s496
      $region48: #{run.3} parent=27 // pred_fallthru
        _
      // Predicated region
      $region49: #{run.3} parent=27 // pred_check
        %p498 = pneg %p246
      $region50: #{run.3} parent=27 // pred_check_branch
        %500 = sbr.rel (%p498) target = $region52
      $region51: #{run.3} parent=27 // pred_region
        %p501 = scmp.lt.s32.totalorder %s29, 1
        %s502 = scalar_select %p501, %s29, 1
        %s503 = scalar_lea.vmem %s8, %s502
      $region52: #{run.3} parent=27 // pred_fallthru
        _
      // Predicated region
      $region53: #{run.3} parent=27 // pred_check
        %p504 = pneg %p272
      $region54: #{run.3} parent=27 // pred_check_branch
        %506 = sbr.rel (%p504) target = $region56
      $region55: #{run.3} parent=27 // pred_region
        %p507 = scmp.lt.s32.totalorder %s29, 1
        %s508 = scalar_select %p507, %s29, 1
        %s509 = scalar_lea.vmem %s9, %s508
      $region56: #{run.3} parent=27 // pred_fallthru
        _
      // Predicated region
      $region57: #{run.3} parent=27 // pred_check
        %p510 = pneg %p298
      $region58: #{run.3} parent=27 // pred_check_branch
        %512 = sbr.rel (%p510) target = $region60
      $region59: #{run.3} parent=27 // pred_region
        %p513 = scmp.lt.s32.totalorder %s29, 1
        %s514 = scalar_select %p513, %s29, 1
        %s515 = scalar_lea.vmem %s10, %s514
      $region60: #{run.3} parent=27 // pred_fallthru
        _
      // Predicated region
      $region61: #{run.3} parent=27 // pred_check
        %p516 = pneg %p324
      $region62: #{run.3} parent=27 // pred_check_branch
        %518 = sbr.rel (%p516) target = $region64
      $region63: #{run.3} parent=27 // pred_region
        %p519 = scmp.lt.s32.totalorder %s29, 1
        %s520 = scalar_select %p519, %s29, 1
        %s521 = smul.addr %s520, 4
        %s522 = smul.addr %s521, 4
        %s523 = scalar_lea.vmem %s11, %s522
      $region64: #{run.3} parent=27 // pred_fallthru
        _
      // Predicated region
      $region65: #{run.3} parent=27 // pred_check
        %p524 = pneg %p350
      $region66: #{run.3} parent=27 // pred_check_branch
        %526 = sbr.rel (%p524) target = $region68
      $region67: #{run.3} parent=27 // pred_region
        %p527 = scmp.lt.s32.totalorder %s29, 1
        %s528 = scalar_select %p527, %s29, 1
        %s529 = scalar_lea.vmem %s12, %s528
      $region68: #{run.3} parent=27 // pred_fallthru
        _
      // Predicated region
      $region69: #{run.3} parent=27 // pred_check
        %p530 = pneg %p376
      $region70: #{run.3} parent=27 // pred_check_branch
        %532 = sbr.rel (%p530) target = $region72
      $region71: #{run.3} parent=27 // pred_region
        %p533 = scmp.lt.s32.totalorder %s29, 1
        %s534 = scalar_select %p533, %s29, 1
        %s535 = smul.addr %s534, 16
        %s536 = smul.addr %s535, 4
        %s537 = scalar_lea.vmem %s13, %s536
      $region72: #{run.3} parent=27 // pred_fallthru
        _
      // Predicated region
      $region73: #{run.3} parent=27 // pred_check
        %p538 = pneg %p402
      $region74: #{run.3} parent=27 // pred_check_branch
        %540 = sbr.rel (%p538) target = $region76
      $region75: #{run.3} parent=27 // pred_region
        %p541 = scmp.lt.s32.totalorder %s29, 1
        %s542 = scalar_select %p541, %s29, 1
        %s543 = scalar_lea.vmem %s14, %s542
      $region76: #{run.3} parent=27 // pred_fallthru
        _
    $region28: #{run.3} parent=5 // pred_fallthru
      _
    %p544 = scmp.le.s32.totalorder 1, %s21
    %p545 = scmp.lt.s32.totalorder %s21, 5
    %p546 = pnand %p544, %p545
    %p547 = pneg %p546
    // Predicated region
    $region77: #{run.3} parent=5 // pred_check
      _
    $region78: #{run.3} parent=5 // pred_check_branch
      %549 = sbr.rel (%p546) target = $region80
    $region79: #{run.3} parent=5 // pred_region
      %s550 = ssub.s32 %s21, 1
      %p551 = scmp.lt.s32.totalorder %s30, 1
      %s552 = scalar_select %p551, %s30, 1
      %s553 = smul.addr %s552, 3
      %s554 = smul.addr %s553, 8
      %s555 = scalar_lea.vmem %s0, %s554
      %p556 = pneg %p59
      %p557 = pneg %p56
      %p558 = pneg %p80
      %p559 = pneg %p77
      %p560 = pneg %p101
      %p561 = pneg %p98
      %p562 = pneg %p122
      %p563 = pneg %p119
      %p564 = scmp.lt.s32.totalorder %s31, 1
      %s565 = scalar_select %p564, %s31, 1
      %s566 = scalar_lea.vmem %s4, %s565
      %p567 = pneg %p148
      %p568 = pneg %p145
      %p569 = scmp.lt.s32.totalorder %s31, 1
      %s570 = scalar_select %p569, %s31, 1
      %s571 = scalar_lea.vmem %s5, %s570
      %p572 = pneg %p174
      %p573 = pneg %p171
      %p574 = scmp.lt.s32.totalorder %s31, 1
      %s575 = scalar_select %p574, %s31, 1
      %s576 = smul.addr %s575, 4
      %s577 = smul.addr %s576, 4
      %s578 = scalar_lea.vmem %s6, %s577
      %p579 = pneg %p200
      %p580 = pneg %p197
      %p581 = scmp.lt.s32.totalorder %s31, 1
      %s582 = scalar_select %p581, %s31, 1
      %s583 = smul.addr %s582, 4
      %s584 = smul.addr %s583, 4
      %s585 = scalar_lea.vmem %s7, %s584
      %p586 = pneg %p226
      %p587 = pneg %p223
      %p588 = scmp.lt.s32.totalorder %s31, 1
      %s589 = scalar_select %p588, %s31, 1
      %s590 = scalar_lea.vmem %s8, %s589
      %p591 = pneg %p252
      %p592 = pneg %p249
      %p593 = scmp.lt.s32.totalorder %s31, 1
      %s594 = scalar_select %p593, %s31, 1
      %s595 = scalar_lea.vmem %s9, %s594
      %p596 = pneg %p278
      %p597 = pneg %p275
      %p598 = scmp.lt.s32.totalorder %s31, 1
      %s599 = scalar_select %p598, %s31, 1
      %s600 = scalar_lea.vmem %s10, %s599
      %p601 = pneg %p304
      %p602 = pneg %p301
      %p603 = scmp.lt.s32.totalorder %s31, 1
      %s604 = scalar_select %p603, %s31, 1
      %s605 = smul.addr %s604, 4
      %s606 = smul.addr %s605, 4
      %s607 = scalar_lea.vmem %s11, %s606
      %p608 = pneg %p330
      %p609 = pneg %p327
      %p610 = scmp.lt.s32.totalorder %s31, 1
      %s611 = scalar_select %p610, %s31, 1
      %s612 = scalar_lea.vmem %s12, %s611
      %p613 = pneg %p356
      %p614 = pneg %p353
      %p615 = scmp.lt.s32.totalorder %s31, 1
      %s616 = scalar_select %p615, %s31, 1
      %s617 = smul.addr %s616, 16
      %s618 = smul.addr %s617, 4
      %s619 = scalar_lea.vmem %s13, %s618
      %p620 = pneg %p382
      %p621 = pneg %p379
      %p622 = scmp.lt.s32.totalorder %s31, 1
      %s623 = scalar_select %p622, %s31, 1
      %s624 = scalar_lea.vmem %s14, %s623
      %p625 = pneg %p408
      %p626 = pneg %p405
      %p627 = pneg %p434
      %p628 = pneg %p431
      %p629 = scmp.lt.s32.totalorder %s30, 1
      %s630 = scalar_select %p629, %s30, 1
      %s631 = smul.addr %s630, 2
      %s632 = smul.addr %s631, 8
      %s633 = scalar_lea.vmem %s15, %s632
      %p634 = scmp.lt.s32.totalorder %s30, 1
      %s635 = scalar_select %p634, %s30, 1
      %s636 = smul.addr %s635, 3
      %s637 = smul.addr %s636, 8
      %s638 = scalar_lea.vmem %s0, %s637
      %p639 = scmp.lt.s32.totalorder %s31, 1
      %s640 = scalar_select %p639, %s31, 1
      %s641 = scalar_lea.vmem %s4, %s640
      %p642 = scmp.lt.s32.totalorder %s31, 1
      %s643 = scalar_select %p642, %s31, 1
      %s644 = scalar_lea.vmem %s5, %s643
      %p645 = scmp.lt.s32.totalorder %s31, 1
      %s646 = scalar_select %p645, %s31, 1
      %s647 = smul.addr %s646, 4
      %s648 = smul.addr %s647, 4
      %s649 = scalar_lea.vmem %s6, %s648
      %p650 = scmp.lt.s32.totalorder %s31, 1
      %s651 = scalar_select %p650, %s31, 1
      %s652 = smul.addr %s651, 4
      %s653 = smul.addr %s652, 4
      %s654 = scalar_lea.vmem %s7, %s653
      %p655 = scmp.lt.s32.totalorder %s31, 1
      %s656 = scalar_select %p655, %s31, 1
      %s657 = scalar_lea.vmem %s8, %s656
      %p658 = scmp.lt.s32.totalorder %s31, 1
      %s659 = scalar_select %p658, %s31, 1
      %s660 = scalar_lea.vmem %s9, %s659
      %p661 = scmp.lt.s32.totalorder %s31, 1
      %s662 = scalar_select %p661, %s31, 1
      %s663 = scalar_lea.vmem %s10, %s662
      %p664 = scmp.lt.s32.totalorder %s31, 1
      %s665 = scalar_select %p664, %s31, 1
      %s666 = smul.addr %s665, 4
      %s667 = smul.addr %s666, 4
      %s668 = scalar_lea.vmem %s11, %s667
      %p669 = scmp.lt.s32.totalorder %s31, 1
      %s670 = scalar_select %p669, %s31, 1
      %s671 = scalar_lea.vmem %s12, %s670
      %p672 = scmp.lt.s32.totalorder %s31, 1
      %s673 = scalar_select %p672, %s31, 1
      %s674 = smul.addr %s673, 16
      %s675 = smul.addr %s674, 4
      %s676 = scalar_lea.vmem %s13, %s675
      %p677 = scmp.lt.s32.totalorder %s31, 1
      %s678 = scalar_select %p677, %s31, 1
      %s679 = scalar_lea.vmem %s14, %s678
      %p680 = scmp.lt.s32.totalorder %s30, 1
      %s681 = scalar_select %p680, %s30, 1
      %s682 = smul.addr %s681, 2
      %s683 = smul.addr %s682, 8
      %s684 = scalar_lea.vmem %s15, %s683
      %p686 = scmp.eq.s32.totalorder %s31, 0
      // Predicated region
      $region81: #{run.3} parent=79 // pred_check
        %p687 = pneg %p686
      $region82: #{run.3} parent=79 // pred_check_branch
        %689 = sbr.rel (%p687) target = $region84
      $region83: #{run.3} parent=79 // pred_region
        %v690 = vld [vmem:[%s638] sm:$0xff]
        %v691 = vld [vmem:[%s638 + $0x8] sm:$0xff]
        %v692 = vld [vmem:[%s638 + $0x10] sm:$0x1]
        %v693 = vld [vmem:[%s1] sm:$0xff]
        %v694 = vld [vmem:[%s1 + $0x8] sm:$0xff]
        %v695 = vld [vmem:[%s1 + $0x10] sm:$0x1]
        %v696 = vadd.f32 %v690, %v693
        %v697 = vadd.f32 %v691, %v694
        %v698 = vadd.f32 %v692, %v695
        %vm699 = vcmask 261120
        %700 = vst.msk [vmem:[#allocation2] sm:$0xff] %vm699, %v696
        %701 = vst.msk [vmem:[#allocation2 + $0x8] sm:$0xff] %vm699, %v697
        %vm702 = vcmask 253952
        %703 = vst.msk [vmem:[#allocation2 + $0x10] sm:$0x1] %vm702, %v698
      $region84: #{run.3} parent=79 // pred_fallthru
        _
      %v704 = vld [vmem:[#allocation2] sm:$0xff]
      %v705 = vld [vmem:[#allocation2 + $0x8] sm:$0xff]
      %v706 = vld [vmem:[#allocation2 + $0x10] sm:$0x1]
      %v707 = vld [vmem:[%s641] sm:$0x1]
      %v708 = vld [vmem:[%s644] sm:$0x1]
      %v709 = vld [vmem:[%s649] sm:$0xf]
      %v710 = vld [vmem:[%s649 + $0x4] sm:$0xf]
      %v711 = vld [vmem:[%s649 + $0x8] sm:$0xf]
      %v712 = vld [vmem:[%s649 + $0xc] sm:$0xf]
      %v713 = vld [vmem:[%s654] sm:$0xf]
      %v714 = vld [vmem:[%s654 + $0x4] sm:$0xf]
      %v715 = vld [vmem:[%s654 + $0x8] sm:$0xf]
      %v716 = vld [vmem:[%s654 + $0xc] sm:$0xf]
      %v717 = vld [vmem:[%s657] sm:$0x1]
      %v718 = vld [vmem:[%s660] sm:$0x1]
      %v719 = vld [vmem:[%s663] sm:$0x1]
      %v720 = vld [vmem:[%s668] sm:$0xf]
      %v721 = vld [vmem:[%s668 + $0x4] sm:$0xf]
      %v722 = vld [vmem:[%s668 + $0x8] sm:$0xf]
      %v723 = vld [vmem:[%s668 + $0xc] sm:$0xf]
      %v724 = vld [vmem:[%s671] sm:$0x1]
      %v725 = vld [vmem:[%s676] sm:$0xf]
      %v726 = vld [vmem:[%s676 + $0x4] sm:$0xf]
      %v727 = vld [vmem:[%s676 + $0x8] sm:$0xf]
      %v728 = vld [vmem:[%s676 + $0xc] sm:$0xf]
      %v729 = vld [vmem:[%s676 + $0x10] sm:$0xf]
      %v730 = vld [vmem:[%s676 + $0x14] sm:$0xf]
      %v731 = vld [vmem:[%s676 + $0x18] sm:$0xf]
      %v732 = vld [vmem:[%s676 + $0x1c] sm:$0xf]
      %v733 = vld [vmem:[%s676 + $0x20] sm:$0xf]
      %v734 = vld [vmem:[%s676 + $0x24] sm:$0xf]
      %v735 = vld [vmem:[%s676 + $0x28] sm:$0xf]
      %v736 = vld [vmem:[%s676 + $0x2c] sm:$0xf]
      %v737 = vld [vmem:[%s676 + $0x30] sm:$0xf]
      %v738 = vld [vmem:[%s676 + $0x34] sm:$0xf]
      %v739 = vld [vmem:[%s676 + $0x38] sm:$0xf]
      %v740 = vld [vmem:[%s676 + $0x3c] sm:$0xf]
      %v741 = vld [vmem:[%s679] sm:$0x1]
      %vm742 = vcmask 261120
      %v743 = vsel %vm742, %v704, 0.0
      %744 = vadd.xlane.f32.xlu0 %v743
      %v745 = vpop.xlane.xlu0 %744
      %v746 = vsel %vm742, %v705, 0.0
      %747 = vadd.xlane.f32.xlu0 %v746
      %v748 = vpop.xlane.xlu0 %747
      %vm749 = vcmask 253952
      %v750 = vsel %vm749, %v706, 0.0
      %751 = vadd.xlane.f32.xlu0 %v750
      %v752 = vpop.xlane.xlu0 %751
      %v753 = vrcp.pop 32.0
      %v754 = vmul.f32 %v745, %v753
      %v755 = vmul.f32 %v748, %v753
      %v756 = vmul.f32 %v752, %v753
      %v757 = vsub.f32 %v704, %v754
      %v758 = vsub.f32 %v705, %v755
      %v759 = vsub.f32 %v706, %v756
      %v760 = vmul.f32 %v757, %v757
      %v761 = vmul.f32 %v758, %v758
      %v762 = vmul.f32 %v759, %v759
      %v763 = vsel %vm742, %v760, 0.0
      %764 = vadd.xlane.f32.xlu0 %v763
      %v765 = vpop.xlane.xlu0 %764
      %v766 = vsel %vm742, %v761, 0.0
      %767 = vadd.xlane.f32.xlu0 %v766
      %v768 = vpop.xlane.xlu0 %767
      %v769 = vsel %vm749, %v762, 0.0
      %770 = vadd.xlane.f32.xlu0 %v769
      %v771 = vpop.xlane.xlu0 %770
      %v772 = vmul.f32 %v765, %v753
      %v773 = vmul.f32 %v768, %v753
      %v774 = vmul.f32 %v771, %v753
      %v775 = vadd.f32 %v772, 1e-05
      %v776 = vadd.f32 %v773, 1e-05
      %v777 = vadd.f32 %v774, 1e-05
      %v778 = vrsqrt.pop %v775
      %v779 = vrsqrt.pop %v776
      %v780 = vrsqrt.pop %v777
      %v781 = vmul.f32 %v757, %v778
      %v782 = vmul.f32 %v758, %v779
      %v783 = vmul.f32 %v759, %v780
      %v785 = vlaneseq
      %v786 = vshrl.u32 %v785, 7
      %v787 = vsub.s32 0, %v786
      %v788 = vrot.slane %v707, %v787
      %v790 = vmul.f32 %v781, %v788
      %v791 = vmul.f32 %v782, %v788
      %v792 = vmul.f32 %v783, %v788
      %v794 = vlaneseq
      %v795 = vshrl.u32 %v794, 7
      %v796 = vsub.s32 0, %v795
      %v797 = vrot.slane %v708, %v796
      %v799 = vadd.f32 %v790, %v797
      %v800 = vadd.f32 %v791, %v797
      %v801 = vadd.f32 %v792, %v797
      %v802 = vpack.c.bf16 %v800, %v799
      %v803 = vpack.c.bf16 %v801, %v801
      %v808 = vunpack.c.l.b16 %v709
      %v809 = vunpack.c.l.b16 %v710
      %v810 = vunpack.c.l.b16 %v711
      %v811 = vunpack.c.l.b16 %v712
      %v812 = vpack.c.b16 %v809, %v808
      %v813 = vpack.c.b16 %v811, %v810
      %v817 = vsel %vm742, %v802, 0
      %v820 = vsel %vm742, %v803, 0
      %822 = vmatprep.subr.bf16.mxu0 0
      %823 = vmatpush1.bf16.msra.mxu0 %v812
      %824 = vmatprep.subr.bf16.mxu0 0
      %825 = vmatpush1.bf16.msra.mxu0 %v813
      %826 = vmatprep.subr.bf16.mxu0 0
      %827 = vmatpush1.bf16.msra.mxu0 0
      %828 = vmatprep.subr.bf16.mxu0 0
      %829 = vmatpush1.bf16.msra.mxu0 0
      %830 = vmatprep.subr.bf16.mxu0 0
      %831 = vmatpush1.bf16.msra.mxu0 0
      %832 = vmatprep.subr.bf16.mxu0 0
      %833 = vmatpush1.bf16.msra.mxu0 0
      %834 = vmatprep.subr.bf16.mxu0 0
      %835 = vmatpush1.bf16.msra.mxu0 0
      %836 = vmatprep.subr.bf16.mxu0 0
      %837 = vmatpush1.bf16.msra.mxu0 0
      %838 = vmatprep.subr.bf16.mxu0 0
      %839 = vmatpush1.bf16.msra.mxu0 0
      %840 = vmatprep.subr.bf16.mxu0 0
      %841 = vmatpush1.bf16.msra.mxu0 0
      %842 = vmatprep.subr.bf16.mxu0 0
      %843 = vmatpush1.bf16.msra.mxu0 0
      %844 = vmatprep.subr.bf16.mxu0 0
      %845 = vmatpush1.bf16.msra.mxu0 0
      %846 = vmatprep.subr.bf16.mxu0 0
      %847 = vmatpush1.bf16.msra.mxu0 0
      %848 = vmatprep.subr.bf16.mxu0 0
      %849 = vmatpush1.bf16.msra.mxu0 0
      %850 = vmatprep.subr.bf16.mxu0 0
      %851 = vmatpush1.bf16.msra.mxu0 0
      %852 = vmatprep.subr.bf16.mxu0 0
      %853 = vmatpush1.bf16.msra.mxu0 0
      %854 = vmatprep.mubr.bf16.mxu0 0
      %855 = vmatmul.mubr.bf16.gmra.mrb[0].mxu0 %v817
      %v856 = vpop.f32.mrb[0].mxu0
      %v857 = vadd.f32 0.0, %v856
      %v858 = vpop.f32.mrb[0].mxu0
      %v859 = vpop.f32.mrb[0].mxu0
      %v860 = vadd.f32 0.0, %v859
      %v861 = vpop.f32.mrb[0].mxu0
      %862 = vmatprep.mubr.bf16.mxu0 0
      %863 = vmatmul.mubr.bf16.gmra.mrb[0].mxu0 %v820
      %v864 = vpop.f32.mrb[0].mxu0
      %v865 = vadd.f32 0.0, %v864
      %v866 = vpop.f32.mrb[0].mxu0
      %v867 = vpop.f32.mrb[0].mxu0
      %v868 = vpop.f32.mrb[0].mxu0
      %869 = vdwg.mxu0
      %873 = vrot.lane.b32.xlu0 %v857, 120
      %v874 = vpop.permute.xlu0 %873
      %875 = vrot.lane.b32.xlu0 %v860, 120
      %v876 = vpop.permute.xlu0 %875
      %877 = vrot.lane.b32.xlu0 %v865, 120
      %v878 = vpop.permute.xlu0 %877
      %882 = vrot.lane.b32.xlu0 %v857, 112
      %v883 = vpop.permute.xlu0 %882
      %884 = vrot.lane.b32.xlu0 %v860, 112
      %v885 = vpop.permute.xlu0 %884
      %886 = vrot.lane.b32.xlu0 %v865, 112
      %v887 = vpop.permute.xlu0 %886
      %891 = vrot.lane.b32.xlu0 %v857, 104
      %v892 = vpop.permute.xlu0 %891
      %893 = vrot.lane.b32.xlu0 %v860, 104
      %v894 = vpop.permute.xlu0 %893
      %895 = vrot.lane.b32.xlu0 %v865, 104
      %v896 = vpop.permute.xlu0 %895
      %v900 = vpack.c.bf16 %v860, %v857
      %v901 = vpack.c.bf16 %v865, %v865
      %v902 = vpack.c.bf16 %v876, %v874
      %v903 = vpack.c.bf16 %v878, %v878
      %v904 = vpack.c.bf16 %v885, %v883
      %v905 = vpack.c.bf16 %v887, %v887
      %v906 = vpack.c.bf16 %v894, %v892
      %v907 = vpack.c.bf16 %v896, %v896
      %910 = vrot.lane.b32.xlu0 %v900, 96
      %v911 = vpop.permute.xlu0 %910
      %912 = vrot.lane.b32.xlu0 %v901, 96
      %v913 = vpop.permute.xlu0 %912
      %vm914 = vcmask 64512
      %v916 = vsel %vm914, %v900, 0
      %v919 = vsel %vm914, %v901, 0
      %v922 = vsel %vm914, %v911, 0
      %v925 = vsel %vm914, %v913, 0
      %927 = vmatprep.subr.bf16.mxu0 0
      %928 = vmatpush1.bf16.xpose.msra.mxu0 %v922
      %929 = vmatprep.subr.bf16.mxu0 0
      %930 = vmatpush1.bf16.xpose.msra.mxu0 %v925
      %931 = vmatprep.subr.bf16.mxu0 0
      %932 = vmatpush1.bf16.xpose.msra.mxu0 0
      %933 = vmatprep.subr.bf16.mxu0 0
      %934 = vmatpush1.bf16.xpose.msra.mxu0 0
      %935 = vmatprep.subr.bf16.mxu0 0
      %936 = vmatpush1.bf16.xpose.msra.mxu0 0
      %937 = vmatprep.subr.bf16.mxu0 0
      %938 = vmatpush1.bf16.xpose.msra.mxu0 0
      %939 = vmatprep.subr.bf16.mxu0 0
      %940 = vmatpush1.bf16.xpose.msra.mxu0 0
      %941 = vmatprep.subr.bf16.mxu0 0
      %942 = vmatpush1.bf16.xpose.msra.mxu0 0
      %943 = vmatprep.subr.bf16.mxu0 0
      %944 = vmatpush1.bf16.xpose.msra.mxu0 0
      %945 = vmatprep.subr.bf16.mxu0 0
      %946 = vmatpush1.bf16.xpose.msra.mxu0 0
      %947 = vmatprep.subr.bf16.mxu0 0
      %948 = vmatpush1.bf16.xpose.msra.mxu0 0
      %949 = vmatprep.subr.bf16.mxu0 0
      %950 = vmatpush1.bf16.xpose.msra.mxu0 0
      %951 = vmatprep.subr.bf16.mxu0 0
      %952 = vmatpush1.bf16.xpose.msra.mxu0 0
      %953 = vmatprep.subr.bf16.mxu0 0
      %954 = vmatpush1.bf16.xpose.msra.mxu0 0
      %955 = vmatprep.subr.bf16.mxu0 0
      %956 = vmatpush1.bf16.xpose.msra.mxu0 0
      %957 = vmatprep.subr.bf16.mxu0 0
      %958 = vmatpush1.bf16.xpose.msra.mxu0 0
      %959 = vmatprep.mubr.bf16.mxu0 0
      %960 = vmatmul.mubr.bf16.gmra.mrb[0].mxu0 %v916
      %v961 = vpop.f32.mrb[0].mxu0
      %v962 = vadd.f32 0.0, %v961
      %v963 = vpop.f32.mrb[0].mxu0
      %v964 = vpop.f32.mrb[0].mxu0
      %v965 = vadd.f32 0.0, %v964
      %v966 = vpop.f32.mrb[0].mxu0
      %967 = vmatprep.mubr.bf16.mxu0 0
      %968 = vmatmul.mubr.bf16.gmra.mrb[0].mxu0 %v919
      %v969 = vpop.f32.mrb[0].mxu0
      %v970 = vadd.f32 0.0, %v969
      %v971 = vpop.f32.mrb[0].mxu0
      %v972 = vpop.f32.mrb[0].mxu0
      %v973 = vpop.f32.mrb[0].mxu0
      %974 = vdwg.mxu0
      %977 = vrot.lane.b32.xlu0 %v902, 96
      %v978 = vpop.permute.xlu0 %977
      %979 = vrot.lane.b32.xlu0 %v903, 96
      %v980 = vpop.permute.xlu0 %979
      %v982 = vsel %vm914, %v902, 0
      %v985 = vsel %vm914, %v903, 0
      %v988 = vsel %vm914, %v978, 0
      %v991 = vsel %vm914, %v980, 0
      %993 = vmatprep.subr.bf16.mxu0 0
      %994 = vmatpush1.bf16.xpose.msra.mxu0 %v988
      %995 = vmatprep.subr.bf16.mxu0 0
      %996 = vmatpush1.bf16.xpose.msra.mxu0 %v991
      %997 = vmatprep.subr.bf16.mxu0 0
      %998 = vmatpush1.bf16.xpose.msra.mxu0 0
      %999 = vmatprep.subr.bf16.mxu0 0
      %1000 = vmatpush1.bf16.xpose.msra.mxu0 0
      %1001 = vmatprep.subr.bf16.mxu0 0
      %1002 = vmatpush1.bf16.xpose.msra.mxu0 0
      %1003 = vmatprep.subr.bf16.mxu0 0
      %1004 = vmatpush1.bf16.xpose.msra.mxu0 0
      %1005 = vmatprep.subr.bf16.mxu0 0
      %1006 = vmatpush1.bf16.xpose.msra.mxu0 0
      %1007 = vmatprep.subr.bf16.mxu0 0
      %1008 = vmatpush1.bf16.xpose.msra.mxu0 0
      %1009 = vmatprep.subr.bf16.mxu0 0
      %1010 = vmatpush1.bf16.xpose.msra.mxu0 0
      %1011 = vmatprep.subr.bf16.mxu0 0
      %1012 = vmatpush1.bf16.xpose.msra.mxu0 0
      %1013 = vmatprep.subr.bf16.mxu0 0
      %1014 = vmatpush1.bf16.xpose.msra.mxu0 0
      %1015 = vmatprep.subr.bf16.mxu0 0
      %1016 = vmatpush1.bf16.xpose.msra.mxu0 0
      %1017 = vmatprep.subr.bf16.mxu0 0
      %1018 = vmatpush1.bf16.xpose.msra.mxu0 0
      %1019 = vmatprep.subr.bf16.mxu0 0
      %1020 = vmatpush1.bf16.xpose.msra.mxu0 0
      %1021 = vmatprep.subr.bf16.mxu0 0
      %1022 = vmatpush1.bf16.xpose.msra.mxu0 0
      %1023 = vmatprep.subr.bf16.mxu0 0
      %1024 = vmatpush1.bf16.xpose.msra.mxu0 0
      %1025 = vmatprep.mubr.bf16.mxu0 0
      %1026 = vmatmul.mubr.bf16.gmra.mrb[0].mxu0 %v982
      %v1027 = vpop.f32.mrb[0].mxu0
      %v1028 = vadd.f32 0.0, %v1027
      %v1029 = vpop.f32.mrb[0].mxu0
      %v1030 = vpop.f32.mrb[0].mxu0
      %v1031 = vadd.f32 0.0, %v1030
      %v1032 = vpop.f32.mrb[0].mxu0
      %1033 = vmatprep.mubr.bf16.mxu0 0
      %1034 = vmatmul.mubr.bf16.gmra.mrb[0].mxu0 %v985
      %v1035 = vpop.f32.mrb[0].mxu0
      %v1036 = vadd.f32 0.0, %v1035
      %v1037 = vpop.f32.mrb[0].mxu0
      %v1038 = vpop.f32.mrb[0].mxu0
      %v1039 = vpop.f32.mrb[0].mxu0
      %1040 = vdwg.mxu0
      %1043 = vrot.lane.b32.xlu0 %v904, 96
      %v1044 = vpop.permute.xlu0 %1043
      %1045 = vrot.lane.b32.xlu0 %v905, 96
      %v1046 = vpop.permute.xlu0 %1045
      %v1048 = vsel %vm914, %v904, 0
      %v1051 = vsel %vm914, %v905, 0
      %v1054 = vsel %vm914, %v1044, 0
      %v1057 = vsel %vm914, %v1046, 0
      %1059 = vmatprep.subr.bf16.mxu0 0
      %1060 = vmatpush1.bf16.xpose.msra.mxu0 %v1054
      %1061 = vmatprep.subr.bf16.mxu0 0
      %1062 = vmatpush1.bf16.xpose.msra.mxu0 %v1057
      %1063 = vmatprep.subr.bf16.mxu0 0
      %1064 = vmatpush1.bf16.xpose.msra.mxu0 0
      %1065 = vmatprep.subr.bf16.mxu0 0
      %1066 = vmatpush1.bf16.xpose.msra.mxu0 0
      %1067 = vmatprep.subr.bf16.mxu0 0
      %1068 = vmatpush1.bf16.xpose.msra.mxu0 0
      %1069 = vmatprep.subr.bf16.mxu0 0
      %1070 = vmatpush1.bf16.xpose.msra.mxu0 0
      %1071 = vmatprep.subr.bf16.mxu0 0
      %1072 = vmatpush1.bf16.xpose.msra.mxu0 0
      %1073 = vmatprep.subr.bf16.mxu0 0
      %1074 = vmatpush1.bf16.xpose.msra.mxu0 0
      %1075 = vmatprep.subr.bf16.mxu0 0
      %1076 = vmatpush1.bf16.xpose.msra.mxu0 0
      %1077 = vmatprep.subr.bf16.mxu0 0
      %1078 = vmatpush1.bf16.xpose.msra.mxu0 0
      %1079 = vmatprep.subr.bf16.mxu0 0
      %1080 = vmatpush1.bf16.xpose.msra.mxu0 0
      %1081 = vmatprep.subr.bf16.mxu0 0
      %1082 = vmatpush1.bf16.xpose.msra.mxu0 0
      %1083 = vmatprep.subr.bf16.mxu0 0
      %1084 = vmatpush1.bf16.xpose.msra.mxu0 0
      %1085 = vmatprep.subr.bf16.mxu0 0
      %1086 = vmatpush1.bf16.xpose.msra.mxu0 0
      %1087 = vmatprep.subr.bf16.mxu0 0
      %1088 = vmatpush1.bf16.xpose.msra.mxu0 0
      %1089 = vmatprep.subr.bf16.mxu0 0
      %1090 = vmatpush1.bf16.xpose.msra.mxu0 0
      %1091 = vmatprep.mubr.bf16.mxu0 0
      %1092 = vmatmul.mubr.bf16.gmra.mrb[0].mxu0 %v1048
      %v1093 = vpop.f32.mrb[0].mxu0
      %v1094 = vadd.f32 0.0, %v1093
      %v1095 = vpop.f32.mrb[0].mxu0
      %v1096 = vpop.f32.mrb[0].mxu0
      %v1097 = vadd.f32 0.0, %v1096
      %v1098 = vpop.f32.mrb[0].mxu0
      %1099 = vmatprep.mubr.bf16.mxu0 0
      %1100 = vmatmul.mubr.bf16.gmra.mrb[0].mxu0 %v1051
      %v1101 = vpop.f32.mrb[0].mxu0
      %v1102 = vadd.f32 0.0, %v1101
      %v1103 = vpop.f32.mrb[0].mxu0
      %v1104 = vpop.f32.mrb[0].mxu0
      %v1105 = vpop.f32.mrb[0].mxu0
      %1106 = vdwg.mxu0
      %1109 = vrot.lane.b32.xlu0 %v906, 96
      %v1110 = vpop.permute.xlu0 %1109
      %1111 = vrot.lane.b32.xlu0 %v907, 96
      %v1112 = vpop.permute.xlu0 %1111
      %v1114 = vsel %vm914, %v906, 0
      %v1117 = vsel %vm914, %v907, 0
      %v1120 = vsel %vm914, %v1110, 0
      %v1123 = vsel %vm914, %v1112, 0
      %1125 = vmatprep.subr.bf16.mxu0 0
      %1126 = vmatpush1.bf16.xpose.msra.mxu0 %v1120
      %1127 = vmatprep.subr.bf16.mxu0 0
      %1128 = vmatpush1.bf16.xpose.msra.mxu0 %v1123
      %1129 = vmatprep.subr.bf16.mxu0 0
      %1130 = vmatpush1.bf16.xpose.msra.mxu0 0
      %1131 = vmatprep.subr.bf16.mxu0 0
      %1132 = vmatpush1.bf16.xpose.msra.mxu0 0
      %1133 = vmatprep.subr.bf16.mxu0 0
      %1134 = vmatpush1.bf16.xpose.msra.mxu0 0
      %1135 = vmatprep.subr.bf16.mxu0 0
      %1136 = vmatpush1.bf16.xpose.msra.mxu0 0
      %1137 = vmatprep.subr.bf16.mxu0 0
      %1138 = vmatpush1.bf16.xpose.msra.mxu0 0
      %1139 = vmatprep.subr.bf16.mxu0 0
      %1140 = vmatpush1.bf16.xpose.msra.mxu0 0
      %1141 = vmatprep.subr.bf16.mxu0 0
      %1142 = vmatpush1.bf16.xpose.msra.mxu0 0
      %1143 = vmatprep.subr.bf16.mxu0 0
      %1144 = vmatpush1.bf16.xpose.msra.mxu0 0
      %1145 = vmatprep.subr.bf16.mxu0 0
      %1146 = vmatpush1.bf16.xpose.msra.mxu0 0
      %1147 = vmatprep.subr.bf16.mxu0 0
      %1148 = vmatpush1.bf16.xpose.msra.mxu0 0
      %1149 = vmatprep.subr.bf16.mxu0 0
      %1150 = vmatpush1.bf16.xpose.msra.mxu0 0
      %1151 = vmatprep.subr.bf16.mxu0 0
      %1152 = vmatpush1.bf16.xpose.msra.mxu0 0
      %1153 = vmatprep.subr.bf16.mxu0 0
      %1154 = vmatpush1.bf16.xpose.msra.mxu0 0
      %1155 = vmatprep.subr.bf16.mxu0 0
      %1156 = vmatpush1.bf16.xpose.msra.mxu0 0
      %1157 = vmatprep.mubr.bf16.mxu0 0
      %1158 = vmatmul.mubr.bf16.gmra.mrb[0].mxu0 %v1114
      %v1159 = vpop.f32.mrb[0].mxu0
      %v1160 = vadd.f32 0.0, %v1159
      %v1161 = vpop.f32.mrb[0].mxu0
      %v1162 = vpop.f32.mrb[0].mxu0
      %v1163 = vadd.f32 0.0, %v1162
      %v1164 = vpop.f32.mrb[0].mxu0
      %1165 = vmatprep.mubr.bf16.mxu0 0
      %1166 = vmatmul.mubr.bf16.gmra.mrb[0].mxu0 %v1117
      %v1167 = vpop.f32.mrb[0].mxu0
      %v1168 = vadd.f32 0.0, %v1167
      %v1169 = vpop.f32.mrb[0].mxu0
      %v1170 = vpop.f32.mrb[0].mxu0
      %v1171 = vpop.f32.mrb[0].mxu0
      %1172 = vdwg.mxu0
      %vm1173 = vcmask 138240
      %v1174 = vsel %vm1173, %v962, -inf
      %1175 = vmax.xlane.f32.xlu0 %v1174
      %v1176 = vpop.xlane.xlu0 %1175
      %v1177 = vsel %vm1173, %v965, -inf
      %1178 = vmax.xlane.f32.xlu0 %v1177
      %v1179 = vpop.xlane.xlu0 %1178
      %vm1180 = vcmask 131072
      %v1181 = vsel %vm1180, %v970, -inf
      %1182 = vmax.xlane.f32.xlu0 %v1181
      %v1183 = vpop.xlane.xlu0 %1182
      %v1184 = vsel %vm1173, %v1028, -inf
      %1185 = vmax.xlane.f32.xlu0 %v1184
      %v1186 = vpop.xlane.xlu0 %1185
      %v1187 = vsel %vm1173, %v1031, -inf
      %1188 = vmax.xlane.f32.xlu0 %v1187
      %v1189 = vpop.xlane.xlu0 %1188
      %v1190 = vsel %vm1180, %v1036, -inf
      %1191 = vmax.xlane.f32.xlu0 %v1190
      %v1192 = vpop.xlane.xlu0 %1191
      %v1193 = vsel %vm1173, %v1094, -inf
      %1194 = vmax.xlane.f32.xlu0 %v1193
      %v1195 = vpop.xlane.xlu0 %1194
      %v1196 = vsel %vm1173, %v1097, -inf
      %1197 = vmax.xlane.f32.xlu0 %v1196
      %v1198 = vpop.xlane.xlu0 %1197
      %v1199 = vsel %vm1180, %v1102, -inf
      %1200 = vmax.xlane.f32.xlu0 %v1199
      %v1201 = vpop.xlane.xlu0 %1200
      %v1202 = vsel %vm1173, %v1160, -inf
      %1203 = vmax.xlane.f32.xlu0 %v1202
      %v1204 = vpop.xlane.xlu0 %1203
      %v1205 = vsel %vm1173, %v1163, -inf
      %1206 = vmax.xlane.f32.xlu0 %v1205
      %v1207 = vpop.xlane.xlu0 %1206
      %v1208 = vsel %vm1180, %v1168, -inf
      %1209 = vmax.xlane.f32.xlu0 %v1208
      %v1210 = vpop.xlane.xlu0 %1209
      %v1211 = vsub.f32 %v962, %v1176
      %v1212 = vsub.f32 %v965, %v1179
      %v1213 = vsub.f32 %v970, %v1183
      %v1214 = vsub.f32 %v1028, %v1186
      %v1215 = vsub.f32 %v1031, %v1189
      %v1216 = vsub.f32 %v1036, %v1192
      %v1217 = vsub.f32 %v1094, %v1195
      %v1218 = vsub.f32 %v1097, %v1198
      %v1219 = vsub.f32 %v1102, %v1201
      %v1220 = vsub.f32 %v1160, %v1204
      %v1221 = vsub.f32 %v1163, %v1207
      %v1222 = vsub.f32 %v1168, %v1210
      %v1223 = vmul.f32 %v1211, 1.442695
      %v1224 = vpow.pop %v1223
      %v1225 = vmul.f32 %v1212, 1.442695
      %v1226 = vpow.pop %v1225
      %v1227 = vmul.f32 %v1213, 1.442695
      %v1228 = vpow.pop %v1227
      %v1229 = vmul.f32 %v1214, 1.442695
      %v1230 = vpow.pop %v1229
      %v1231 = vmul.f32 %v1215, 1.442695
      %v1232 = vpow.pop %v1231
      %v1233 = vmul.f32 %v1216, 1.442695
      %v1234 = vpow.pop %v1233
      %v1235 = vmul.f32 %v1217, 1.442695
      %v1236 = vpow.pop %v1235
      %v1237 = vmul.f32 %v1218, 1.442695
      %v1238 = vpow.pop %v1237
      %v1239 = vmul.f32 %v1219, 1.442695
      %v1240 = vpow.pop %v1239
      %v1241 = vmul.f32 %v1220, 1.442695
      %v1242 = vpow.pop %v1241
      %v1243 = vmul.f32 %v1221, 1.442695
      %v1244 = vpow.pop %v1243
      %v1245 = vmul.f32 %v1222, 1.442695
      %v1246 = vpow.pop %v1245
      %v1247 = vsel %vm1173, %v1224, 0.0
      %1248 = vadd.xlane.f32.xlu0 %v1247
      %v1249 = vpop.xlane.xlu0 %1248
      %v1250 = vsel %vm1173, %v1226, 0.0
      %1251 = vadd.xlane.f32.xlu0 %v1250
      %v1252 = vpop.xlane.xlu0 %1251
      %v1253 = vsel %vm1180, %v1228, 0.0
      %1254 = vadd.xlane.f32.xlu0 %v1253
      %v1255 = vpop.xlane.xlu0 %1254
      %v1256 = vsel %vm1173, %v1230, 0.0
      %1257 = vadd.xlane.f32.xlu0 %v1256
      %v1258 = vpop.xlane.xlu0 %1257
      %v1259 = vsel %vm1173, %v1232, 0.0
      %1260 = vadd.xlane.f32.xlu0 %v1259
      %v1261 = vpop.xlane.xlu0 %1260
      %v1262 = vsel %vm1180, %v1234, 0.0
      %1263 = vadd.xlane.f32.xlu0 %v1262
      %v1264 = vpop.xlane.xlu0 %1263
      %v1265 = vsel %vm1173, %v1236, 0.0
      %1266 = vadd.xlane.f32.xlu0 %v1265
      %v1267 = vpop.xlane.xlu0 %1266
      %v1268 = vsel %vm1173, %v1238, 0.0
      %1269 = vadd.xlane.f32.xlu0 %v1268
      %v1270 = vpop.xlane.xlu0 %1269
      %v1271 = vsel %vm1180, %v1240, 0.0
      %1272 = vadd.xlane.f32.xlu0 %v1271
      %v1273 = vpop.xlane.xlu0 %1272
      %v1274 = vsel %vm1173, %v1242, 0.0
      %1275 = vadd.xlane.f32.xlu0 %v1274
      %v1276 = vpop.xlane.xlu0 %1275
      %v1277 = vsel %vm1173, %v1244, 0.0
      %1278 = vadd.xlane.f32.xlu0 %v1277
      %v1279 = vpop.xlane.xlu0 %1278
      %v1280 = vsel %vm1180, %v1246, 0.0
      %1281 = vadd.xlane.f32.xlu0 %v1280
      %v1282 = vpop.xlane.xlu0 %1281
      %v1283 = vrcp.pop %v1249
      %v1284 = vrcp.pop %v1252
      %v1285 = vrcp.pop %v1255
      %v1286 = vrcp.pop %v1258
      %v1287 = vrcp.pop %v1261
      %v1288 = vrcp.pop %v1264
      %v1289 = vrcp.pop %v1267
      %v1290 = vrcp.pop %v1270
      %v1291 = vrcp.pop %v1273
      %v1292 = vrcp.pop %v1276
      %v1293 = vrcp.pop %v1279
      %v1294 = vrcp.pop %v1282
      %v1295 = vmul.f32 %v1224, %v1283
      %v1296 = vmul.f32 %v1226, %v1284
      %v1297 = vmul.f32 %v1228, %v1285
      %v1298 = vmul.f32 %v1230, %v1286
      %v1299 = vmul.f32 %v1232, %v1287
      %v1300 = vmul.f32 %v1234, %v1288
      %v1301 = vmul.f32 %v1236, %v1289
      %v1302 = vmul.f32 %v1238, %v1290
      %v1303 = vmul.f32 %v1240, %v1291
      %v1304 = vmul.f32 %v1242, %v1292
      %v1305 = vmul.f32 %v1244, %v1293
      %v1306 = vmul.f32 %v1246, %v1294
      %v1307 = vpack.c.bf16 %v1296, %v1295
      %v1308 = vpack.c.bf16 %v1297, %v1297
      %v1309 = vpack.c.bf16 %v1299, %v1298
      %v1310 = vpack.c.bf16 %v1300, %v1300
      %v1311 = vpack.c.bf16 %v1302, %v1301
      %v1312 = vpack.c.bf16 %v1303, %v1303
      %v1313 = vpack.c.bf16 %v1305, %v1304
      %v1314 = vpack.c.bf16 %v1306, %v1306
      %1315 = vrot.lane.b32.xlu0 %v900, 64
      %v1316 = vpop.permute.xlu0 %1315
      %1317 = vrot.lane.b32.xlu0 %v901, 64
      %v1318 = vpop.permute.xlu0 %1317
      %v1321 = vsel %vm1173, %v1307, 0
      %v1324 = vsel %vm1173, %v1308, 0
      %vm1326 = vcmask 1040384
      %v1327 = vsel 0, 4294967295, 65535
      %v1328 = vsel %vm1326, %v1327, 0
      %v1330 = vand.u32 %v1318, %v1328
      %1332 = vmatprep.subr.bf16.mxu0 0
      %1333 = vmatpush1.bf16.msra.mxu0 %v1316
      %1334 = vmatprep.subr.bf16.mxu0 0
      %1335 = vmatpush1.bf16.msra.mxu0 %v1330
      %1336 = vmatprep.subr.bf16.mxu0 0
      %1337 = vmatpush1.bf16.msra.mxu0 0
      %1338 = vmatprep.subr.bf16.mxu0 0
      %1339 = vmatpush1.bf16.msra.mxu0 0
      %1340 = vmatprep.subr.bf16.mxu0 0
      %1341 = vmatpush1.bf16.msra.mxu0 0
      %1342 = vmatprep.subr.bf16.mxu0 0
      %1343 = vmatpush1.bf16.msra.mxu0 0
      %1344 = vmatprep.subr.bf16.mxu0 0
      %1345 = vmatpush1.bf16.msra.mxu0 0
      %1346 = vmatprep.subr.bf16.mxu0 0
      %1347 = vmatpush1.bf16.msra.mxu0 0
      %1348 = vmatprep.subr.bf16.mxu0 0
      %1349 = vmatpush1.bf16.msra.mxu0 0
      %1350 = vmatprep.subr.bf16.mxu0 0
      %1351 = vmatpush1.bf16.msra.mxu0 0
      %1352 = vmatprep.subr.bf16.mxu0 0
      %1353 = vmatpush1.bf16.msra.mxu0 0
      %1354 = vmatprep.subr.bf16.mxu0 0
      %1355 = vmatpush1.bf16.msra.mxu0 0
      %1356 = vmatprep.subr.bf16.mxu0 0
      %1357 = vmatpush1.bf16.msra.mxu0 0
      %1358 = vmatprep.subr.bf16.mxu0 0
      %1359 = vmatpush1.bf16.msra.mxu0 0
      %1360 = vmatprep.subr.bf16.mxu0 0
      %1361 = vmatpush1.bf16.msra.mxu0 0
      %1362 = vmatprep.subr.bf16.mxu0 0
      %1363 = vmatpush1.bf16.msra.mxu0 0
      %1364 = vmatprep.mubr.bf16.mxu0 0
      %1365 = vmatmul.mubr.bf16.gmra.mrb[0].mxu0 %v1321
      %v1366 = vpop.f32.mrb[0].mxu0
      %v1367 = vadd.f32 0.0, %v1366
      %v1368 = vpop.f32.mrb[0].mxu0
      %v1369 = vpop.f32.mrb[0].mxu0
      %v1370 = vadd.f32 0.0, %v1369
      %v1371 = vpop.f32.mrb[0].mxu0
      %1372 = vmatprep.mubr.bf16.mxu0 0
      %1373 = vmatmul.mubr.bf16.gmra.mrb[0].mxu0 %v1324
      %v1374 = vpop.f32.mrb[0].mxu0
      %v1375 = vadd.f32 0.0, %v1374
      %v1376 = vpop.f32.mrb[0].mxu0
      %v1377 = vpop.f32.mrb[0].mxu0
      %v1378 = vpop.f32.mrb[0].mxu0
      %1379 = vdwg.mxu0
      %1380 = vrot.lane.b32.xlu0 %v902, 64
      %v1381 = vpop.permute.xlu0 %1380
      %1382 = vrot.lane.b32.xlu0 %v903, 64
      %v1383 = vpop.permute.xlu0 %1382
      %v1386 = vsel %vm1173, %v1309, 0
      %v1389 = vsel %vm1173, %v1310, 0
      %v1392 = vand.u32 %v1383, %v1328
      %1394 = vmatprep.subr.bf16.mxu0 0
      %1395 = vmatpush1.bf16.msra.mxu0 %v1381
      %1396 = vmatprep.subr.bf16.mxu0 0
      %1397 = vmatpush1.bf16.msra.mxu0 %v1392
      %1398 = vmatprep.subr.bf16.mxu0 0
      %1399 = vmatpush1.bf16.msra.mxu0 0
      %1400 = vmatprep.subr.bf16.mxu0 0
      %1401 = vmatpush1.bf16.msra.mxu0 0
      %1402 = vmatprep.subr.bf16.mxu0 0
      %1403 = vmatpush1.bf16.msra.mxu0 0
      %1404 = vmatprep.subr.bf16.mxu0 0
      %1405 = vmatpush1.bf16.msra.mxu0 0
      %1406 = vmatprep.subr.bf16.mxu0 0
      %1407 = vmatpush1.bf16.msra.mxu0 0
      %1408 = vmatprep.subr.bf16.mxu0 0
      %1409 = vmatpush1.bf16.msra.mxu0 0
      %1410 = vmatprep.subr.bf16.mxu0 0
      %1411 = vmatpush1.bf16.msra.mxu0 0
      %1412 = vmatprep.subr.bf16.mxu0 0
      %1413 = vmatpush1.bf16.msra.mxu0 0
      %1414 = vmatprep.subr.bf16.mxu0 0
      %1415 = vmatpush1.bf16.msra.mxu0 0
      %1416 = vmatprep.subr.bf16.mxu0 0
      %1417 = vmatpush1.bf16.msra.mxu0 0
      %1418 = vmatprep.subr.bf16.mxu0 0
      %1419 = vmatpush1.bf16.msra.mxu0 0
      %1420 = vmatprep.subr.bf16.mxu0 0
      %1421 = vmatpush1.bf16.msra.mxu0 0
      %1422 = vmatprep.subr.bf16.mxu0 0
      %1423 = vmatpush1.bf16.msra.mxu0 0
      %1424 = vmatprep.subr.bf16.mxu0 0
      %1425 = vmatpush1.bf16.msra.mxu0 0
      %1426 = vmatprep.mubr.bf16.mxu0 0
      %1427 = vmatmul.mubr.bf16.gmra.mrb[0].mxu0 %v1386
      %v1428 = vpop.f32.mrb[0].mxu0
      %v1429 = vadd.f32 0.0, %v1428
      %v1430 = vpop.f32.mrb[0].mxu0
      %v1431 = vpop.f32.mrb[0].mxu0
      %v1432 = vadd.f32 0.0, %v1431
      %v1433 = vpop.f32.mrb[0].mxu0
      %1434 = vmatprep.mubr.bf16.mxu0 0
      %1435 = vmatmul.mubr.bf16.gmra.mrb[0].mxu0 %v1389
      %v1436 = vpop.f32.mrb[0].mxu0
      %v1437 = vadd.f32 0.0, %v1436
      %v1438 = vpop.f32.mrb[0].mxu0
      %v1439 = vpop.f32.mrb[0].mxu0
      %v1440 = vpop.f32.mrb[0].mxu0
      %1441 = vdwg.mxu0
      %1442 = vrot.lane.b32.xlu0 %v904, 64
      %v1443 = vpop.permute.xlu0 %1442
      %1444 = vrot.lane.b32.xlu0 %v905, 64
      %v1445 = vpop.permute.xlu0 %1444
      %v1448 = vsel %vm1173, %v1311, 0
      %v1451 = vsel %vm1173, %v1312, 0
      %v1454 = vand.u32 %v1445, %v1328
      %1456 = vmatprep.subr.bf16.mxu0 0
      %1457 = vmatpush1.bf16.msra.mxu0 %v1443
      %1458 = vmatprep.subr.bf16.mxu0 0
      %1459 = vmatpush1.bf16.msra.mxu0 %v1454
      %1460 = vmatprep.subr.bf16.mxu0 0
      %1461 = vmatpush1.bf16.msra.mxu0 0
      %1462 = vmatprep.subr.bf16.mxu0 0
      %1463 = vmatpush1.bf16.msra.mxu0 0
      %1464 = vmatprep.subr.bf16.mxu0 0
      %1465 = vmatpush1.bf16.msra.mxu0 0
      %1466 = vmatprep.subr.bf16.mxu0 0
      %1467 = vmatpush1.bf16.msra.mxu0 0
      %1468 = vmatprep.subr.bf16.mxu0 0
      %1469 = vmatpush1.bf16.msra.mxu0 0
      %1470 = vmatprep.subr.bf16.mxu0 0
      %1471 = vmatpush1.bf16.msra.mxu0 0
      %1472 = vmatprep.subr.bf16.mxu0 0
      %1473 = vmatpush1.bf16.msra.mxu0 0
      %1474 = vmatprep.subr.bf16.mxu0 0
      %1475 = vmatpush1.bf16.msra.mxu0 0
      %1476 = vmatprep.subr.bf16.mxu0 0
      %1477 = vmatpush1.bf16.msra.mxu0 0
      %1478 = vmatprep.subr.bf16.mxu0 0
      %1479 = vmatpush1.bf16.msra.mxu0 0
      %1480 = vmatprep.subr.bf16.mxu0 0
      %1481 = vmatpush1.bf16.msra.mxu0 0
      %1482 = vmatprep.subr.bf16.mxu0 0
      %1483 = vmatpush1.bf16.msra.mxu0 0
      %1484 = vmatprep.subr.bf16.mxu0 0
      %1485 = vmatpush1.bf16.msra.mxu0 0
      %1486 = vmatprep.subr.bf16.mxu0 0
      %1487 = vmatpush1.bf16.msra.mxu0 0
      %1488 = vmatprep.mubr.bf16.mxu0 0
      %1489 = vmatmul.mubr.bf16.gmra.mrb[0].mxu0 %v1448
      %v1490 = vpop.f32.mrb[0].mxu0
      %v1491 = vadd.f32 0.0, %v1490
      %v1492 = vpop.f32.mrb[0].mxu0
      %v1493 = vpop.f32.mrb[0].mxu0
      %v1494 = vadd.f32 0.0, %v1493
      %v1495 = vpop.f32.mrb[0].mxu0
      %1496 = vmatprep.mubr.bf16.mxu0 0
      %1497 = vmatmul.mubr.bf16.gmra.mrb[0].mxu0 %v1451
      %v1498 = vpop.f32.mrb[0].mxu0
      %v1499 = vadd.f32 0.0, %v1498
      %v1500 = vpop.f32.mrb[0].mxu0
      %v1501 = vpop.f32.mrb[0].mxu0
      %v1502 = vpop.f32.mrb[0].mxu0
      %1503 = vdwg.mxu0
      %1504 = vrot.lane.b32.xlu0 %v906, 64
      %v1505 = vpop.permute.xlu0 %1504
      %1506 = vrot.lane.b32.xlu0 %v907, 64
      %v1507 = vpop.permute.xlu0 %1506
      %v1510 = vsel %vm1173, %v1313, 0
      %v1513 = vsel %vm1173, %v1314, 0
      %v1516 = vand.u32 %v1507, %v1328
      %1518 = vmatprep.subr.bf16.mxu0 0
      %1519 = vmatpush1.bf16.msra.mxu0 %v1505
      %1520 = vmatprep.subr.bf16.mxu0 0
      %1521 = vmatpush1.bf16.msra.mxu0 %v1516
      %1522 = vmatprep.subr.bf16.mxu0 0
      %1523 = vmatpush1.bf16.msra.mxu0 0
      %1524 = vmatprep.subr.bf16.mxu0 0
      %1525 = vmatpush1.bf16.msra.mxu0 0
      %1526 = vmatprep.subr.bf16.mxu0 0
      %1527 = vmatpush1.bf16.msra.mxu0 0
      %1528 = vmatprep.subr.bf16.mxu0 0
      %1529 = vmatpush1.bf16.msra.mxu0 0
      %1530 = vmatprep.subr.bf16.mxu0 0
      %1531 = vmatpush1.bf16.msra.mxu0 0
      %1532 = vmatprep.subr.bf16.mxu0 0
      %1533 = vmatpush1.bf16.msra.mxu0 0
      %1534 = vmatprep.subr.bf16.mxu0 0
      %1535 = vmatpush1.bf16.msra.mxu0 0
      %1536 = vmatprep.subr.bf16.mxu0 0
      %1537 = vmatpush1.bf16.msra.mxu0 0
      %1538 = vmatprep.subr.bf16.mxu0 0
      %1539 = vmatpush1.bf16.msra.mxu0 0
      %1540 = vmatprep.subr.bf16.mxu0 0
      %1541 = vmatpush1.bf16.msra.mxu0 0
      %1542 = vmatprep.subr.bf16.mxu0 0
      %1543 = vmatpush1.bf16.msra.mxu0 0
      %1544 = vmatprep.subr.bf16.mxu0 0
      %1545 = vmatpush1.bf16.msra.mxu0 0
      %1546 = vmatprep.subr.bf16.mxu0 0
      %1547 = vmatpush1.bf16.msra.mxu0 0
      %1548 = vmatprep.subr.bf16.mxu0 0
      %1549 = vmatpush1.bf16.msra.mxu0 0
      %1550 = vmatprep.mubr.bf16.mxu0 0
      %1551 = vmatmul.mubr.bf16.gmra.mrb[0].mxu0 %v1510
      %v1552 = vpop.f32.mrb[0].mxu0
      %v1553 = vadd.f32 0.0, %v1552
      %v1554 = vpop.f32.mrb[0].mxu0
      %v1555 = vpop.f32.mrb[0].mxu0
      %v1556 = vadd.f32 0.0, %v1555
      %v1557 = vpop.f32.mrb[0].mxu0
      %1558 = vmatprep.mubr.bf16.mxu0 0
      %1559 = vmatmul.mubr.bf16.gmra.mrb[0].mxu0 %v1513
      %v1560 = vpop.f32.mrb[0].mxu0
      %v1561 = vadd.f32 0.0, %v1560
      %v1562 = vpop.f32.mrb[0].mxu0
      %v1563 = vpop.f32.mrb[0].mxu0
      %v1564 = vpop.f32.mrb[0].mxu0
      %1565 = vdwg.mxu0
      %1569 = vrot.lane.b32.xlu0 %v1429, 8
      %v1570 = vpop.permute.xlu0 %1569
      %1571 = vrot.lane.b32.xlu0 %v1432, 8
      %v1572 = vpop.permute.xlu0 %1571
      %1573 = vrot.lane.b32.xlu0 %v1437, 8
      %v1574 = vpop.permute.xlu0 %1573
      %1581 = vrot.lane.b32.xlu0 %v1491, 16
      %v1582 = vpop.permute.xlu0 %1581
      %1583 = vrot.lane.b32.xlu0 %v1494, 16
      %v1584 = vpop.permute.xlu0 %1583
      %1585 = vrot.lane.b32.xlu0 %v1499, 16
      %v1586 = vpop.permute.xlu0 %1585
      %1593 = vrot.lane.b32.xlu0 %v1553, 24
      %v1594 = vpop.permute.xlu0 %1593
      %1595 = vrot.lane.b32.xlu0 %v1556, 24
      %v1596 = vpop.permute.xlu0 %1595
      %1597 = vrot.lane.b32.xlu0 %v1561, 24
      %v1598 = vpop.permute.xlu0 %1597
      %v1602 = vsel %vm914, %v1367, %v1570
      %v1603 = vsel %vm914, %v1370, %v1572
      %v1604 = vsel %vm914, %v1375, %v1574
      %vm1605 = vcmask 130048
      %v1606 = vsel %vm1605, %v1602, %v1582
      %v1607 = vsel %vm1605, %v1603, %v1584
      %v1608 = vsel %vm1605, %v1604, %v1586
      %vm1609 = vcmask 195584
      %v1610 = vsel %vm1609, %v1606, %v1594
      %v1611 = vsel %vm1609, %v1607, %v1596
      %v1612 = vsel %vm1609, %v1608, %v1598
      %v1613 = vpack.c.bf16 %v1611, %v1610
      %v1614 = vpack.c.bf16 %v1612, %v1612
      %v1616 = vlaneseq
      %v1617 = vshrl.u32 %v1616, 7
      %v1618 = vsub.s32 0, %v1617
      %v1619 = vrot.slane %v717, %v1618
      %v1625 = vunpack.c.l.b16 %v713
      %v1626 = vunpack.c.l.b16 %v714
      %v1627 = vunpack.c.l.b16 %v715
      %v1628 = vunpack.c.l.b16 %v716
      %v1629 = vpack.c.b16 %v1626, %v1625
      %v1630 = vpack.c.b16 %v1628, %v1627
      %v1634 = vsel %vm742, %v1613, 0
      %v1637 = vsel %vm742, %v1614, 0
      %1639 = vmatprep.subr.bf16.mxu0 0
      %1640 = vmatpush1.bf16.msra.mxu0 %v1629
      %1641 = vmatprep.subr.bf16.mxu0 0
      %1642 = vmatpush1.bf16.msra.mxu0 %v1630
      %1643 = vmatprep.subr.bf16.mxu0 0
      %1644 = vmatpush1.bf16.msra.mxu0 0
      %1645 = vmatprep.subr.bf16.mxu0 0
      %1646 = vmatpush1.bf16.msra.mxu0 0
      %1647 = vmatprep.subr.bf16.mxu0 0
      %1648 = vmatpush1.bf16.msra.mxu0 0
      %1649 = vmatprep.subr.bf16.mxu0 0
      %1650 = vmatpush1.bf16.msra.mxu0 0
      %1651 = vmatprep.subr.bf16.mxu0 0
      %1652 = vmatpush1.bf16.msra.mxu0 0
      %1653 = vmatprep.subr.bf16.mxu0 0
      %1654 = vmatpush1.bf16.msra.mxu0 0
      %1655 = vmatprep.subr.bf16.mxu0 0
      %1656 = vmatpush1.bf16.msra.mxu0 0
      %1657 = vmatprep.subr.bf16.mxu0 0
      %1658 = vmatpush1.bf16.msra.mxu0 0
      %1659 = vmatprep.subr.bf16.mxu0 0
      %1660 = vmatpush1.bf16.msra.mxu0 0
      %1661 = vmatprep.subr.bf16.mxu0 0
      %1662 = vmatpush1.bf16.msra.mxu0 0
      %1663 = vmatprep.subr.bf16.mxu0 0
      %1664 = vmatpush1.bf16.msra.mxu0 0
      %1665 = vmatprep.subr.bf16.mxu0 0
      %1666 = vmatpush1.bf16.msra.mxu0 0
      %1667 = vmatprep.subr.bf16.mxu0 0
      %1668 = vmatpush1.bf16.msra.mxu0 0
      %1669 = vmatprep.subr.bf16.mxu0 0
      %1670 = vmatpush1.bf16.msra.mxu0 0
      %1671 = vmatprep.mubr.bf16.mxu0 0
      %1672 = vmatmul.mubr.bf16.gmra.mrb[0].mxu0 %v1634
      %v1673 = vpop.f32.mrb[0].mxu0
      %v1674 = vadd.f32 %v1619, %v1673
      %v1675 = vpop.f32.mrb[0].mxu0
      %v1676 = vpop.f32.mrb[0].mxu0
      %v1677 = vadd.f32 %v1619, %v1676
      %v1678 = vpop.f32.mrb[0].mxu0
      %1679 = vmatprep.mubr.bf16.mxu0 0
      %1680 = vmatmul.mubr.bf16.gmra.mrb[0].mxu0 %v1637
      %v1681 = vpop.f32.mrb[0].mxu0
      %v1682 = vadd.f32 %v1619, %v1681
      %v1683 = vpop.f32.mrb[0].mxu0
      %v1684 = vpop.f32.mrb[0].mxu0
      %v1685 = vpop.f32.mrb[0].mxu0
      %1686 = vdwg.mxu0
      %v1687 = vadd.f32 %v704, %v1674
      %v1688 = vadd.f32 %v705, %v1677
      %v1689 = vadd.f32 %v706, %v1682
      %v1690 = vsel %vm742, %v1687, 0.0
      %1691 = vadd.xlane.f32.xlu0 %v1690
      %v1692 = vpop.xlane.xlu0 %1691
      %v1693 = vsel %vm742, %v1688, 0.0
      %1694 = vadd.xlane.f32.xlu0 %v1693
      %v1695 = vpop.xlane.xlu0 %1694
      %v1696 = vsel %vm749, %v1689, 0.0
      %1697 = vadd.xlane.f32.xlu0 %v1696
      %v1698 = vpop.xlane.xlu0 %1697
      %v1699 = vmul.f32 %v1692, %v753
      %v1700 = vmul.f32 %v1695, %v753
      %v1701 = vmul.f32 %v1698, %v753
      %v1702 = vsub.f32 %v1687, %v1699
      %v1703 = vsub.f32 %v1688, %v1700
      %v1704 = vsub.f32 %v1689, %v1701
      %v1705 = vmul.f32 %v1702, %v1702
      %v1706 = vmul.f32 %v1703, %v1703
      %v1707 = vmul.f32 %v1704, %v1704
      %v1708 = vsel %vm742, %v1705, 0.0
      %1709 = vadd.xlane.f32.xlu0 %v1708
      %v1710 = vpop.xlane.xlu0 %1709
      %v1711 = vsel %vm742, %v1706, 0.0
      %1712 = vadd.xlane.f32.xlu0 %v1711
      %v1713 = vpop.xlane.xlu0 %1712
      %v1714 = vsel %vm749, %v1707, 0.0
      %1715 = vadd.xlane.f32.xlu0 %v1714
      %v1716 = vpop.xlane.xlu0 %1715
      %v1717 = vmul.f32 %v1710, %v753
      %v1718 = vmul.f32 %v1713, %v753
      %v1719 = vmul.f32 %v1716, %v753
      %v1720 = vadd.f32 %v1717, 1e-05
      %v1721 = vadd.f32 %v1718, 1e-05
      %v1722 = vadd.f32 %v1719, 1e-05
      %v1723 = vrsqrt.pop %v1720
      %v1724 = vrsqrt.pop %v1721
      %v1725 = vrsqrt.pop %v1722
      %v1726 = vmul.f32 %v1702, %v1723
      %v1727 = vmul.f32 %v1703, %v1724
      %v1728 = vmul.f32 %v1704, %v1725
      %v1730 = vlaneseq
      %v1731 = vshrl.u32 %v1730, 7
      %v1732 = vsub.s32 0, %v1731
      %v1733 = vrot.slane %v718, %v1732
      %v1735 = vmul.f32 %v1726, %v1733
      %v1736 = vmul.f32 %v1727, %v1733
      %v1737 = vmul.f32 %v1728, %v1733
      %v1739 = vlaneseq
      %v1740 = vshrl.u32 %v1739, 7
      %v1741 = vsub.s32 0, %v1740
      %v1742 = vrot.slane %v719, %v1741
      %v1744 = vadd.f32 %v1735, %v1742
      %v1745 = vadd.f32 %v1736, %v1742
      %v1746 = vadd.f32 %v1737, %v1742
      %v1747 = vpack.c.bf16 %v1745, %v1744
      %v1748 = vpack.c.bf16 %v1746, %v1746
      %v1750 = vlaneseq
      %v1751 = vshrl.u32 %v1750, 7
      %v1752 = vsub.s32 0, %v1751
      %v1753 = vrot.slane %v724, %v1752
      %v1759 = vunpack.c.l.b16 %v720
      %v1760 = vunpack.c.l.b16 %v721
      %v1761 = vunpack.c.l.b16 %v722
      %v1762 = vunpack.c.l.b16 %v723
      %v1763 = vpack.c.b16 %v1760, %v1759
      %v1764 = vpack.c.b16 %v1762, %v1761
      %v1768 = vsel %vm742, %v1747, 0
      %v1771 = vsel %vm742, %v1748, 0
      %1773 = vmatprep.subr.bf16.mxu0 0
      %1774 = vmatpush1.bf16.msra.mxu0 %v1763
      %1775 = vmatprep.subr.bf16.mxu0 0
      %1776 = vmatpush1.bf16.msra.mxu0 %v1764
      %1777 = vmatprep.subr.bf16.mxu0 0
      %1778 = vmatpush1.bf16.msra.mxu0 0
      %1779 = vmatprep.subr.bf16.mxu0 0
      %1780 = vmatpush1.bf16.msra.mxu0 0
      %1781 = vmatprep.subr.bf16.mxu0 0
      %1782 = vmatpush1.bf16.msra.mxu0 0
      %1783 = vmatprep.subr.bf16.mxu0 0
      %1784 = vmatpush1.bf16.msra.mxu0 0
      %1785 = vmatprep.subr.bf16.mxu0 0
      %1786 = vmatpush1.bf16.msra.mxu0 0
      %1787 = vmatprep.subr.bf16.mxu0 0
      %1788 = vmatpush1.bf16.msra.mxu0 0
      %1789 = vmatprep.subr.bf16.mxu0 0
      %1790 = vmatpush1.bf16.msra.mxu0 0
      %1791 = vmatprep.subr.bf16.mxu0 0
      %1792 = vmatpush1.bf16.msra.mxu0 0
      %1793 = vmatprep.subr.bf16.mxu0 0
      %1794 = vmatpush1.bf16.msra.mxu0 0
      %1795 = vmatprep.subr.bf16.mxu0 0
      %1796 = vmatpush1.bf16.msra.mxu0 0
      %1797 = vmatprep.subr.bf16.mxu0 0
      %1798 = vmatpush1.bf16.msra.mxu0 0
      %1799 = vmatprep.subr.bf16.mxu0 0
      %1800 = vmatpush1.bf16.msra.mxu0 0
      %1801 = vmatprep.subr.bf16.mxu0 0
      %1802 = vmatpush1.bf16.msra.mxu0 0
      %1803 = vmatprep.subr.bf16.mxu0 0
      %1804 = vmatpush1.bf16.msra.mxu0 0
      %1805 = vmatprep.mubr.bf16.mxu0 0
      %1806 = vmatmul.mubr.bf16.gmra.mrb[0].mxu0 %v1768
      %v1807 = vpop.f32.mrb[0].mxu0
      %v1808 = vadd.f32 %v1753, %v1807
      %v1809 = vpop.f32.mrb[0].mxu0
      %v1810 = vpop.f32.mrb[0].mxu0
      %v1811 = vadd.f32 %v1753, %v1810
      %v1812 = vpop.f32.mrb[0].mxu0
      %1813 = vmatprep.mubr.bf16.mxu0 0
      %1814 = vmatmul.mubr.bf16.gmra.mrb[0].mxu0 %v1771
      %v1815 = vpop.f32.mrb[0].mxu0
      %v1816 = vadd.f32 %v1753, %v1815
      %v1817 = vpop.f32.mrb[0].mxu0
      %v1818 = vpop.f32.mrb[0].mxu0
      %v1819 = vpop.f32.mrb[0].mxu0
      %1820 = vdwg.mxu0
      %v1821 = vmul.f32 %v1808, %v1808
      %v1822 = vmul.f32 %v1811, %v1811
      %v1823 = vmul.f32 %v1816, %v1816
      %v1824 = vmul.f32 %v1808, %v1821
      %v1825 = vmul.f32 %v1811, %v1822
      %v1826 = vmul.f32 %v1816, %v1823
      %v1827 = vmul.f32 %v1824, 0.044715
      %v1828 = vmul.f32 %v1825, 0.044715
      %v1829 = vmul.f32 %v1826, 0.044715
      %v1830 = vadd.f32 %v1808, %v1827
      %v1831 = vadd.f32 %v1811, %v1828
      %v1832 = vadd.f32 %v1816, %v1829
      %v1833 = vmul.f32 %v1830, 0.7978846
      %v1834 = vmul.f32 %v1831, 0.7978846
      %v1835 = vmul.f32 %v1832, 0.7978846
      %v1836 = vtanh.pop %v1833
      %v1837 = vtanh.pop %v1834
      %v1838 = vtanh.pop %v1835
      %v1839 = vadd.f32 %v1836, 1.0
      %v1840 = vadd.f32 %v1837, 1.0
      %v1841 = vadd.f32 %v1838, 1.0
      %v1842 = vmul.f32 %v1839, 0.5
      %v1843 = vmul.f32 %v1840, 0.5
      %v1844 = vmul.f32 %v1841, 0.5
      %v1845 = vmul.f32 %v1808, %v1842
      %v1846 = vmul.f32 %v1811, %v1843
      %v1847 = vmul.f32 %v1816, %v1844
      %v1848 = vpack.c.bf16 %v1846, %v1845
      %v1849 = vpack.c.bf16 %v1847, %v1847
      %v1851 = vlaneseq
      %v1852 = vshrl.u32 %v1851, 7
      %v1853 = vsub.s32 0, %v1852
      %v1854 = vrot.slane %v741, %v1853
      %v1872 = vunpack.c.l.b16 %v725
      %v1873 = vunpack.c.l.b16 %v726
      %v1874 = vunpack.c.l.b16 %v727
      %v1875 = vunpack.c.l.b16 %v728
      %v1876 = vunpack.c.l.b16 %v729
      %v1877 = vunpack.c.l.b16 %v730
      %v1878 = vunpack.c.l.b16 %v731
      %v1879 = vunpack.c.l.b16 %v732
      %v1880 = vunpack.c.l.b16 %v733
      %v1881 = vunpack.c.l.b16 %v734
      %v1882 = vunpack.c.l.b16 %v735
      %v1883 = vunpack.c.l.b16 %v736
      %v1884 = vunpack.c.l.b16 %v737
      %v1885 = vunpack.c.l.b16 %v738
      %v1886 = vunpack.c.l.b16 %v739
      %v1887 = vunpack.c.l.b16 %v740
      %v1888 = vpack.c.b16 %v1873, %v1872
      %v1889 = vpack.c.b16 %v1875, %v1874
      %v1890 = vpack.c.b16 %v1877, %v1876
      %v1891 = vpack.c.b16 %v1879, %v1878
      %v1892 = vpack.c.b16 %v1881, %v1880
      %v1893 = vpack.c.b16 %v1883, %v1882
      %v1894 = vpack.c.b16 %v1885, %v1884
      %v1895 = vpack.c.b16 %v1887, %v1886
      %1904 = vmatprep.subr.bf16.mxu0 0
      %1905 = vmatpush1.bf16.msra.mxu0 %v1888
      %1906 = vmatprep.subr.bf16.mxu0 0
      %1907 = vmatpush1.bf16.msra.mxu0 %v1889
      %1908 = vmatprep.subr.bf16.mxu0 0
      %1909 = vmatpush1.bf16.msra.mxu0 %v1890
      %1910 = vmatprep.subr.bf16.mxu0 0
      %1911 = vmatpush1.bf16.msra.mxu0 %v1891
      %1912 = vmatprep.subr.bf16.mxu0 0
      %1913 = vmatpush1.bf16.msra.mxu0 %v1892
      %1914 = vmatprep.subr.bf16.mxu0 0
      %1915 = vmatpush1.bf16.msra.mxu0 %v1893
      %1916 = vmatprep.subr.bf16.mxu0 0
      %1917 = vmatpush1.bf16.msra.mxu0 %v1894
      %1918 = vmatprep.subr.bf16.mxu0 0
      %1919 = vmatpush1.bf16.msra.mxu0 %v1895
      %1920 = vmatprep.subr.bf16.mxu0 0
      %1921 = vmatpush1.bf16.msra.mxu0 0
      %1922 = vmatprep.subr.bf16.mxu0 0
      %1923 = vmatpush1.bf16.msra.mxu0 0
      %1924 = vmatprep.subr.bf16.mxu0 0
      %1925 = vmatpush1.bf16.msra.mxu0 0
      %1926 = vmatprep.subr.bf16.mxu0 0
      %1927 = vmatpush1.bf16.msra.mxu0 0
      %1928 = vmatprep.subr.bf16.mxu0 0
      %1929 = vmatpush1.bf16.msra.mxu0 0
      %1930 = vmatprep.subr.bf16.mxu0 0
      %1931 = vmatpush1.bf16.msra.mxu0 0
      %1932 = vmatprep.subr.bf16.mxu0 0
      %1933 = vmatpush1.bf16.msra.mxu0 0
      %1934 = vmatprep.subr.bf16.mxu0 0
      %1935 = vmatpush1.bf16.msra.mxu0 0
      %1936 = vmatprep.mubr.bf16.mxu0 0
      %1937 = vmatmul.mubr.bf16.gmra.mrb[0].mxu0 %v1848
      %v1938 = vpop.f32.mrb[0].mxu0
      %v1939 = vadd.f32 %v1854, %v1938
      %v1940 = vpop.f32.mrb[0].mxu0
      %v1941 = vpop.f32.mrb[0].mxu0
      %v1942 = vadd.f32 %v1854, %v1941
      %v1943 = vpop.f32.mrb[0].mxu0
      %1944 = vmatprep.mubr.bf16.mxu0 0
      %1945 = vmatmul.mubr.bf16.gmra.mrb[0].mxu0 %v1849
      %v1946 = vpop.f32.mrb[0].mxu0
      %v1947 = vadd.f32 %v1854, %v1946
      %v1948 = vpop.f32.mrb[0].mxu0
      %v1949 = vpop.f32.mrb[0].mxu0
      %v1950 = vpop.f32.mrb[0].mxu0
      %1951 = vdwg.mxu0
      %v1952 = vadd.f32 %v1687, %v1939
      %v1953 = vadd.f32 %v1688, %v1942
      %v1954 = vadd.f32 %v1689, %v1947
      %1955 = vst.msk [vmem:[#allocation2] sm:$0xff] %vm742, %v1952
      %1956 = vst.msk [vmem:[#allocation2 + $0x8] sm:$0xff] %vm742, %v1953
      %1957 = vst.msk [vmem:[#allocation2 + $0x10] sm:$0x1] %vm749, %v1954
      %p1958 = scmp.eq.s32.totalorder %s31, 1
      // Predicated region
      $region85: #{run.3} parent=79 // pred_check
        %p1959 = pneg %p1958
      $region86: #{run.3} parent=79 // pred_check_branch
        %1961 = sbr.rel (%p1959) target = $region88
      $region87: #{run.3} parent=79 // pred_region
        %v1962 = vld [vmem:[#allocation2 + $0x1] sm:$0xff]
        %v1963 = vld [vmem:[#allocation2 + $0x9] sm:$0xff]
        %v1964 = vpack.c.bf16 %v1963, %v1962
        %v1965 = vld [vmem:[%s2] sm:$0xf]
        %v1966 = vld [vmem:[%s2 + $0x4] sm:$0xf]
        %v1967 = vld [vmem:[%s2 + $0x8] sm:$0xf]
        %v1968 = vld [vmem:[%s2 + $0xc] sm:$0xf]
        %v1969 = vld [vmem:[%s3] sm:$0x1]
        %v1971 = vlaneseq
        %v1972 = vshrl.u32 %v1971, 7
        %v1973 = vsub.s32 0, %v1972
        %v1974 = vrot.slane %v1969, %v1973
        %v1980 = vunpack.c.l.b16 %v1965
        %v1981 = vunpack.c.l.b16 %v1966
        %v1982 = vunpack.c.l.b16 %v1967
        %v1983 = vunpack.c.l.b16 %v1968
        %v1984 = vpack.c.b16 %v1981, %v1980
        %v1985 = vpack.c.b16 %v1983, %v1982
        %v1989 = vsel %vm742, %v1964, 0
        %1991 = vmatprep.subr.bf16.mxu0 0
        %1992 = vmatpush1.bf16.msra.mxu0 %v1984
        %1993 = vmatprep.subr.bf16.mxu0 0
        %1994 = vmatpush1.bf16.msra.mxu0 %v1985
        %1995 = vmatprep.subr.bf16.mxu0 0
        %1996 = vmatpush1.bf16.msra.mxu0 0
        %1997 = vmatprep.subr.bf16.mxu0 0
        %1998 = vmatpush1.bf16.msra.mxu0 0
        %1999 = vmatprep.subr.bf16.mxu0 0
        %2000 = vmatpush1.bf16.msra.mxu0 0
        %2001 = vmatprep.subr.bf16.mxu0 0
        %2002 = vmatpush1.bf16.msra.mxu0 0
        %2003 = vmatprep.subr.bf16.mxu0 0
        %2004 = vmatpush1.bf16.msra.mxu0 0
        %2005 = vmatprep.subr.bf16.mxu0 0
        %2006 = vmatpush1.bf16.msra.mxu0 0
        %2007 = vmatprep.subr.bf16.mxu0 0
        %2008 = vmatpush1.bf16.msra.mxu0 0
        %2009 = vmatprep.subr.bf16.mxu0 0
        %2010 = vmatpush1.bf16.msra.mxu0 0
        %2011 = vmatprep.subr.bf16.mxu0 0
        %2012 = vmatpush1.bf16.msra.mxu0 0
        %2013 = vmatprep.subr.bf16.mxu0 0
        %2014 = vmatpush1.bf16.msra.mxu0 0
        %2015 = vmatprep.subr.bf16.mxu0 0
        %2016 = vmatpush1.bf16.msra.mxu0 0
        %2017 = vmatprep.subr.bf16.mxu0 0
        %2018 = vmatpush1.bf16.msra.mxu0 0
        %2019 = vmatprep.subr.bf16.mxu0 0
        %2020 = vmatpush1.bf16.msra.mxu0 0
        %2021 = vmatprep.subr.bf16.mxu0 0
        %2022 = vmatpush1.bf16.msra.mxu0 0
        %2023 = vmatprep.mubr.bf16.mxu0 0
        %2024 = vmatmul.mubr.bf16.gmra.mrb[0].mxu0 %v1989
        %v2025 = vpop.f32.mrb[0].mxu0
        %v2026 = vadd.f32 %v1974, %v2025
        %v2027 = vpop.f32.mrb[0].mxu0
        %v2028 = vpop.f32.mrb[0].mxu0
        %v2029 = vadd.f32 %v1974, %v2028
        %v2030 = vpop.f32.mrb[0].mxu0
        %2031 = vdwg.mxu0
        %vm2032 = vcmask 80896
        %2033 = vst.msk [vmem:[%s684] sm:$0xff] %vm2032, %v2026
        %2034 = vst.msk [vmem:[%s684 + $0x8] sm:$0xff] %vm2032, %v2029
      $region88: #{run.3} parent=79 // pred_fallthru
        _
      %p2035 = scmp.lt.s32.totalorder %s30, 1
      %s2036 = scalar_select %p2035, %s30, 1
      %s2037 = smul.addr %s2036, 2
      %s2038 = smul.addr %s2037, 8
      %s2039 = scalar_lea.vmem %s15, %s2038
      // Predicated region
      $region89: #{run.3} parent=79 // pred_check
        %p2040 = pneg %p431
      $region90: #{run.3} parent=79 // pred_check_branch
        %2042 = sbr.rel (%p2040) target = $region92
      $region91: #{run.3} parent=79 // pred_region
        _
      $region92: #{run.3} parent=79 // pred_fallthru
        _
    $region80: #{run.3} parent=5 // pred_fallthru
      _
    %p2043 = scmp.le.s32.totalorder 2, %s21
    // Predicated region
    $region93: #{run.3} parent=5 // pred_check
      %p2044 = pneg %p2043
    $region94: #{run.3} parent=5 // pred_check_branch
      %2046 = sbr.rel (%p2044) target = $region96
    $region95: #{run.3} parent=5 // pred_region
      %s2047 = ssub.s32 %s21, 2
      // Predicated region
      $region97: #{run.3} parent=95 // pred_check
        %p2048 = pneg %p437
      $region98: #{run.3} parent=95 // pred_check_branch
        %2050 = sbr.rel (%p2048) target = $region100
      $region99: #{run.3} parent=95 // pred_region
        %p2051 = scmp.lt.s32.totalorder %s32, 1
        %s2052 = scalar_select %p2051, %s32, 1
        %s2053 = smul.addr %s2052, 2
        %s2054 = smul.addr %s2053, 8
        %s2055 = scalar_lea.vmem %s15, %s2054
      $region100: #{run.3} parent=95 // pred_fallthru
        _
    $region96: #{run.3} parent=5 // pred_fallthru
      _
  $region6: #{run.3} parent=0 // loop_footer
    %s25 = sadd.s32 1, %s21
  $region7: #{run.3} parent=0 // loop_footer_branch
    %20 = sbr.rel target = $region3
  $region8: #{run.3} parent=0 // loop_exit
    _

</llo_original>
